<compile_context>
chip_gen: v6e
topology: v6e:2x2x1
jax: 0.10.0
libtpu: 0.0.40
codegen_flags: <defaults>
</compile_context>

<pallas_src>
import functools
import math

import jax
import jax.numpy as jnp
import numpy as np
from jax import lax
from jax.experimental import pallas as pl
from jax.experimental.pallas import tpu as pltpu


# --------------------- fused bidirectional RNN layer kernel ---------------------

def _bidir_layer_kernel(x_ref, g_ref, bln_ref, wihc_ref, whhf_ref, whhb_ref, bc_ref,
                        h0f_ref, h0b_ref, out_ref, hnf_ref, hnb_ref,
                        *, seq, batch, hidden, apply_ln):
    # x_ref   : (seq*batch, in_feat)  time-major flattened (row = t*batch + b)
    # g/bln   : (1, in_feat)          LayerNorm gamma/beta (used only if apply_ln)
    # wihc    : (in_feat, 2H)         [W_ih_fwd | W_ih_bwd]   (stored transposed vs torch)
    # whhf/b  : (H, H)
    # bc      : (1, 2H)               [b_fwd | b_bwd]  with b = b_ih + b_hh per direction
    # h0f/b   : (batch, H)
    # out     : (seq*batch, 2H)       time-major flattened, [:, :H]=fwd, [:, H:]=bwd
    # hnf/b   : (batch, H)
    H = hidden
    x = x_ref[...].astype(jnp.float32)

    if apply_ln:
        # torch LayerNorm: biased variance, eps=1e-5
        mean = jnp.mean(x, axis=-1, keepdims=True)
        var = jnp.mean(jnp.square(x - mean), axis=-1, keepdims=True)
        x = (x - mean) * lax.rsqrt(var + 1e-5) * g_ref[...] + bln_ref[...]

    # One big MXU matmul for both directions' input projections (bias folded in).
    proj = (jnp.dot(x, wihc_ref[...], preferred_element_type=jnp.float32)
            + bc_ref[...])                                       # (seq*batch, 2H)

    # Weights loaded once; hidden state carried in registers across the loop.
    whh_f = whhf_ref[...].astype(jnp.float32)
    whh_b = whhb_ref[...].astype(jnp.float32)
    h_f = h0f_ref[...].astype(jnp.float32)
    h_b = h0b_ref[...].astype(jnp.float32)

    # Fully unrolled time loop (seq is static & small). Forward walks t = 0..seq-1,
    # backward walks tb = seq-1..0; both write straight into their output half, so
    # no reverse / concatenate of full tensors is ever materialized.
    for t in range(seq):
        tb = seq - 1 - t
        pf = proj[t * batch:(t + 1) * batch, 0:H]
        pb = proj[tb * batch:(tb + 1) * batch, H:2 * H]
        h_f = jnp.maximum(
            pf + jnp.dot(h_f, whh_f, preferred_element_type=jnp.float32), 0.0)
        h_b = jnp.maximum(
            pb + jnp.dot(h_b, whh_b, preferred_element_type=jnp.float32), 0.0)
        out_ref[t * batch:(t + 1) * batch, 0:H] = h_f.astype(out_ref.dtype)
        out_ref[tb * batch:(tb + 1) * batch, H:2 * H] = h_b.astype(out_ref.dtype)

    hnf_ref[...] = h_f.astype(hnf_ref.dtype)
    hnb_ref[...] = h_b.astype(hnb_ref.dtype)


def bidir_rnn_layer(x2d, gamma, beta, wih_cat, whh_f, whh_b, b_cat, h0_f, h0_b,
                    *, seq, batch, apply_ln):
    """x2d: (seq*batch, in_feat) time-major flattened.
    Returns (out (seq*batch, 2H), hn_f (batch, H), hn_b (batch, H))."""
    rows, _ = x2d.shape
    hidden = whh_f.shape[0]
    kernel = functools.partial(_bidir_layer_kernel, seq=seq, batch=batch,
                               hidden=hidden, apply_ln=apply_ln)
    vmem = pl.BlockSpec(memory_space=pltpu.MemorySpace.VMEM)
    return pl.pallas_call(
        kernel,
        out_shape=(jax.ShapeDtypeStruct((rows, 2 * hidden), x2d.dtype),
                   jax.ShapeDtypeStruct((batch, hidden), x2d.dtype),
                   jax.ShapeDtypeStruct((batch, hidden), x2d.dtype)),
        in_specs=[vmem] * 9,
        out_specs=(vmem, vmem, vmem),
        compiler_params=pltpu.CompilerParams(vmem_limit_bytes=32 * 1024 * 1024),
    )(x2d, gamma.reshape(1, -1), beta.reshape(1, -1), wih_cat, whh_f, whh_b,
      b_cat.reshape(1, -1), h0_f, h0_b)


# ------------------------------ parameter init ------------------------------

def init_params(key, input_size, hidden_size, num_layers):
    """Mirrors the module: xavier_uniform on >=2D RNN weights, default
    uniform(-1/sqrt(H), 1/sqrt(H)) biases, LayerNorm gamma=1 / beta=0."""
    params = {
        "ln_gamma": jnp.ones((input_size,), jnp.float32),
        "ln_beta": jnp.zeros((input_size,), jnp.float32),
        "layers": [],
    }
    bias_bound = 1.0 / math.sqrt(hidden_size)
    for layer in range(num_layers):
        layer_in = input_size if layer == 0 else 2 * hidden_size
        dirs = []
        for _ in range(2):  # forward, backward
            key, k1, k2, k3, k4 = jax.random.split(key, 5)
            xav_ih = math.sqrt(6.0 / (layer_in + hidden_size))
            xav_hh = math.sqrt(6.0 / (hidden_size + hidden_size))
            # stored transposed vs torch: (in_feat, H) / (H, H) so kernels do x @ W
            wih = jax.random.uniform(k1, (layer_in, hidden_size), jnp.float32, -xav_ih, xav_ih)
            whh = jax.random.uniform(k2, (hidden_size, hidden_size), jnp.float32, -xav_hh, xav_hh)
            b_ih = jax.random.uniform(k3, (hidden_size,), jnp.float32, -bias_bound, bias_bound)
            b_hh = jax.random.uniform(k4, (hidden_size,), jnp.float32, -bias_bound, bias_bound)
            dirs.append((wih, whh, b_ih + b_hh))
        params["layers"].append(tuple(dirs))
    return params


# --------------------------------- forward ----------------------------------

def rnn_cell_forward(x, state, params):
    """Equivalent of RNNCell.forward: (output (B,S,2H), hn (L*2,B,H))."""
    batch, seq, input_size = x.shape
    hidden = params["layers"][0][0][1].shape[0]

    # Single layout fixup: time-major flattened rows (row = t*batch + b).
    layer_in = jnp.transpose(x, (1, 0, 2)).reshape(seq * batch, input_size)

    hns = []
    for l, ((wih_f, whh_f, b_f), (wih_b, whh_b, b_b)) in enumerate(params["layers"]):
        in_feat = layer_in.shape[1]
        wih_cat = jnp.concatenate([wih_f, wih_b], axis=1)        # (in_feat, 2H)
        b_cat = jnp.concatenate([b_f, b_b], axis=0)              # (2H,)
        if l == 0:
            g, bln = params["ln_gamma"], params["ln_beta"]
        else:  # dummies; LayerNorm only applies to the raw input (apply_ln=False)
            g = jnp.ones((in_feat,), jnp.float32)
            bln = jnp.zeros((in_feat,), jnp.float32)
        layer_in, hn_f, hn_b = bidir_rnn_layer(
            layer_in, g, bln, wih_cat, whh_f, whh_b, b_cat,
            state[2 * l], state[2 * l + 1],
            seq=seq, batch=batch, apply_ln=(l == 0))
        hns.extend([hn_f, hn_b])

    output = jnp.transpose(layer_in.reshape(seq, batch, 2 * hidden), (1, 0, 2))
    hn = jnp.stack(hns, axis=0)
    return output, hn


# --------------------------- pure-JAX reference ------------------------------

def ref_forward(x, state, params):
    mean = x.mean(-1, keepdims=True)
    var = ((x - mean) ** 2).mean(-1, keepdims=True)
    xn = (x - mean) / jnp.sqrt(var + 1e-5) * params["ln_gamma"] + params["ln_beta"]

    layer_in = jnp.transpose(xn, (1, 0, 2))
    hns = []
    for l, ((wih_f, whh_f, b_f), (wih_b, whh_b, b_b)) in enumerate(params["layers"]):
        def run(inp, wih, whh, b, h0):
            outs = []
            h = h0
            for t in range(inp.shape[0]):
                h = jnp.maximum(inp[t] @ wih + h @ whh + b, 0.0)
                outs.append(h)
            return jnp.stack(outs, 0), h

        out_f, hn_f = run(layer_in, wih_f, whh_f, b_f, state[2 * l])
        out_b_rev, hn_b = run(layer_in[::-1], wih_b, whh_b, b_b, state[2 * l + 1])
        layer_in = jnp.concatenate([out_f, out_b_rev[::-1]], axis=-1)
        hns.extend([hn_f, hn_b])
    return jnp.transpose(layer_in, (1, 0, 2)), jnp.stack(hns, 0)


# ----------------------------------- main ------------------------------------

if __name__ == "__main__":
    batch, seq, input_size, hidden_size, num_layers = 2, 8, 16, 32, 2

    key = jax.random.PRNGKey(0)
    key, kx, kh, kp = jax.random.split(key, 4)
    x = jax.random.normal(kx, (batch, seq, input_size), jnp.float32)
    state = jax.random.normal(kh, (num_layers * 2, batch, hidden_size), jnp.float32)
    params = init_params(kp, input_size, hidden_size, num_layers)

    fwd = jax.jit(rnn_cell_forward)
    output, hn = fwd(x, state, params)
    output = jax.block_until_ready(output)
    hn = jax.block_until_ready(hn)

    out_ref, hn_ref = ref_forward(x, state, params)
    assert output.shape == (batch, seq, 2 * hidden_size)
    assert hn.shape == (num_layers * 2, batch, hidden_size)
    np.testing.assert_allclose(np.asarray(output), np.asarray(out_ref), rtol=1e-4, atol=1e-4)
    np.testing.assert_allclose(np.asarray(hn), np.asarray(hn_ref), rtol=1e-4, atol=1e-4)

    print("KERNEL_OK")
</pallas_src>

<mosaic_0001>
module attributes {stable_mosaic.version = 11 : i64} {
  func.func @_bidir_layer_kernel(%arg0: memref<16x16xf32, #tpu.memory_space<vmem>>, %arg1: memref<1x16xf32, #tpu.memory_space<vmem>>, %arg2: memref<1x16xf32, #tpu.memory_space<vmem>>, %arg3: memref<16x64xf32, #tpu.memory_space<vmem>>, %arg4: memref<32x32xf32, #tpu.memory_space<vmem>>, %arg5: memref<32x32xf32, #tpu.memory_space<vmem>>, %arg6: memref<1x64xf32, #tpu.memory_space<vmem>>, %arg7: memref<2x32xf32, #tpu.memory_space<vmem>>, %arg8: memref<2x32xf32, #tpu.memory_space<vmem>>, %arg9: memref<16x64xf32, #tpu.memory_space<vmem>>, %arg10: memref<2x32xf32, #tpu.memory_space<vmem>>, %arg11: memref<2x32xf32, #tpu.memory_space<vmem>>) attributes {dimension_semantics = [], scalar_prefetch = 0 : i64, scratch_operands = 0 : i64, tpu.core_type = #tpu.core_type<tc>} {
    %c0 = arith.constant 0 : index
    %c0_0 = arith.constant 0 : index
    %0 = vector.load %arg0[%c0, %c0_0] : memref<16x16xf32, #tpu.memory_space<vmem>>, vector<16x16xf32>
    %cst = arith.constant dense<0.000000e+00> : vector<16xf32>
    %1 = vector.multi_reduction <add>, %0, %cst [1] : vector<16x16xf32> to vector<16xf32>
    %2 = vector.shape_cast %1 : vector<16xf32> to vector<16x1xf32>
    %cst_1 = arith.constant 1.600000e+01 : f32
    %3 = vector.broadcast %cst_1 : f32 to vector<16x1xf32>
    %4 = arith.divf %2, %3 : vector<16x1xf32>
    %5 = vector.broadcast %4 : vector<16x1xf32> to vector<16x16xf32>
    %6 = arith.subf %0, %5 : vector<16x16xf32>
    %7 = arith.mulf %6, %6 : vector<16x16xf32>
    %cst_2 = arith.constant dense<0.000000e+00> : vector<16xf32>
    %8 = vector.multi_reduction <add>, %7, %cst_2 [1] : vector<16x16xf32> to vector<16xf32>
    %9 = vector.shape_cast %8 : vector<16xf32> to vector<16x1xf32>
    %cst_3 = arith.constant 1.600000e+01 : f32
    %10 = vector.broadcast %cst_3 : f32 to vector<16x1xf32>
    %11 = arith.divf %9, %10 : vector<16x1xf32>
    %12 = vector.broadcast %4 : vector<16x1xf32> to vector<16x16xf32>
    %13 = arith.subf %0, %12 : vector<16x16xf32>
    %cst_4 = arith.constant 9.99999974E-6 : f32
    %14 = vector.broadcast %cst_4 : f32 to vector<16x1xf32>
    %15 = arith.addf %11, %14 : vector<16x1xf32>
    %16 = math.rsqrt %15 : vector<16x1xf32>
    %17 = vector.broadcast %16 : vector<16x1xf32> to vector<16x16xf32>
    %18 = arith.mulf %13, %17 : vector<16x16xf32>
    %c0_5 = arith.constant 0 : index
    %c0_6 = arith.constant 0 : index
    %19 = vector.load %arg1[%c0_5, %c0_6] : memref<1x16xf32, #tpu.memory_space<vmem>>, vector<1x16xf32>
    %20 = vector.broadcast %19 : vector<1x16xf32> to vector<16x16xf32>
    %21 = arith.mulf %18, %20 : vector<16x16xf32>
    %c0_7 = arith.constant 0 : index
    %c0_8 = arith.constant 0 : index
    %22 = vector.load %arg2[%c0_7, %c0_8] : memref<1x16xf32, #tpu.memory_space<vmem>>, vector<1x16xf32>
    %23 = vector.broadcast %22 : vector<1x16xf32> to vector<16x16xf32>
    %24 = arith.addf %21, %23 : vector<16x16xf32>
    %c0_9 = arith.constant 0 : index
    %c0_10 = arith.constant 0 : index
    %25 = vector.load %arg3[%c0_9, %c0_10] : memref<16x64xf32, #tpu.memory_space<vmem>>, vector<16x64xf32>
    %cst_11 = arith.constant dense<0.000000e+00> : vector<16x64xf32>
    %26 = tpu.matmul %24, %25, %cst_11 {dimension_numbers = #tpu.dot_dimension_numbers<[1], [0], [0], [1], [0, 0, 1, 1], [], []>} : vector<16x16xf32>, vector<16x64xf32>, vector<16x64xf32> -> vector<16x64xf32>
    %c0_12 = arith.constant 0 : index
    %c0_13 = arith.constant 0 : index
    %27 = vector.load %arg6[%c0_12, %c0_13] : memref<1x64xf32, #tpu.memory_space<vmem>>, vector<1x64xf32>
    %28 = vector.broadcast %27 : vector<1x64xf32> to vector<16x64xf32>
    %29 = arith.addf %26, %28 : vector<16x64xf32>
    %c0_14 = arith.constant 0 : index
    %c0_15 = arith.constant 0 : index
    %30 = vector.load %arg4[%c0_14, %c0_15] : memref<32x32xf32, #tpu.memory_space<vmem>>, vector<32x32xf32>
    %c0_16 = arith.constant 0 : index
    %c0_17 = arith.constant 0 : index
    %31 = vector.load %arg5[%c0_16, %c0_17] : memref<32x32xf32, #tpu.memory_space<vmem>>, vector<32x32xf32>
    %c0_18 = arith.constant 0 : index
    %c0_19 = arith.constant 0 : index
    %32 = vector.load %arg7[%c0_18, %c0_19] : memref<2x32xf32, #tpu.memory_space<vmem>>, vector<2x32xf32>
    %c0_20 = arith.constant 0 : index
    %c0_21 = arith.constant 0 : index
    %33 = vector.load %arg8[%c0_20, %c0_21] : memref<2x32xf32, #tpu.memory_space<vmem>>, vector<2x32xf32>
    %34 = vector.extract_strided_slice %29 {offsets = [0, 0], sizes = [2, 32], strides = [1, 1]} : vector<16x64xf32> to vector<2x32xf32>
    %35 = vector.extract_strided_slice %29 {offsets = [14, 32], sizes = [2, 32], strides = [1, 1]} : vector<16x64xf32> to vector<2x32xf32>
    %cst_22 = arith.constant dense<0.000000e+00> : vector<2x32xf32>
    %36 = tpu.matmul %32, %30, %cst_22 {dimension_numbers = #tpu.dot_dimension_numbers<[1], [0], [0], [1], [0, 0, 1, 1], [], []>} : vector<2x32xf32>, vector<32x32xf32>, vector<2x32xf32> -> vector<2x32xf32>
    %37 = arith.addf %34, %36 : vector<2x32xf32>
    %cst_23 = arith.constant 0.000000e+00 : f32
    %38 = vector.broadcast %cst_23 : f32 to vector<2x32xf32>
    %39 = arith.maximumf %37, %38 : vector<2x32xf32>
    %cst_24 = arith.constant dense<0.000000e+00> : vector<2x32xf32>
    %40 = tpu.matmul %33, %31, %cst_24 {dimension_numbers = #tpu.dot_dimension_numbers<[1], [0], [0], [1], [0, 0, 1, 1], [], []>} : vector<2x32xf32>, vector<32x32xf32>, vector<2x32xf32> -> vector<2x32xf32>
    %41 = arith.addf %35, %40 : vector<2x32xf32>
    %cst_25 = arith.constant 0.000000e+00 : f32
    %42 = vector.broadcast %cst_25 : f32 to vector<2x32xf32>
    %43 = arith.maximumf %41, %42 : vector<2x32xf32>
    %c0_26 = arith.constant 0 : index
    %c0_27 = arith.constant 0 : index
    %44 = vector.load %arg9[%c0_26, %c0_27] : memref<16x64xf32, #tpu.memory_space<vmem>>, vector<2x32xf32>
    tpu.vector_store %arg9[%c0_26, %c0_27], %39 {strides = array<i32>} : memref<16x64xf32, #tpu.memory_space<vmem>>, vector<2x32xf32>,
    %c14 = arith.constant 14 : index
    %c32 = arith.constant 32 : index
    %45 = vector.load %arg9[%c14, %c32] : memref<16x64xf32, #tpu.memory_space<vmem>>, vector<2x32xf32>
    tpu.vector_store %arg9[%c14, %c32], %43 {strides = array<i32>} : memref<16x64xf32, #tpu.memory_space<vmem>>, vector<2x32xf32>,
    %46 = vector.extract_strided_slice %29 {offsets = [2, 0], sizes = [2, 32], strides = [1, 1]} : vector<16x64xf32> to vector<2x32xf32>
    %47 = vector.extract_strided_slice %29 {offsets = [12, 32], sizes = [2, 32], strides = [1, 1]} : vector<16x64xf32> to vector<2x32xf32>
    %cst_28 = arith.constant dense<0.000000e+00> : vector<2x32xf32>
    %48 = tpu.matmul %39, %30, %cst_28 {dimension_numbers = #tpu.dot_dimension_numbers<[1], [0], [0], [1], [0, 0, 1, 1], [], []>} : vector<2x32xf32>, vector<32x32xf32>, vector<2x32xf32> -> vector<2x32xf32>
    %49 = arith.addf %46, %48 : vector<2x32xf32>
    %cst_29 = arith.constant 0.000000e+00 : f32
    %50 = vector.broadcast %cst_29 : f32 to vector<2x32xf32>
    %51 = arith.maximumf %49, %50 : vector<2x32xf32>
    %cst_30 = arith.constant dense<0.000000e+00> : vector<2x32xf32>
    %52 = tpu.matmul %43, %31, %cst_30 {dimension_numbers = #tpu.dot_dimension_numbers<[1], [0], [0], [1], [0, 0, 1, 1], [], []>} : vector<2x32xf32>, vector<32x32xf32>, vector<2x32xf32> -> vector<2x32xf32>
    %53 = arith.addf %47, %52 : vector<2x32xf32>
    %cst_31 = arith.constant 0.000000e+00 : f32
    %54 = vector.broadcast %cst_31 : f32 to vector<2x32xf32>
    %55 = arith.maximumf %53, %54 : vector<2x32xf32>
    %c2 = arith.constant 2 : index
    %c0_32 = arith.constant 0 : index
    %56 = vector.load %arg9[%c2, %c0_32] : memref<16x64xf32, #tpu.memory_space<vmem>>, vector<2x32xf32>
    tpu.vector_store %arg9[%c2, %c0_32], %51 {strides = array<i32>} : memref<16x64xf32, #tpu.memory_space<vmem>>, vector<2x32xf32>,
    %c12 = arith.constant 12 : index
    %c32_33 = arith.constant 32 : index
    %57 = vector.load %arg9[%c12, %c32_33] : memref<16x64xf32, #tpu.memory_space<vmem>>, vector<2x32xf32>
    tpu.vector_store %arg9[%c12, %c32_33], %55 {strides = array<i32>} : memref<16x64xf32, #tpu.memory_space<vmem>>, vector<2x32xf32>,
    %58 = vector.extract_strided_slice %29 {offsets = [4, 0], sizes = [2, 32], strides = [1, 1]} : vector<16x64xf32> to vector<2x32xf32>
    %59 = vector.extract_strided_slice %29 {offsets = [10, 32], sizes = [2, 32], strides = [1, 1]} : vector<16x64xf32> to vector<2x32xf32>
    %cst_34 = arith.constant dense<0.000000e+00> : vector<2x32xf32>
    %60 = tpu.matmul %51, %30, %cst_34 {dimension_numbers = #tpu.dot_dimension_numbers<[1], [0], [0], [1], [0, 0, 1, 1], [], []>} : vector<2x32xf32>, vector<32x32xf32>, vector<2x32xf32> -> vector<2x32xf32>
    %61 = arith.addf %58, %60 : vector<2x32xf32>
    %cst_35 = arith.constant 0.000000e+00 : f32
    %62 = vector.broadcast %cst_35 : f32 to vector<2x32xf32>
    %63 = arith.maximumf %61, %62 : vector<2x32xf32>
    %cst_36 = arith.constant dense<0.000000e+00> : vector<2x32xf32>
    %64 = tpu.matmul %55, %31, %cst_36 {dimension_numbers = #tpu.dot_dimension_numbers<[1], [0], [0], [1], [0, 0, 1, 1], [], []>} : vector<2x32xf32>, vector<32x32xf32>, vector<2x32xf32> -> vector<2x32xf32>
    %65 = arith.addf %59, %64 : vector<2x32xf32>
    %cst_37 = arith.constant 0.000000e+00 : f32
    %66 = vector.broadcast %cst_37 : f32 to vector<2x32xf32>
    %67 = arith.maximumf %65, %66 : vector<2x32xf32>
    %c4 = arith.constant 4 : index
    %c0_38 = arith.constant 0 : index
    %68 = vector.load %arg9[%c4, %c0_38] : memref<16x64xf32, #tpu.memory_space<vmem>>, vector<2x32xf32>
    tpu.vector_store %arg9[%c4, %c0_38], %63 {strides = array<i32>} : memref<16x64xf32, #tpu.memory_space<vmem>>, vector<2x32xf32>,
    %c10 = arith.constant 10 : index
    %c32_39 = arith.constant 32 : index
    %69 = vector.load %arg9[%c10, %c32_39] : memref<16x64xf32, #tpu.memory_space<vmem>>, vector<2x32xf32>
    tpu.vector_store %arg9[%c10, %c32_39], %67 {strides = array<i32>} : memref<16x64xf32, #tpu.memory_space<vmem>>, vector<2x32xf32>,
    %70 = vector.extract_strided_slice %29 {offsets = [6, 0], sizes = [2, 32], strides = [1, 1]} : vector<16x64xf32> to vector<2x32xf32>
    %71 = vector.extract_strided_slice %29 {offsets = [8, 32], sizes = [2, 32], strides = [1, 1]} : vector<16x64xf32> to vector<2x32xf32>
    %cst_40 = arith.constant dense<0.000000e+00> : vector<2x32xf32>
    %72 = tpu.matmul %63, %30, %cst_40 {dimension_numbers = #tpu.dot_dimension_numbers<[1], [0], [0], [1], [0, 0, 1, 1], [], []>} : vector<2x32xf32>, vector<32x32xf32>, vector<2x32xf32> -> vector<2x32xf32>
    %73 = arith.addf %70, %72 : vector<2x32xf32>
    %cst_41 = arith.constant 0.000000e+00 : f32
    %74 = vector.broadcast %cst_41 : f32 to vector<2x32xf32>
    %75 = arith.maximumf %73, %74 : vector<2x32xf32>
    %cst_42 = arith.constant dense<0.000000e+00> : vector<2x32xf32>
    %76 = tpu.matmul %67, %31, %cst_42 {dimension_numbers = #tpu.dot_dimension_numbers<[1], [0], [0], [1], [0, 0, 1, 1], [], []>} : vector<2x32xf32>, vector<32x32xf32>, vector<2x32xf32> -> vector<2x32xf32>
    %77 = arith.addf %71, %76 : vector<2x32xf32>
    %cst_43 = arith.constant 0.000000e+00 : f32
    %78 = vector.broadcast %cst_43 : f32 to vector<2x32xf32>
    %79 = arith.maximumf %77, %78 : vector<2x32xf32>
    %c6 = arith.constant 6 : index
    %c0_44 = arith.constant 0 : index
    %80 = vector.load %arg9[%c6, %c0_44] : memref<16x64xf32, #tpu.memory_space<vmem>>, vector<2x32xf32>
    tpu.vector_store %arg9[%c6, %c0_44], %75 {strides = array<i32>} : memref<16x64xf32, #tpu.memory_space<vmem>>, vector<2x32xf32>,
    %c8 = arith.constant 8 : index
    %c32_45 = arith.constant 32 : index
    %81 = vector.load %arg9[%c8, %c32_45] : memref<16x64xf32, #tpu.memory_space<vmem>>, vector<2x32xf32>
    tpu.vector_store %arg9[%c8, %c32_45], %79 {strides = array<i32>} : memref<16x64xf32, #tpu.memory_space<vmem>>, vector<2x32xf32>,
    %82 = vector.extract_strided_slice %29 {offsets = [8, 0], sizes = [2, 32], strides = [1, 1]} : vector<16x64xf32> to vector<2x32xf32>
    %83 = vector.extract_strided_slice %29 {offsets = [6, 32], sizes = [2, 32], strides = [1, 1]} : vector<16x64xf32> to vector<2x32xf32>
    %cst_46 = arith.constant dense<0.000000e+00> : vector<2x32xf32>
    %84 = tpu.matmul %75, %30, %cst_46 {dimension_numbers = #tpu.dot_dimension_numbers<[1], [0], [0], [1], [0, 0, 1, 1], [], []>} : vector<2x32xf32>, vector<32x32xf32>, vector<2x32xf32> -> vector<2x32xf32>
    %85 = arith.addf %82, %84 : vector<2x32xf32>
    %cst_47 = arith.constant 0.000000e+00 : f32
    %86 = vector.broadcast %cst_47 : f32 to vector<2x32xf32>
    %87 = arith.maximumf %85, %86 : vector<2x32xf32>
    %cst_48 = arith.constant dense<0.000000e+00> : vector<2x32xf32>
    %88 = tpu.matmul %79, %31, %cst_48 {dimension_numbers = #tpu.dot_dimension_numbers<[1], [0], [0], [1], [0, 0, 1, 1], [], []>} : vector<2x32xf32>, vector<32x32xf32>, vector<2x32xf32> -> vector<2x32xf32>
    %89 = arith.addf %83, %88 : vector<2x32xf32>
    %cst_49 = arith.constant 0.000000e+00 : f32
    %90 = vector.broadcast %cst_49 : f32 to vector<2x32xf32>
    %91 = arith.maximumf %89, %90 : vector<2x32xf32>
    %c8_50 = arith.constant 8 : index
    %c0_51 = arith.constant 0 : index
    %92 = vector.load %arg9[%c8_50, %c0_51] : memref<16x64xf32, #tpu.memory_space<vmem>>, vector<2x32xf32>
    tpu.vector_store %arg9[%c8_50, %c0_51], %87 {strides = array<i32>} : memref<16x64xf32, #tpu.memory_space<vmem>>, vector<2x32xf32>,
    %c6_52 = arith.constant 6 : index
    %c32_53 = arith.constant 32 : index
    %93 = vector.load %arg9[%c6_52, %c32_53] : memref<16x64xf32, #tpu.memory_space<vmem>>, vector<2x32xf32>
    tpu.vector_store %arg9[%c6_52, %c32_53], %91 {strides = array<i32>} : memref<16x64xf32, #tpu.memory_space<vmem>>, vector<2x32xf32>,
    %94 = vector.extract_strided_slice %29 {offsets = [10, 0], sizes = [2, 32], strides = [1, 1]} : vector<16x64xf32> to vector<2x32xf32>
    %95 = vector.extract_strided_slice %29 {offsets = [4, 32], sizes = [2, 32], strides = [1, 1]} : vector<16x64xf32> to vector<2x32xf32>
    %cst_54 = arith.constant dense<0.000000e+00> : vector<2x32xf32>
    %96 = tpu.matmul %87, %30, %cst_54 {dimension_numbers = #tpu.dot_dimension_numbers<[1], [0], [0], [1], [0, 0, 1, 1], [], []>} : vector<2x32xf32>, vector<32x32xf32>, vector<2x32xf32> -> vector<2x32xf32>
    %97 = arith.addf %94, %96 : vector<2x32xf32>
    %cst_55 = arith.constant 0.000000e+00 : f32
    %98 = vector.broadcast %cst_55 : f32 to vector<2x32xf32>
    %99 = arith.maximumf %97, %98 : vector<2x32xf32>
    %cst_56 = arith.constant dense<0.000000e+00> : vector<2x32xf32>
    %100 = tpu.matmul %91, %31, %cst_56 {dimension_numbers = #tpu.dot_dimension_numbers<[1], [0], [0], [1], [0, 0, 1, 1], [], []>} : vector<2x32xf32>, vector<32x32xf32>, vector<2x32xf32> -> vector<2x32xf32>
    %101 = arith.addf %95, %100 : vector<2x32xf32>
    %cst_57 = arith.constant 0.000000e+00 : f32
    %102 = vector.broadcast %cst_57 : f32 to vector<2x32xf32>
    %103 = arith.maximumf %101, %102 : vector<2x32xf32>
    %c10_58 = arith.constant 10 : index
    %c0_59 = arith.constant 0 : index
    %104 = vector.load %arg9[%c10_58, %c0_59] : memref<16x64xf32, #tpu.memory_space<vmem>>, vector<2x32xf32>
    tpu.vector_store %arg9[%c10_58, %c0_59], %99 {strides = array<i32>} : memref<16x64xf32, #tpu.memory_space<vmem>>, vector<2x32xf32>,
    %c4_60 = arith.constant 4 : index
    %c32_61 = arith.constant 32 : index
    %105 = vector.load %arg9[%c4_60, %c32_61] : memref<16x64xf32, #tpu.memory_space<vmem>>, vector<2x32xf32>
    tpu.vector_store %arg9[%c4_60, %c32_61], %103 {strides = array<i32>} : memref<16x64xf32, #tpu.memory_space<vmem>>, vector<2x32xf32>,
    %106 = vector.extract_strided_slice %29 {offsets = [12, 0], sizes = [2, 32], strides = [1, 1]} : vector<16x64xf32> to vector<2x32xf32>
    %107 = vector.extract_strided_slice %29 {offsets = [2, 32], sizes = [2, 32], strides = [1, 1]} : vector<16x64xf32> to vector<2x32xf32>
    %cst_62 = arith.constant dense<0.000000e+00> : vector<2x32xf32>
    %108 = tpu.matmul %99, %30, %cst_62 {dimension_numbers = #tpu.dot_dimension_numbers<[1], [0], [0], [1], [0, 0, 1, 1], [], []>} : vector<2x32xf32>, vector<32x32xf32>, vector<2x32xf32> -> vector<2x32xf32>
    %109 = arith.addf %106, %108 : vector<2x32xf32>
    %cst_63 = arith.constant 0.000000e+00 : f32
    %110 = vector.broadcast %cst_63 : f32 to vector<2x32xf32>
    %111 = arith.maximumf %109, %110 : vector<2x32xf32>
    %cst_64 = arith.constant dense<0.000000e+00> : vector<2x32xf32>
    %112 = tpu.matmul %103, %31, %cst_64 {dimension_numbers = #tpu.dot_dimension_numbers<[1], [0], [0], [1], [0, 0, 1, 1], [], []>} : vector<2x32xf32>, vector<32x32xf32>, vector<2x32xf32> -> vector<2x32xf32>
    %113 = arith.addf %107, %112 : vector<2x32xf32>
    %cst_65 = arith.constant 0.000000e+00 : f32
    %114 = vector.broadcast %cst_65 : f32 to vector<2x32xf32>
    %115 = arith.maximumf %113, %114 : vector<2x32xf32>
    %c12_66 = arith.constant 12 : index
    %c0_67 = arith.constant 0 : index
    %116 = vector.load %arg9[%c12_66, %c0_67] : memref<16x64xf32, #tpu.memory_space<vmem>>, vector<2x32xf32>
    tpu.vector_store %arg9[%c12_66, %c0_67], %111 {strides = array<i32>} : memref<16x64xf32, #tpu.memory_space<vmem>>, vector<2x32xf32>,
    %c2_68 = arith.constant 2 : index
    %c32_69 = arith.constant 32 : index
    %117 = vector.load %arg9[%c2_68, %c32_69] : memref<16x64xf32, #tpu.memory_space<vmem>>, vector<2x32xf32>
    tpu.vector_store %arg9[%c2_68, %c32_69], %115 {strides = array<i32>} : memref<16x64xf32, #tpu.memory_space<vmem>>, vector<2x32xf32>,
    %118 = vector.extract_strided_slice %29 {offsets = [14, 0], sizes = [2, 32], strides = [1, 1]} : vector<16x64xf32> to vector<2x32xf32>
    %119 = vector.extract_strided_slice %29 {offsets = [0, 32], sizes = [2, 32], strides = [1, 1]} : vector<16x64xf32> to vector<2x32xf32>
    %cst_70 = arith.constant dense<0.000000e+00> : vector<2x32xf32>
    %120 = tpu.matmul %111, %30, %cst_70 {dimension_numbers = #tpu.dot_dimension_numbers<[1], [0], [0], [1], [0, 0, 1, 1], [], []>} : vector<2x32xf32>, vector<32x32xf32>, vector<2x32xf32> -> vector<2x32xf32>
    %121 = arith.addf %118, %120 : vector<2x32xf32>
    %cst_71 = arith.constant 0.000000e+00 : f32
    %122 = vector.broadcast %cst_71 : f32 to vector<2x32xf32>
    %123 = arith.maximumf %121, %122 : vector<2x32xf32>
    %cst_72 = arith.constant dense<0.000000e+00> : vector<2x32xf32>
    %124 = tpu.matmul %115, %31, %cst_72 {dimension_numbers = #tpu.dot_dimension_numbers<[1], [0], [0], [1], [0, 0, 1, 1], [], []>} : vector<2x32xf32>, vector<32x32xf32>, vector<2x32xf32> -> vector<2x32xf32>
    %125 = arith.addf %119, %124 : vector<2x32xf32>
    %cst_73 = arith.constant 0.000000e+00 : f32
    %126 = vector.broadcast %cst_73 : f32 to vector<2x32xf32>
    %127 = arith.maximumf %125, %126 : vector<2x32xf32>
    %c14_74 = arith.constant 14 : index
    %c0_75 = arith.constant 0 : index
    %128 = vector.load %arg9[%c14_74, %c0_75] : memref<16x64xf32, #tpu.memory_space<vmem>>, vector<2x32xf32>
    tpu.vector_store %arg9[%c14_74, %c0_75], %123 {strides = array<i32>} : memref<16x64xf32, #tpu.memory_space<vmem>>, vector<2x32xf32>,
    %c0_76 = arith.constant 0 : index
    %c32_77 = arith.constant 32 : index
    %129 = vector.load %arg9[%c0_76, %c32_77] : memref<16x64xf32, #tpu.memory_space<vmem>>, vector<2x32xf32>
    tpu.vector_store %arg9[%c0_76, %c32_77], %127 {strides = array<i32>} : memref<16x64xf32, #tpu.memory_space<vmem>>, vector<2x32xf32>,
    %c0_78 = arith.constant 0 : index
    %c0_79 = arith.constant 0 : index
    %130 = vector.load %arg10[%c0_78, %c0_79] : memref<2x32xf32, #tpu.memory_space<vmem>>, vector<2x32xf32>
    tpu.vector_store %arg10[%c0_78, %c0_79], %123 {strides = array<i32>} : memref<2x32xf32, #tpu.memory_space<vmem>>, vector<2x32xf32>,
    %c0_80 = arith.constant 0 : index
    %c0_81 = arith.constant 0 : index
    %131 = vector.load %arg11[%c0_80, %c0_81] : memref<2x32xf32, #tpu.memory_space<vmem>>, vector<2x32xf32>
    tpu.vector_store %arg11[%c0_80, %c0_81], %127 {strides = array<i32>} : memref<2x32xf32, #tpu.memory_space<vmem>>, vector<2x32xf32>,
    return
  }
}

module attributes {stable_mosaic.version = 11 : i64} {
  func.func @_bidir_layer_kernel(%arg0: memref<16x64xf32, #tpu.memory_space<vmem>>, %arg1: memref<1x64xf32, #tpu.memory_space<vmem>>, %arg2: memref<1x64xf32, #tpu.memory_space<vmem>>, %arg3: memref<64x64xf32, #tpu.memory_space<vmem>>, %arg4: memref<32x32xf32, #tpu.memory_space<vmem>>, %arg5: memref<32x32xf32, #tpu.memory_space<vmem>>, %arg6: memref<1x64xf32, #tpu.memory_space<vmem>>, %arg7: memref<2x32xf32, #tpu.memory_space<vmem>>, %arg8: memref<2x32xf32, #tpu.memory_space<vmem>>, %arg9: memref<16x64xf32, #tpu.memory_space<vmem>>, %arg10: memref<2x32xf32, #tpu.memory_space<vmem>>, %arg11: memref<2x32xf32, #tpu.memory_space<vmem>>) attributes {dimension_semantics = [], scalar_prefetch = 0 : i64, scratch_operands = 0 : i64, tpu.core_type = #tpu.core_type<tc>} {
    %c0 = arith.constant 0 : index
    %c0_0 = arith.constant 0 : index
    %0 = vector.load %arg0[%c0, %c0_0] : memref<16x64xf32, #tpu.memory_space<vmem>>, vector<16x64xf32>
    %c0_1 = arith.constant 0 : index
    %c0_2 = arith.constant 0 : index
    %1 = vector.load %arg3[%c0_1, %c0_2] : memref<64x64xf32, #tpu.memory_space<vmem>>, vector<64x64xf32>
    %cst = arith.constant dense<0.000000e+00> : vector<16x64xf32>
    %2 = tpu.matmul %0, %1, %cst {dimension_numbers = #tpu.dot_dimension_numbers<[1], [0], [0], [1], [0, 0, 1, 1], [], []>} : vector<16x64xf32>, vector<64x64xf32>, vector<16x64xf32> -> vector<16x64xf32>
    %c0_3 = arith.constant 0 : index
    %c0_4 = arith.constant 0 : index
    %3 = vector.load %arg6[%c0_3, %c0_4] : memref<1x64xf32, #tpu.memory_space<vmem>>, vector<1x64xf32>
    %4 = vector.broadcast %3 : vector<1x64xf32> to vector<16x64xf32>
    %5 = arith.addf %2, %4 : vector<16x64xf32>
    %c0_5 = arith.constant 0 : index
    %c0_6 = arith.constant 0 : index
    %6 = vector.load %arg4[%c0_5, %c0_6] : memref<32x32xf32, #tpu.memory_space<vmem>>, vector<32x32xf32>
    %c0_7 = arith.constant 0 : index
    %c0_8 = arith.constant 0 : index
    %7 = vector.load %arg5[%c0_7, %c0_8] : memref<32x32xf32, #tpu.memory_space<vmem>>, vector<32x32xf32>
    %c0_9 = arith.constant 0 : index
    %c0_10 = arith.constant 0 : index
    %8 = vector.load %arg7[%c0_9, %c0_10] : memref<2x32xf32, #tpu.memory_space<vmem>>, vector<2x32xf32>
    %c0_11 = arith.constant 0 : index
    %c0_12 = arith.constant 0 : index
    %9 = vector.load %arg8[%c0_11, %c0_12] : memref<2x32xf32, #tpu.memory_space<vmem>>, vector<2x32xf32>
    %10 = vector.extract_strided_slice %5 {offsets = [0, 0], sizes = [2, 32], strides = [1, 1]} : vector<16x64xf32> to vector<2x32xf32>
    %11 = vector.extract_strided_slice %5 {offsets = [14, 32], sizes = [2, 32], strides = [1, 1]} : vector<16x64xf32> to vector<2x32xf32>
    %cst_13 = arith.constant dense<0.000000e+00> : vector<2x32xf32>
    %12 = tpu.matmul %8, %6, %cst_13 {dimension_numbers = #tpu.dot_dimension_numbers<[1], [0], [0], [1], [0, 0, 1, 1], [], []>} : vector<2x32xf32>, vector<32x32xf32>, vector<2x32xf32> -> vector<2x32xf32>
    %13 = arith.addf %10, %12 : vector<2x32xf32>
    %cst_14 = arith.constant 0.000000e+00 : f32
    %14 = vector.broadcast %cst_14 : f32 to vector<2x32xf32>
    %15 = arith.maximumf %13, %14 : vector<2x32xf32>
    %cst_15 = arith.constant dense<0.000000e+00> : vector<2x32xf32>
    %16 = tpu.matmul %9, %7, %cst_15 {dimension_numbers = #tpu.dot_dimension_numbers<[1], [0], [0], [1], [0, 0, 1, 1], [], []>} : vector<2x32xf32>, vector<32x32xf32>, vector<2x32xf32> -> vector<2x32xf32>
    %17 = arith.addf %11, %16 : vector<2x32xf32>
    %cst_16 = arith.constant 0.000000e+00 : f32
    %18 = vector.broadcast %cst_16 : f32 to vector<2x32xf32>
    %19 = arith.maximumf %17, %18 : vector<2x32xf32>
    %c0_17 = arith.constant 0 : index
    %c0_18 = arith.constant 0 : index
    %20 = vector.load %arg9[%c0_17, %c0_18] : memref<16x64xf32, #tpu.memory_space<vmem>>, vector<2x32xf32>
    tpu.vector_store %arg9[%c0_17, %c0_18], %15 {strides = array<i32>} : memref<16x64xf32, #tpu.memory_space<vmem>>, vector<2x32xf32>,
    %c14 = arith.constant 14 : index
    %c32 = arith.constant 32 : index
    %21 = vector.load %arg9[%c14, %c32] : memref<16x64xf32, #tpu.memory_space<vmem>>, vector<2x32xf32>
    tpu.vector_store %arg9[%c14, %c32], %19 {strides = array<i32>} : memref<16x64xf32, #tpu.memory_space<vmem>>, vector<2x32xf32>,
    %22 = vector.extract_strided_slice %5 {offsets = [2, 0], sizes = [2, 32], strides = [1, 1]} : vector<16x64xf32> to vector<2x32xf32>
    %23 = vector.extract_strided_slice %5 {offsets = [12, 32], sizes = [2, 32], strides = [1, 1]} : vector<16x64xf32> to vector<2x32xf32>
    %cst_19 = arith.constant dense<0.000000e+00> : vector<2x32xf32>
    %24 = tpu.matmul %15, %6, %cst_19 {dimension_numbers = #tpu.dot_dimension_numbers<[1], [0], [0], [1], [0, 0, 1, 1], [], []>} : vector<2x32xf32>, vector<32x32xf32>, vector<2x32xf32> -> vector<2x32xf32>
    %25 = arith.addf %22, %24 : vector<2x32xf32>
    %cst_20 = arith.constant 0.000000e+00 : f32
    %26 = vector.broadcast %cst_20 : f32 to vector<2x32xf32>
    %27 = arith.maximumf %25, %26 : vector<2x32xf32>
    %cst_21 = arith.constant dense<0.000000e+00> : vector<2x32xf32>
    %28 = tpu.matmul %19, %7, %cst_21 {dimension_numbers = #tpu.dot_dimension_numbers<[1], [0], [0], [1], [0, 0, 1, 1], [], []>} : vector<2x32xf32>, vector<32x32xf32>, vector<2x32xf32> -> vector<2x32xf32>
    %29 = arith.addf %23, %28 : vector<2x32xf32>
    %cst_22 = arith.constant 0.000000e+00 : f32
    %30 = vector.broadcast %cst_22 : f32 to vector<2x32xf32>
    %31 = arith.maximumf %29, %30 : vector<2x32xf32>
    %c2 = arith.constant 2 : index
    %c0_23 = arith.constant 0 : index
    %32 = vector.load %arg9[%c2, %c0_23] : memref<16x64xf32, #tpu.memory_space<vmem>>, vector<2x32xf32>
    tpu.vector_store %arg9[%c2, %c0_23], %27 {strides = array<i32>} : memref<16x64xf32, #tpu.memory_space<vmem>>, vector<2x32xf32>,
    %c12 = arith.constant 12 : index
    %c32_24 = arith.constant 32 : index
    %33 = vector.load %arg9[%c12, %c32_24] : memref<16x64xf32, #tpu.memory_space<vmem>>, vector<2x32xf32>
    tpu.vector_store %arg9[%c12, %c32_24], %31 {strides = array<i32>} : memref<16x64xf32, #tpu.memory_space<vmem>>, vector<2x32xf32>,
    %34 = vector.extract_strided_slice %5 {offsets = [4, 0], sizes = [2, 32], strides = [1, 1]} : vector<16x64xf32> to vector<2x32xf32>
    %35 = vector.extract_strided_slice %5 {offsets = [10, 32], sizes = [2, 32], strides = [1, 1]} : vector<16x64xf32> to vector<2x32xf32>
    %cst_25 = arith.constant dense<0.000000e+00> : vector<2x32xf32>
    %36 = tpu.matmul %27, %6, %cst_25 {dimension_numbers = #tpu.dot_dimension_numbers<[1], [0], [0], [1], [0, 0, 1, 1], [], []>} : vector<2x32xf32>, vector<32x32xf32>, vector<2x32xf32> -> vector<2x32xf32>
    %37 = arith.addf %34, %36 : vector<2x32xf32>
    %cst_26 = arith.constant 0.000000e+00 : f32
    %38 = vector.broadcast %cst_26 : f32 to vector<2x32xf32>
    %39 = arith.maximumf %37, %38 : vector<2x32xf32>
    %cst_27 = arith.constant dense<0.000000e+00> : vector<2x32xf32>
    %40 = tpu.matmul %31, %7, %cst_27 {dimension_numbers = #tpu.dot_dimension_numbers<[1], [0], [0], [1], [0, 0, 1, 1], [], []>} : vector<2x32xf32>, vector<32x32xf32>, vector<2x32xf32> -> vector<2x32xf32>
    %41 = arith.addf %35, %40 : vector<2x32xf32>
    %cst_28 = arith.constant 0.000000e+00 : f32
    %42 = vector.broadcast %cst_28 : f32 to vector<2x32xf32>
    %43 = arith.maximumf %41, %42 : vector<2x32xf32>
    %c4 = arith.constant 4 : index
    %c0_29 = arith.constant 0 : index
    %44 = vector.load %arg9[%c4, %c0_29] : memref<16x64xf32, #tpu.memory_space<vmem>>, vector<2x32xf32>
    tpu.vector_store %arg9[%c4, %c0_29], %39 {strides = array<i32>} : memref<16x64xf32, #tpu.memory_space<vmem>>, vector<2x32xf32>,
    %c10 = arith.constant 10 : index
    %c32_30 = arith.constant 32 : index
    %45 = vector.load %arg9[%c10, %c32_30] : memref<16x64xf32, #tpu.memory_space<vmem>>, vector<2x32xf32>
    tpu.vector_store %arg9[%c10, %c32_30], %43 {strides = array<i32>} : memref<16x64xf32, #tpu.memory_space<vmem>>, vector<2x32xf32>,
    %46 = vector.extract_strided_slice %5 {offsets = [6, 0], sizes = [2, 32], strides = [1, 1]} : vector<16x64xf32> to vector<2x32xf32>
    %47 = vector.extract_strided_slice %5 {offsets = [8, 32], sizes = [2, 32], strides = [1, 1]} : vector<16x64xf32> to vector<2x32xf32>
    %cst_31 = arith.constant dense<0.000000e+00> : vector<2x32xf32>
    %48 = tpu.matmul %39, %6, %cst_31 {dimension_numbers = #tpu.dot_dimension_numbers<[1], [0], [0], [1], [0, 0, 1, 1], [], []>} : vector<2x32xf32>, vector<32x32xf32>, vector<2x32xf32> -> vector<2x32xf32>
    %49 = arith.addf %46, %48 : vector<2x32xf32>
    %cst_32 = arith.constant 0.000000e+00 : f32
    %50 = vector.broadcast %cst_32 : f32 to vector<2x32xf32>
    %51 = arith.maximumf %49, %50 : vector<2x32xf32>
    %cst_33 = arith.constant dense<0.000000e+00> : vector<2x32xf32>
    %52 = tpu.matmul %43, %7, %cst_33 {dimension_numbers = #tpu.dot_dimension_numbers<[1], [0], [0], [1], [0, 0, 1, 1], [], []>} : vector<2x32xf32>, vector<32x32xf32>, vector<2x32xf32> -> vector<2x32xf32>
    %53 = arith.addf %47, %52 : vector<2x32xf32>
    %cst_34 = arith.constant 0.000000e+00 : f32
    %54 = vector.broadcast %cst_34 : f32 to vector<2x32xf32>
    %55 = arith.maximumf %53, %54 : vector<2x32xf32>
    %c6 = arith.constant 6 : index
    %c0_35 = arith.constant 0 : index
    %56 = vector.load %arg9[%c6, %c0_35] : memref<16x64xf32, #tpu.memory_space<vmem>>, vector<2x32xf32>
    tpu.vector_store %arg9[%c6, %c0_35], %51 {strides = array<i32>} : memref<16x64xf32, #tpu.memory_space<vmem>>, vector<2x32xf32>,
    %c8 = arith.constant 8 : index
    %c32_36 = arith.constant 32 : index
    %57 = vector.load %arg9[%c8, %c32_36] : memref<16x64xf32, #tpu.memory_space<vmem>>, vector<2x32xf32>
    tpu.vector_store %arg9[%c8, %c32_36], %55 {strides = array<i32>} : memref<16x64xf32, #tpu.memory_space<vmem>>, vector<2x32xf32>,
    %58 = vector.extract_strided_slice %5 {offsets = [8, 0], sizes = [2, 32], strides = [1, 1]} : vector<16x64xf32> to vector<2x32xf32>
    %59 = vector.extract_strided_slice %5 {offsets = [6, 32], sizes = [2, 32], strides = [1, 1]} : vector<16x64xf32> to vector<2x32xf32>
    %cst_37 = arith.constant dense<0.000000e+00> : vector<2x32xf32>
    %60 = tpu.matmul %51, %6, %cst_37 {dimension_numbers = #tpu.dot_dimension_numbers<[1], [0], [0], [1], [0, 0, 1, 1], [], []>} : vector<2x32xf32>, vector<32x32xf32>, vector<2x32xf32> -> vector<2x32xf32>
    %61 = arith.addf %58, %60 : vector<2x32xf32>
    %cst_38 = arith.constant 0.000000e+00 : f32
    %62 = vector.broadcast %cst_38 : f32 to vector<2x32xf32>
    %63 = arith.maximumf %61, %62 : vector<2x32xf32>
    %cst_39 = arith.constant dense<0.000000e+00> : vector<2x32xf32>
    %64 = tpu.matmul %55, %7, %cst_39 {dimension_numbers = #tpu.dot_dimension_numbers<[1], [0], [0], [1], [0, 0, 1, 1], [], []>} : vector<2x32xf32>, vector<32x32xf32>, vector<2x32xf32> -> vector<2x32xf32>
    %65 = arith.addf %59, %64 : vector<2x32xf32>
    %cst_40 = arith.constant 0.000000e+00 : f32
    %66 = vector.broadcast %cst_40 : f32 to vector<2x32xf32>
    %67 = arith.maximumf %65, %66 : vector<2x32xf32>
    %c8_41 = arith.constant 8 : index
    %c0_42 = arith.constant 0 : index
    %68 = vector.load %arg9[%c8_41, %c0_42] : memref<16x64xf32, #tpu.memory_space<vmem>>, vector<2x32xf32>
    tpu.vector_store %arg9[%c8_41, %c0_42], %63 {strides = array<i32>} : memref<16x64xf32, #tpu.memory_space<vmem>>, vector<2x32xf32>,
    %c6_43 = arith.constant 6 : index
    %c32_44 = arith.constant 32 : index
    %69 = vector.load %arg9[%c6_43, %c32_44] : memref<16x64xf32, #tpu.memory_space<vmem>>, vector<2x32xf32>
    tpu.vector_store %arg9[%c6_43, %c32_44], %67 {strides = array<i32>} : memref<16x64xf32, #tpu.memory_space<vmem>>, vector<2x32xf32>,
    %70 = vector.extract_strided_slice %5 {offsets = [10, 0], sizes = [2, 32], strides = [1, 1]} : vector<16x64xf32> to vector<2x32xf32>
    %71 = vector.extract_strided_slice %5 {offsets = [4, 32], sizes = [2, 32], strides = [1, 1]} : vector<16x64xf32> to vector<2x32xf32>
    %cst_45 = arith.constant dense<0.000000e+00> : vector<2x32xf32>
    %72 = tpu.matmul %63, %6, %cst_45 {dimension_numbers = #tpu.dot_dimension_numbers<[1], [0], [0], [1], [0, 0, 1, 1], [], []>} : vector<2x32xf32>, vector<32x32xf32>, vector<2x32xf32> -> vector<2x32xf32>
    %73 = arith.addf %70, %72 : vector<2x32xf32>
    %cst_46 = arith.constant 0.000000e+00 : f32
    %74 = vector.broadcast %cst_46 : f32 to vector<2x32xf32>
    %75 = arith.maximumf %73, %74 : vector<2x32xf32>
    %cst_47 = arith.constant dense<0.000000e+00> : vector<2x32xf32>
    %76 = tpu.matmul %67, %7, %cst_47 {dimension_numbers = #tpu.dot_dimension_numbers<[1], [0], [0], [1], [0, 0, 1, 1], [], []>} : vector<2x32xf32>, vector<32x32xf32>, vector<2x32xf32> -> vector<2x32xf32>
    %77 = arith.addf %71, %76 : vector<2x32xf32>
    %cst_48 = arith.constant 0.000000e+00 : f32
    %78 = vector.broadcast %cst_48 : f32 to vector<2x32xf32>
    %79 = arith.maximumf %77, %78 : vector<2x32xf32>
    %c10_49 = arith.constant 10 : index
    %c0_50 = arith.constant 0 : index
    %80 = vector.load %arg9[%c10_49, %c0_50] : memref<16x64xf32, #tpu.memory_space<vmem>>, vector<2x32xf32>
    tpu.vector_store %arg9[%c10_49, %c0_50], %75 {strides = array<i32>} : memref<16x64xf32, #tpu.memory_space<vmem>>, vector<2x32xf32>,
    %c4_51 = arith.constant 4 : index
    %c32_52 = arith.constant 32 : index
    %81 = vector.load %arg9[%c4_51, %c32_52] : memref<16x64xf32, #tpu.memory_space<vmem>>, vector<2x32xf32>
    tpu.vector_store %arg9[%c4_51, %c32_52], %79 {strides = array<i32>} : memref<16x64xf32, #tpu.memory_space<vmem>>, vector<2x32xf32>,
    %82 = vector.extract_strided_slice %5 {offsets = [12, 0], sizes = [2, 32], strides = [1, 1]} : vector<16x64xf32> to vector<2x32xf32>
    %83 = vector.extract_strided_slice %5 {offsets = [2, 32], sizes = [2, 32], strides = [1, 1]} : vector<16x64xf32> to vector<2x32xf32>
    %cst_53 = arith.constant dense<0.000000e+00> : vector<2x32xf32>
    %84 = tpu.matmul %75, %6, %cst_53 {dimension_numbers = #tpu.dot_dimension_numbers<[1], [0], [0], [1], [0, 0, 1, 1], [], []>} : vector<2x32xf32>, vector<32x32xf32>, vector<2x32xf32> -> vector<2x32xf32>
    %85 = arith.addf %82, %84 : vector<2x32xf32>
    %cst_54 = arith.constant 0.000000e+00 : f32
    %86 = vector.broadcast %cst_54 : f32 to vector<2x32xf32>
    %87 = arith.maximumf %85, %86 : vector<2x32xf32>
    %cst_55 = arith.constant dense<0.000000e+00> : vector<2x32xf32>
    %88 = tpu.matmul %79, %7, %cst_55 {dimension_numbers = #tpu.dot_dimension_numbers<[1], [0], [0], [1], [0, 0, 1, 1], [], []>} : vector<2x32xf32>, vector<32x32xf32>, vector<2x32xf32> -> vector<2x32xf32>
    %89 = arith.addf %83, %88 : vector<2x32xf32>
    %cst_56 = arith.constant 0.000000e+00 : f32
    %90 = vector.broadcast %cst_56 : f32 to vector<2x32xf32>
    %91 = arith.maximumf %89, %90 : vector<2x32xf32>
    %c12_57 = arith.constant 12 : index
    %c0_58 = arith.constant 0 : index
    %92 = vector.load %arg9[%c12_57, %c0_58] : memref<16x64xf32, #tpu.memory_space<vmem>>, vector<2x32xf32>
    tpu.vector_store %arg9[%c12_57, %c0_58], %87 {strides = array<i32>} : memref<16x64xf32, #tpu.memory_space<vmem>>, vector<2x32xf32>,
    %c2_59 = arith.constant 2 : index
    %c32_60 = arith.constant 32 : index
    %93 = vector.load %arg9[%c2_59, %c32_60] : memref<16x64xf32, #tpu.memory_space<vmem>>, vector<2x32xf32>
    tpu.vector_store %arg9[%c2_59, %c32_60], %91 {strides = array<i32>} : memref<16x64xf32, #tpu.memory_space<vmem>>, vector<2x32xf32>,
    %94 = vector.extract_strided_slice %5 {offsets = [14, 0], sizes = [2, 32], strides = [1, 1]} : vector<16x64xf32> to vector<2x32xf32>
    %95 = vector.extract_strided_slice %5 {offsets = [0, 32], sizes = [2, 32], strides = [1, 1]} : vector<16x64xf32> to vector<2x32xf32>
    %cst_61 = arith.constant dense<0.000000e+00> : vector<2x32xf32>
    %96 = tpu.matmul %87, %6, %cst_61 {dimension_numbers = #tpu.dot_dimension_numbers<[1], [0], [0], [1], [0, 0, 1, 1], [], []>} : vector<2x32xf32>, vector<32x32xf32>, vector<2x32xf32> -> vector<2x32xf32>
    %97 = arith.addf %94, %96 : vector<2x32xf32>
    %cst_62 = arith.constant 0.000000e+00 : f32
    %98 = vector.broadcast %cst_62 : f32 to vector<2x32xf32>
    %99 = arith.maximumf %97, %98 : vector<2x32xf32>
    %cst_63 = arith.constant dense<0.000000e+00> : vector<2x32xf32>
    %100 = tpu.matmul %91, %7, %cst_63 {dimension_numbers = #tpu.dot_dimension_numbers<[1], [0], [0], [1], [0, 0, 1, 1], [], []>} : vector<2x32xf32>, vector<32x32xf32>, vector<2x32xf32> -> vector<2x32xf32>
    %101 = arith.addf %95, %100 : vector<2x32xf32>
    %cst_64 = arith.constant 0.000000e+00 : f32
    %102 = vector.broadcast %cst_64 : f32 to vector<2x32xf32>
    %103 = arith.maximumf %101, %102 : vector<2x32xf32>
    %c14_65 = arith.constant 14 : index
    %c0_66 = arith.constant 0 : index
    %104 = vector.load %arg9[%c14_65, %c0_66] : memref<16x64xf32, #tpu.memory_space<vmem>>, vector<2x32xf32>
    tpu.vector_store %arg9[%c14_65, %c0_66], %99 {strides = array<i32>} : memref<16x64xf32, #tpu.memory_space<vmem>>, vector<2x32xf32>,
    %c0_67 = arith.constant 0 : index
    %c32_68 = arith.constant 32 : index
    %105 = vector.load %arg9[%c0_67, %c32_68] : memref<16x64xf32, #tpu.memory_space<vmem>>, vector<2x32xf32>
    tpu.vector_store %arg9[%c0_67, %c32_68], %103 {strides = array<i32>} : memref<16x64xf32, #tpu.memory_space<vmem>>, vector<2x32xf32>,
    %c0_69 = arith.constant 0 : index
    %c0_70 = arith.constant 0 : index
    %106 = vector.load %arg10[%c0_69, %c0_70] : memref<2x32xf32, #tpu.memory_space<vmem>>, vector<2x32xf32>
    tpu.vector_store %arg10[%c0_69, %c0_70], %99 {strides = array<i32>} : memref<2x32xf32, #tpu.memory_space<vmem>>, vector<2x32xf32>,
    %c0_71 = arith.constant 0 : index
    %c0_72 = arith.constant 0 : index
    %107 = vector.load %arg11[%c0_71, %c0_72] : memref<2x32xf32, #tpu.memory_space<vmem>>, vector<2x32xf32>
    tpu.vector_store %arg11[%c0_71, %c0_72], %103 {strides = array<i32>} : memref<2x32xf32, #tpu.memory_space<vmem>>, vector<2x32xf32>,
    return
  }
}

</mosaic_0001>

<llo_original>
// kernel: rnn_cell_forward.2
$region0: #{rnn_cell_forward.2}
  #allocation0 [shape = 'u32[]', space=smem, size = 0x4, offset = 0x4, fixed_abs, tag = 'smem constant byte address 0x4 - core index']
  #allocation1 [shape = 'u32[144,128]{1,0:T(1,128)}', space=vmem, size = 0x12000, scoped, tag = 'internal scratch']
  %s0 = inlined_call_operand.vmem [shape: f32[16,16], index: 0, kind: input, shape index: {}]
  %s1 = inlined_call_operand.vmem [shape: f32[1,16], index: 1, kind: input, shape index: {}]
  %s2 = inlined_call_operand.vmem [shape: f32[1,16], index: 2, kind: input, shape index: {}]
  %s3 = inlined_call_operand.vmem [shape: f32[16,64], index: 3, kind: input, shape index: {}]
  %s4 = inlined_call_operand.vmem [shape: f32[32,32], index: 4, kind: input, shape index: {}]
  %s5 = inlined_call_operand.vmem [shape: f32[32,32], index: 5, kind: input, shape index: {}]
  %s6 = inlined_call_operand.vmem [shape: f32[1,64], index: 6, kind: input, shape index: {}]
  %s7 = inlined_call_operand.vmem [shape: f32[2,32], index: 7, kind: input, shape index: {}]
  %s8 = inlined_call_operand.vmem [shape: f32[2,32], index: 8, kind: input, shape index: {}]
  %s9 = inlined_call_operand.vmem [shape: f32[16,64], index: 9, kind: output, shape index: {0}]
  %s10 = inlined_call_operand.vmem [shape: f32[2,32], index: 10, kind: output, shape index: {1}]
  %s11 = inlined_call_operand.vmem [shape: f32[2,32], index: 11, kind: output, shape index: {2}]
  %12 = xla_tuple %s9, %s10, %s11
  %s13 = sld [smem:[#allocation0]]
  $region62: #{rnn_cell_forward.2} parent=0
    _
  %s15 = ssub.s32 1, %s13
  %s16 = scalar_select 0, %s15, %s13
  // Predicated region
  $region2: #{rnn_cell_forward.2} parent=0 // pred_check
    _
  $region3: #{rnn_cell_forward.2} parent=0 // pred_check_branch
    %18 = sbr.rel (0) target = $region5
  $region4: #{rnn_cell_forward.2} parent=0 // pred_region
    _
  $region5: #{rnn_cell_forward.2} parent=0 // pred_fallthru
    _
  // Predicated region
  $region6: #{rnn_cell_forward.2} parent=0 // pred_check
    _
  $region7: #{rnn_cell_forward.2} parent=0 // pred_check_branch
    %20 = sbr.rel (0) target = $region9
  $region8: #{rnn_cell_forward.2} parent=0 // pred_region
    _
  $region9: #{rnn_cell_forward.2} parent=0 // pred_fallthru
    _
  // Predicated region
  $region10: #{rnn_cell_forward.2} parent=0 // pred_check
    _
  $region11: #{rnn_cell_forward.2} parent=0 // pred_check_branch
    %22 = sbr.rel (0) target = $region13
  $region12: #{rnn_cell_forward.2} parent=0 // pred_region
    _
  $region13: #{rnn_cell_forward.2} parent=0 // pred_fallthru
    _
  // Predicated region
  $region14: #{rnn_cell_forward.2} parent=0 // pred_check
    _
  $region15: #{rnn_cell_forward.2} parent=0 // pred_check_branch
    %24 = sbr.rel (0) target = $region17
  $region16: #{rnn_cell_forward.2} parent=0 // pred_region
    _
  $region17: #{rnn_cell_forward.2} parent=0 // pred_fallthru
    _
  // Predicated region
  $region18: #{rnn_cell_forward.2} parent=0 // pred_check
    _
  $region19: #{rnn_cell_forward.2} parent=0 // pred_check_branch
    %26 = sbr.rel (0) target = $region21
  $region20: #{rnn_cell_forward.2} parent=0 // pred_region
    _
  $region21: #{rnn_cell_forward.2} parent=0 // pred_fallthru
    _
  // Predicated region
  $region22: #{rnn_cell_forward.2} parent=0 // pred_check
    _
  $region23: #{rnn_cell_forward.2} parent=0 // pred_check_branch
    %28 = sbr.rel (0) target = $region25
  $region24: #{rnn_cell_forward.2} parent=0 // pred_region
    _
  $region25: #{rnn_cell_forward.2} parent=0 // pred_fallthru
    _
  // Predicated region
  $region26: #{rnn_cell_forward.2} parent=0 // pred_check
    _
  $region27: #{rnn_cell_forward.2} parent=0 // pred_check_branch
    %30 = sbr.rel (0) target = $region29
  $region28: #{rnn_cell_forward.2} parent=0 // pred_region
    _
  $region29: #{rnn_cell_forward.2} parent=0 // pred_fallthru
    _
  // Predicated region
  $region30: #{rnn_cell_forward.2} parent=0 // pred_check
    _
  $region31: #{rnn_cell_forward.2} parent=0 // pred_check_branch
    %32 = sbr.rel (0) target = $region33
  $region32: #{rnn_cell_forward.2} parent=0 // pred_region
    _
  $region33: #{rnn_cell_forward.2} parent=0 // pred_fallthru
    _
  // Predicated region
  $region34: #{rnn_cell_forward.2} parent=0 // pred_check
    _
  $region35: #{rnn_cell_forward.2} parent=0 // pred_check_branch
    %34 = sbr.rel (0) target = $region37
  $region36: #{rnn_cell_forward.2} parent=0 // pred_region
    _
  $region37: #{rnn_cell_forward.2} parent=0 // pred_fallthru
    _
  %v35 = vld [vmem:[%s0] sm:$0xff]
  %v36 = vld [vmem:[%s0 + $0x8] sm:$0xff]
  %vm37 = vcmask 130048
  %v38 = vsel %vm37, %v35, 0.0
  %39 = vadd.xlane.f32.xlu0 %v38
  %v40 = vpop.xlane.xlu0 %39
  %v41 = vsel %vm37, %v36, 0.0
  %42 = vadd.xlane.f32.xlu0 %v41
  %v43 = vpop.xlane.xlu0 %42
  %v44 = vrcp.pop 16.0
  %v45 = vmul.f32 %v40, %v44
  %v46 = vmul.f32 %v43, %v44
  %v47 = vsub.f32 %v35, %v45
  %v48 = vsub.f32 %v36, %v46
  %v49 = vmul.f32 %v47, %v47
  %v50 = vmul.f32 %v48, %v48
  %v51 = vsel %vm37, %v49, 0.0
  %52 = vadd.xlane.f32.xlu0 %v51
  %v53 = vpop.xlane.xlu0 %52
  %v54 = vsel %vm37, %v50, 0.0
  %55 = vadd.xlane.f32.xlu0 %v54
  %v56 = vpop.xlane.xlu0 %55
  %v57 = vmul.f32 %v53, %v44
  %v58 = vmul.f32 %v56, %v44
  %v59 = vadd.f32 %v57, 1e-05
  %v60 = vadd.f32 %v58, 1e-05
  %v61 = vrsqrt.pop %v59
  %v62 = vrsqrt.pop %v60
  %v63 = vmul.f32 %v47, %v61
  %v64 = vmul.f32 %v48, %v62
  %v65 = vld [vmem:[%s1] sm:$0x1]
  %v67 = vlaneseq
  %v68 = vshrl.u32 %v67, 7
  %v69 = vsub.s32 0, %v68
  %v70 = vrot.slane %v65, %v69
  %v72 = vmul.f32 %v63, %v70
  %v73 = vmul.f32 %v64, %v70
  %v74 = vld [vmem:[%s2] sm:$0x1]
  %v76 = vlaneseq
  %v77 = vshrl.u32 %v76, 7
  %v78 = vsub.s32 0, %v77
  %v79 = vrot.slane %v74, %v78
  %v81 = vadd.f32 %v72, %v79
  %v82 = vadd.f32 %v73, %v79
  %v83 = vld [vmem:[%s3] sm:$0xff]
  %v84 = vld [vmem:[%s3 + $0x8] sm:$0xff]
  %v85 = vld [vmem:[%s6] sm:$0x1]
  %v87 = vlaneseq
  %v88 = vshrl.u32 %v87, 7
  %v89 = vsub.s32 0, %v88
  %v90 = vrot.slane %v85, %v89
  %v93 = vsel %vm37, %v81, 0
  %v96 = vsel %vm37, %v82, 0
  %98 = vmatprep.subr.mxu0 0.0
  %99 = vmatpush1.msra.mxu0 0.0
  %100 = vmatprep.subr.mxu0 0.0
  %101 = vmatpush1.msra.mxu0 0.0
  %102 = vmatprep.subr.mxu0 0.0
  %103 = vmatpush1.msra.mxu0 0.0
  %104 = vmatprep.subr.mxu0 0.0
  %105 = vmatpush1.msra.mxu0 0.0
  %106 = vmatprep.subr.mxu0 0.0
  %107 = vmatpush1.msra.mxu0 0.0
  %108 = vmatprep.subr.mxu0 0.0
  %109 = vmatpush1.msra.mxu0 0.0
  %110 = vmatprep.subr.mxu0 0.0
  %111 = vmatpush1.msra.mxu0 0.0
  %112 = vmatprep.subr.mxu0 0.0
  %113 = vmatpush1.msra.mxu0 0.0
  %114 = vmatprep.subr.mxu0 0.0
  %115 = vmatpush1.msra.mxu0 0.0
  %116 = vmatprep.subr.mxu0 0.0
  %117 = vmatpush1.msra.mxu0 0.0
  %118 = vmatprep.subr.mxu0 0.0
  %119 = vmatpush1.msra.mxu0 0.0
  %120 = vmatprep.subr.mxu0 0.0
  %121 = vmatpush1.msra.mxu0 0.0
  %122 = vmatprep.subr.mxu0 0.0
  %123 = vmatpush1.msra.mxu0 0.0
  %124 = vmatprep.subr.mxu0 0.0
  %125 = vmatpush1.msra.mxu0 0.0
  %126 = vmatprep.subr.mxu0 0.0
  %127 = vmatpush1.msra.mxu0 %v84
  %128 = vmatprep.subr.mxu0 0.0
  %129 = vmatpush1.msra.mxu0 %v83
  %130 = vmatprep.subr.mxu0 0.0
  %131 = vmatpush2.msra.mxu0 0.0
  %132 = vmatprep.subr.mxu0 0.0
  %133 = vmatpush2.msra.mxu0 0.0
  %134 = vmatprep.subr.mxu0 0.0
  %135 = vmatpush2.msra.mxu0 0.0
  %136 = vmatprep.subr.mxu0 0.0
  %137 = vmatpush2.msra.mxu0 0.0
  %138 = vmatprep.subr.mxu0 0.0
  %139 = vmatpush2.msra.mxu0 0.0
  %140 = vmatprep.subr.mxu0 0.0
  %141 = vmatpush2.msra.mxu0 0.0
  %142 = vmatprep.subr.mxu0 0.0
  %143 = vmatpush2.msra.mxu0 0.0
  %144 = vmatprep.subr.mxu0 0.0
  %145 = vmatpush2.msra.mxu0 0.0
  %146 = vmatprep.subr.mxu0 0.0
  %147 = vmatpush2.msra.mxu0 0.0
  %148 = vmatprep.subr.mxu0 0.0
  %149 = vmatpush2.msra.mxu0 0.0
  %150 = vmatprep.subr.mxu0 0.0
  %151 = vmatpush2.msra.mxu0 0.0
  %152 = vmatprep.subr.mxu0 0.0
  %153 = vmatpush2.msra.mxu0 0.0
  %154 = vmatprep.subr.mxu0 0.0
  %155 = vmatpush2.msra.mxu0 0.0
  %156 = vmatprep.subr.mxu0 0.0
  %157 = vmatpush2.msra.mxu0 0.0
  %158 = vmatprep.subr.mxu0 0.0
  %159 = vmatpush2.msra.mxu0 0.0
  %160 = vmatprep.subr.mxu0 0.0
  %161 = vmatpush2.msra.mxu0 0.0
  %162 = vmatprep.mubr.f32.mxu0 0.0
  %163 = vmatmul.mubr.f32.gmra.mxu0 %v93
  %v164 = vpop.f32.mrf.mxu0
  %v165 = vadd.f32 %v90, %v164
  %v166 = vpop.f32.mrf.mxu0
  %167 = vmatprep.mubr.f32.mxu0 0.0
  %168 = vmatmul.mubr.f32.gmra.mxu0 %v96
  %v169 = vpop.f32.mrf.mxu0
  %v170 = vadd.f32 %v90, %v169
  %v171 = vpop.f32.mrf.mxu0
  %172 = vdwg.mxu0
  %v173 = vld [vmem:[%s4] sm:$0xff]
  %v174 = vld [vmem:[%s4 + $0x8] sm:$0xff]
  %v175 = vld [vmem:[%s4 + $0x10] sm:$0xff]
  %v176 = vld [vmem:[%s4 + $0x18] sm:$0xff]
  %v177 = vld [vmem:[%s5] sm:$0xff]
  %v178 = vld [vmem:[%s5 + $0x8] sm:$0xff]
  %v179 = vld [vmem:[%s5 + $0x10] sm:$0xff]
  %v180 = vld [vmem:[%s5 + $0x18] sm:$0xff]
  %v181 = vld [vmem:[%s7] sm:$0x3]
  %v182 = vld [vmem:[%s8] sm:$0x3]
  %vm183 = vcmask 261120
  %v185 = vsel %vm183, %v181, 0
  %187 = vmatprep.subr.mxu0 0.0
  %188 = vmatpush1.msra.mxu0 0.0
  %189 = vmatprep.subr.mxu0 0.0
  %190 = vmatpush1.msra.mxu0 0.0
  %191 = vmatprep.subr.mxu0 0.0
  %192 = vmatpush1.msra.mxu0 0.0
  %193 = vmatprep.subr.mxu0 0.0
  %194 = vmatpush1.msra.mxu0 0.0
  %195 = vmatprep.subr.mxu0 0.0
  %196 = vmatpush1.msra.mxu0 0.0
  %197 = vmatprep.subr.mxu0 0.0
  %198 = vmatpush1.msra.mxu0 0.0
  %199 = vmatprep.subr.mxu0 0.0
  %200 = vmatpush1.msra.mxu0 0.0
  %201 = vmatprep.subr.mxu0 0.0
  %202 = vmatpush1.msra.mxu0 0.0
  %203 = vmatprep.subr.mxu0 0.0
  %204 = vmatpush1.msra.mxu0 0.0
  %205 = vmatprep.subr.mxu0 0.0
  %206 = vmatpush1.msra.mxu0 0.0
  %207 = vmatprep.subr.mxu0 0.0
  %208 = vmatpush1.msra.mxu0 0.0
  %209 = vmatprep.subr.mxu0 0.0
  %210 = vmatpush1.msra.mxu0 0.0
  %211 = vmatprep.subr.mxu0 0.0
  %212 = vmatpush1.msra.mxu0 %v176
  %213 = vmatprep.subr.mxu0 0.0
  %214 = vmatpush1.msra.mxu0 %v175
  %215 = vmatprep.subr.mxu0 0.0
  %216 = vmatpush1.msra.mxu0 %v174
  %217 = vmatprep.subr.mxu0 0.0
  %218 = vmatpush1.msra.mxu0 %v173
  %219 = vmatprep.subr.mxu0 0.0
  %220 = vmatpush2.msra.mxu0 0.0
  %221 = vmatprep.subr.mxu0 0.0
  %222 = vmatpush2.msra.mxu0 0.0
  %223 = vmatprep.subr.mxu0 0.0
  %224 = vmatpush2.msra.mxu0 0.0
  %225 = vmatprep.subr.mxu0 0.0
  %226 = vmatpush2.msra.mxu0 0.0
  %227 = vmatprep.subr.mxu0 0.0
  %228 = vmatpush2.msra.mxu0 0.0
  %229 = vmatprep.subr.mxu0 0.0
  %230 = vmatpush2.msra.mxu0 0.0
  %231 = vmatprep.subr.mxu0 0.0
  %232 = vmatpush2.msra.mxu0 0.0
  %233 = vmatprep.subr.mxu0 0.0
  %234 = vmatpush2.msra.mxu0 0.0
  %235 = vmatprep.subr.mxu0 0.0
  %236 = vmatpush2.msra.mxu0 0.0
  %237 = vmatprep.subr.mxu0 0.0
  %238 = vmatpush2.msra.mxu0 0.0
  %239 = vmatprep.subr.mxu0 0.0
  %240 = vmatpush2.msra.mxu0 0.0
  %241 = vmatprep.subr.mxu0 0.0
  %242 = vmatpush2.msra.mxu0 0.0
  %243 = vmatprep.subr.mxu0 0.0
  %244 = vmatpush2.msra.mxu0 0.0
  %245 = vmatprep.subr.mxu0 0.0
  %246 = vmatpush2.msra.mxu0 0.0
  %247 = vmatprep.subr.mxu0 0.0
  %248 = vmatpush2.msra.mxu0 0.0
  %249 = vmatprep.subr.mxu0 0.0
  %250 = vmatpush2.msra.mxu0 0.0
  %251 = vmatprep.mubr.f32.mxu0 0.0
  %252 = vmatmul.mubr.f32.gmra.mxu0 %v185
  %v253 = vpop.f32.mrf.mxu0
  %v254 = vadd.f32 0.0, %v253
  %v255 = vpop.f32.mrf.mxu0
  %256 = vdwg.mxu0
  %v257 = vadd.f32 %v165, %v254
  %v258 = vmax.f32 %v257, 0.0
  %v260 = vsel %vm183, %v182, 0
  %262 = vmatprep.subr.mxu0 0.0
  %263 = vmatpush1.msra.mxu0 0.0
  %264 = vmatprep.subr.mxu0 0.0
  %265 = vmatpush1.msra.mxu0 0.0
  %266 = vmatprep.subr.mxu0 0.0
  %267 = vmatpush1.msra.mxu0 0.0
  %268 = vmatprep.subr.mxu0 0.0
  %269 = vmatpush1.msra.mxu0 0.0
  %270 = vmatprep.subr.mxu0 0.0
  %271 = vmatpush1.msra.mxu0 0.0
  %272 = vmatprep.subr.mxu0 0.0
  %273 = vmatpush1.msra.mxu0 0.0
  %274 = vmatprep.subr.mxu0 0.0
  %275 = vmatpush1.msra.mxu0 0.0
  %276 = vmatprep.subr.mxu0 0.0
  %277 = vmatpush1.msra.mxu0 0.0
  %278 = vmatprep.subr.mxu0 0.0
  %279 = vmatpush1.msra.mxu0 0.0
  %280 = vmatprep.subr.mxu0 0.0
  %281 = vmatpush1.msra.mxu0 0.0
  %282 = vmatprep.subr.mxu0 0.0
  %283 = vmatpush1.msra.mxu0 0.0
  %284 = vmatprep.subr.mxu0 0.0
  %285 = vmatpush1.msra.mxu0 0.0
  %286 = vmatprep.subr.mxu0 0.0
  %287 = vmatpush1.msra.mxu0 %v180
  %288 = vmatprep.subr.mxu0 0.0
  %289 = vmatpush1.msra.mxu0 %v179
  %290 = vmatprep.subr.mxu0 0.0
  %291 = vmatpush1.msra.mxu0 %v178
  %292 = vmatprep.subr.mxu0 0.0
  %293 = vmatpush1.msra.mxu0 %v177
  %294 = vmatprep.subr.mxu0 0.0
  %295 = vmatpush2.msra.mxu0 0.0
  %296 = vmatprep.subr.mxu0 0.0
  %297 = vmatpush2.msra.mxu0 0.0
  %298 = vmatprep.subr.mxu0 0.0
  %299 = vmatpush2.msra.mxu0 0.0
  %300 = vmatprep.subr.mxu0 0.0
  %301 = vmatpush2.msra.mxu0 0.0
  %302 = vmatprep.subr.mxu0 0.0
  %303 = vmatpush2.msra.mxu0 0.0
  %304 = vmatprep.subr.mxu0 0.0
  %305 = vmatpush2.msra.mxu0 0.0
  %306 = vmatprep.subr.mxu0 0.0
  %307 = vmatpush2.msra.mxu0 0.0
  %308 = vmatprep.subr.mxu0 0.0
  %309 = vmatpush2.msra.mxu0 0.0
  %310 = vmatprep.subr.mxu0 0.0
  %311 = vmatpush2.msra.mxu0 0.0
  %312 = vmatprep.subr.mxu0 0.0
  %313 = vmatpush2.msra.mxu0 0.0
  %314 = vmatprep.subr.mxu0 0.0
  %315 = vmatpush2.msra.mxu0 0.0
  %316 = vmatprep.subr.mxu0 0.0
  %317 = vmatpush2.msra.mxu0 0.0
  %318 = vmatprep.subr.mxu0 0.0
  %319 = vmatpush2.msra.mxu0 0.0
  %320 = vmatprep.subr.mxu0 0.0
  %321 = vmatpush2.msra.mxu0 0.0
  %322 = vmatprep.subr.mxu0 0.0
  %323 = vmatpush2.msra.mxu0 0.0
  %324 = vmatprep.subr.mxu0 0.0
  %325 = vmatpush2.msra.mxu0 0.0
  %326 = vmatprep.mubr.f32.mxu0 0.0
  %327 = vmatmul.mubr.f32.gmra.mxu0 %v260
  %v328 = vpop.f32.mrf.mxu0
  %v329 = vadd.f32 0.0, %v328
  %v330 = vpop.f32.mrf.mxu0
  %331 = vdwg.mxu0
  %v333 = vrot.slane %v329, 2
  %334 = vrot.lane.b32.xlu0 %v333, 32
  %v335 = vpop.permute.xlu0 %334
  %v337 = vadd.f32 %v170, %v335
  %v338 = vmax.f32 %v337, 0.0
  %vm339 = vcmask 254976
  %340 = vst.msk [vmem:[%s9] sm:$0x3] %vm339, %v258
  %vm341 = vcmask 523526
  %342 = vst.msk [vmem:[%s9 + $0x8] sm:$0xc0] %vm341, %v338
  %v344 = vsel %vm183, %v258, 0
  %346 = vmatprep.subr.mxu0 0.0
  %347 = vmatpush1.msra.mxu0 0.0
  %348 = vmatprep.subr.mxu0 0.0
  %349 = vmatpush1.msra.mxu0 0.0
  %350 = vmatprep.subr.mxu0 0.0
  %351 = vmatpush1.msra.mxu0 0.0
  %352 = vmatprep.subr.mxu0 0.0
  %353 = vmatpush1.msra.mxu0 0.0
  %354 = vmatprep.subr.mxu0 0.0
  %355 = vmatpush1.msra.mxu0 0.0
  %356 = vmatprep.subr.mxu0 0.0
  %357 = vmatpush1.msra.mxu0 0.0
  %358 = vmatprep.subr.mxu0 0.0
  %359 = vmatpush1.msra.mxu0 0.0
  %360 = vmatprep.subr.mxu0 0.0
  %361 = vmatpush1.msra.mxu0 0.0
  %362 = vmatprep.subr.mxu0 0.0
  %363 = vmatpush1.msra.mxu0 0.0
  %364 = vmatprep.subr.mxu0 0.0
  %365 = vmatpush1.msra.mxu0 0.0
  %366 = vmatprep.subr.mxu0 0.0
  %367 = vmatpush1.msra.mxu0 0.0
  %368 = vmatprep.subr.mxu0 0.0
  %369 = vmatpush1.msra.mxu0 0.0
  %370 = vmatprep.subr.mxu0 0.0
  %371 = vmatpush1.msra.mxu0 %v176
  %372 = vmatprep.subr.mxu0 0.0
  %373 = vmatpush1.msra.mxu0 %v175
  %374 = vmatprep.subr.mxu0 0.0
  %375 = vmatpush1.msra.mxu0 %v174
  %376 = vmatprep.subr.mxu0 0.0
  %377 = vmatpush1.msra.mxu0 %v173
  %378 = vmatprep.subr.mxu0 0.0
  %379 = vmatpush2.msra.mxu0 0.0
  %380 = vmatprep.subr.mxu0 0.0
  %381 = vmatpush2.msra.mxu0 0.0
  %382 = vmatprep.subr.mxu0 0.0
  %383 = vmatpush2.msra.mxu0 0.0
  %384 = vmatprep.subr.mxu0 0.0
  %385 = vmatpush2.msra.mxu0 0.0
  %386 = vmatprep.subr.mxu0 0.0
  %387 = vmatpush2.msra.mxu0 0.0
  %388 = vmatprep.subr.mxu0 0.0
  %389 = vmatpush2.msra.mxu0 0.0
  %390 = vmatprep.subr.mxu0 0.0
  %391 = vmatpush2.msra.mxu0 0.0
  %392 = vmatprep.subr.mxu0 0.0
  %393 = vmatpush2.msra.mxu0 0.0
  %394 = vmatprep.subr.mxu0 0.0
  %395 = vmatpush2.msra.mxu0 0.0
  %396 = vmatprep.subr.mxu0 0.0
  %397 = vmatpush2.msra.mxu0 0.0
  %398 = vmatprep.subr.mxu0 0.0
  %399 = vmatpush2.msra.mxu0 0.0
  %400 = vmatprep.subr.mxu0 0.0
  %401 = vmatpush2.msra.mxu0 0.0
  %402 = vmatprep.subr.mxu0 0.0
  %403 = vmatpush2.msra.mxu0 0.0
  %404 = vmatprep.subr.mxu0 0.0
  %405 = vmatpush2.msra.mxu0 0.0
  %406 = vmatprep.subr.mxu0 0.0
  %407 = vmatpush2.msra.mxu0 0.0
  %408 = vmatprep.subr.mxu0 0.0
  %409 = vmatpush2.msra.mxu0 0.0
  %410 = vmatprep.mubr.f32.mxu0 0.0
  %411 = vmatmul.mubr.f32.gmra.mxu0 %v344
  %v412 = vpop.f32.mrf.mxu0
  %v413 = vadd.f32 0.0, %v412
  %v414 = vpop.f32.mrf.mxu0
  %415 = vdwg.mxu0
  %v417 = vrot.slane %v413, 6
  %v419 = vadd.f32 %v165, %v417
  %v420 = vmax.f32 %v419, 0.0
  %v422 = vrot.slane %v338, 6
  %423 = vrot.lane.b32.xlu0 %v422, 96
  %v424 = vpop.permute.xlu0 %423
  %v425 = vsel %vm183, %v424, 0
  %427 = vmatprep.subr.mxu0 0.0
  %428 = vmatpush1.msra.mxu0 0.0
  %429 = vmatprep.subr.mxu0 0.0
  %430 = vmatpush1.msra.mxu0 0.0
  %431 = vmatprep.subr.mxu0 0.0
  %432 = vmatpush1.msra.mxu0 0.0
  %433 = vmatprep.subr.mxu0 0.0
  %434 = vmatpush1.msra.mxu0 0.0
  %435 = vmatprep.subr.mxu0 0.0
  %436 = vmatpush1.msra.mxu0 0.0
  %437 = vmatprep.subr.mxu0 0.0
  %438 = vmatpush1.msra.mxu0 0.0
  %439 = vmatprep.subr.mxu0 0.0
  %440 = vmatpush1.msra.mxu0 0.0
  %441 = vmatprep.subr.mxu0 0.0
  %442 = vmatpush1.msra.mxu0 0.0
  %443 = vmatprep.subr.mxu0 0.0
  %444 = vmatpush1.msra.mxu0 0.0
  %445 = vmatprep.subr.mxu0 0.0
  %446 = vmatpush1.msra.mxu0 0.0
  %447 = vmatprep.subr.mxu0 0.0
  %448 = vmatpush1.msra.mxu0 0.0
  %449 = vmatprep.subr.mxu0 0.0
  %450 = vmatpush1.msra.mxu0 0.0
  %451 = vmatprep.subr.mxu0 0.0
  %452 = vmatpush1.msra.mxu0 %v180
  %453 = vmatprep.subr.mxu0 0.0
  %454 = vmatpush1.msra.mxu0 %v179
  %455 = vmatprep.subr.mxu0 0.0
  %456 = vmatpush1.msra.mxu0 %v178
  %457 = vmatprep.subr.mxu0 0.0
  %458 = vmatpush1.msra.mxu0 %v177
  %459 = vmatprep.subr.mxu0 0.0
  %460 = vmatpush2.msra.mxu0 0.0
  %461 = vmatprep.subr.mxu0 0.0
  %462 = vmatpush2.msra.mxu0 0.0
  %463 = vmatprep.subr.mxu0 0.0
  %464 = vmatpush2.msra.mxu0 0.0
  %465 = vmatprep.subr.mxu0 0.0
  %466 = vmatpush2.msra.mxu0 0.0
  %467 = vmatprep.subr.mxu0 0.0
  %468 = vmatpush2.msra.mxu0 0.0
  %469 = vmatprep.subr.mxu0 0.0
  %470 = vmatpush2.msra.mxu0 0.0
  %471 = vmatprep.subr.mxu0 0.0
  %472 = vmatpush2.msra.mxu0 0.0
  %473 = vmatprep.subr.mxu0 0.0
  %474 = vmatpush2.msra.mxu0 0.0
  %475 = vmatprep.subr.mxu0 0.0
  %476 = vmatpush2.msra.mxu0 0.0
  %477 = vmatprep.subr.mxu0 0.0
  %478 = vmatpush2.msra.mxu0 0.0
  %479 = vmatprep.subr.mxu0 0.0
  %480 = vmatpush2.msra.mxu0 0.0
  %481 = vmatprep.subr.mxu0 0.0
  %482 = vmatpush2.msra.mxu0 0.0
  %483 = vmatprep.subr.mxu0 0.0
  %484 = vmatpush2.msra.mxu0 0.0
  %485 = vmatprep.subr.mxu0 0.0
  %486 = vmatpush2.msra.mxu0 0.0
  %487 = vmatprep.subr.mxu0 0.0
  %488 = vmatpush2.msra.mxu0 0.0
  %489 = vmatprep.subr.mxu0 0.0
  %490 = vmatpush2.msra.mxu0 0.0
  %491 = vmatprep.mubr.f32.mxu0 0.0
  %492 = vmatmul.mubr.f32.gmra.mxu0 %v425
  %v493 = vpop.f32.mrf.mxu0
  %v494 = vadd.f32 0.0, %v493
  %v495 = vpop.f32.mrf.mxu0
  %496 = vdwg.mxu0
  %v498 = vrot.slane %v494, 4
  %499 = vrot.lane.b32.xlu0 %v498, 32
  %v500 = vpop.permute.xlu0 %499
  %v502 = vadd.f32 %v170, %v500
  %v503 = vmax.f32 %v502, 0.0
  %vm504 = vcmask 257026
  %505 = vst.msk [vmem:[%s9] sm:$0xc] %vm504, %v420
  %vm506 = vcmask 521476
  %507 = vst.msk [vmem:[%s9 + $0x8] sm:$0x30] %vm506, %v503
  %v509 = vrot.slane %v420, 2
  %v510 = vsel %vm183, %v509, 0
  %512 = vmatprep.subr.mxu0 0.0
  %513 = vmatpush1.msra.mxu0 0.0
  %514 = vmatprep.subr.mxu0 0.0
  %515 = vmatpush1.msra.mxu0 0.0
  %516 = vmatprep.subr.mxu0 0.0
  %517 = vmatpush1.msra.mxu0 0.0
  %518 = vmatprep.subr.mxu0 0.0
  %519 = vmatpush1.msra.mxu0 0.0
  %520 = vmatprep.subr.mxu0 0.0
  %521 = vmatpush1.msra.mxu0 0.0
  %522 = vmatprep.subr.mxu0 0.0
  %523 = vmatpush1.msra.mxu0 0.0
  %524 = vmatprep.subr.mxu0 0.0
  %525 = vmatpush1.msra.mxu0 0.0
  %526 = vmatprep.subr.mxu0 0.0
  %527 = vmatpush1.msra.mxu0 0.0
  %528 = vmatprep.subr.mxu0 0.0
  %529 = vmatpush1.msra.mxu0 0.0
  %530 = vmatprep.subr.mxu0 0.0
  %531 = vmatpush1.msra.mxu0 0.0
  %532 = vmatprep.subr.mxu0 0.0
  %533 = vmatpush1.msra.mxu0 0.0
  %534 = vmatprep.subr.mxu0 0.0
  %535 = vmatpush1.msra.mxu0 0.0
  %536 = vmatprep.subr.mxu0 0.0
  %537 = vmatpush1.msra.mxu0 %v176
  %538 = vmatprep.subr.mxu0 0.0
  %539 = vmatpush1.msra.mxu0 %v175
  %540 = vmatprep.subr.mxu0 0.0
  %541 = vmatpush1.msra.mxu0 %v174
  %542 = vmatprep.subr.mxu0 0.0
  %543 = vmatpush1.msra.mxu0 %v173
  %544 = vmatprep.subr.mxu0 0.0
  %545 = vmatpush2.msra.mxu0 0.0
  %546 = vmatprep.subr.mxu0 0.0
  %547 = vmatpush2.msra.mxu0 0.0
  %548 = vmatprep.subr.mxu0 0.0
  %549 = vmatpush2.msra.mxu0 0.0
  %550 = vmatprep.subr.mxu0 0.0
  %551 = vmatpush2.msra.mxu0 0.0
  %552 = vmatprep.subr.mxu0 0.0
  %553 = vmatpush2.msra.mxu0 0.0
  %554 = vmatprep.subr.mxu0 0.0
  %555 = vmatpush2.msra.mxu0 0.0
  %556 = vmatprep.subr.mxu0 0.0
  %557 = vmatpush2.msra.mxu0 0.0
  %558 = vmatprep.subr.mxu0 0.0
  %559 = vmatpush2.msra.mxu0 0.0
  %560 = vmatprep.subr.mxu0 0.0
  %561 = vmatpush2.msra.mxu0 0.0
  %562 = vmatprep.subr.mxu0 0.0
  %563 = vmatpush2.msra.mxu0 0.0
  %564 = vmatprep.subr.mxu0 0.0
  %565 = vmatpush2.msra.mxu0 0.0
  %566 = vmatprep.subr.mxu0 0.0
  %567 = vmatpush2.msra.mxu0 0.0
  %568 = vmatprep.subr.mxu0 0.0
  %569 = vmatpush2.msra.mxu0 0.0
  %570 = vmatprep.subr.mxu0 0.0
  %571 = vmatpush2.msra.mxu0 0.0
  %572 = vmatprep.subr.mxu0 0.0
  %573 = vmatpush2.msra.mxu0 0.0
  %574 = vmatprep.subr.mxu0 0.0
  %575 = vmatpush2.msra.mxu0 0.0
  %576 = vmatprep.mubr.f32.mxu0 0.0
  %577 = vmatmul.mubr.f32.gmra.mxu0 %v510
  %v578 = vpop.f32.mrf.mxu0
  %v579 = vadd.f32 0.0, %v578
  %v580 = vpop.f32.mrf.mxu0
  %581 = vdwg.mxu0
  %v583 = vrot.slane %v579, 4
  %v585 = vadd.f32 %v165, %v583
  %v586 = vmax.f32 %v585, 0.0
  %v588 = vrot.slane %v503, 4
  %589 = vrot.lane.b32.xlu0 %v588, 96
  %v590 = vpop.permute.xlu0 %589
  %v591 = vsel %vm183, %v590, 0
  %593 = vmatprep.subr.mxu0 0.0
  %594 = vmatpush1.msra.mxu0 0.0
  %595 = vmatprep.subr.mxu0 0.0
  %596 = vmatpush1.msra.mxu0 0.0
  %597 = vmatprep.subr.mxu0 0.0
  %598 = vmatpush1.msra.mxu0 0.0
  %599 = vmatprep.subr.mxu0 0.0
  %600 = vmatpush1.msra.mxu0 0.0
  %601 = vmatprep.subr.mxu0 0.0
  %602 = vmatpush1.msra.mxu0 0.0
  %603 = vmatprep.subr.mxu0 0.0
  %604 = vmatpush1.msra.mxu0 0.0
  %605 = vmatprep.subr.mxu0 0.0
  %606 = vmatpush1.msra.mxu0 0.0
  %607 = vmatprep.subr.mxu0 0.0
  %608 = vmatpush1.msra.mxu0 0.0
  %609 = vmatprep.subr.mxu0 0.0
  %610 = vmatpush1.msra.mxu0 0.0
  %611 = vmatprep.subr.mxu0 0.0
  %612 = vmatpush1.msra.mxu0 0.0
  %613 = vmatprep.subr.mxu0 0.0
  %614 = vmatpush1.msra.mxu0 0.0
  %615 = vmatprep.subr.mxu0 0.0
  %616 = vmatpush1.msra.mxu0 0.0
  %617 = vmatprep.subr.mxu0 0.0
  %618 = vmatpush1.msra.mxu0 %v180
  %619 = vmatprep.subr.mxu0 0.0
  %620 = vmatpush1.msra.mxu0 %v179
  %621 = vmatprep.subr.mxu0 0.0
  %622 = vmatpush1.msra.mxu0 %v178
  %623 = vmatprep.subr.mxu0 0.0
  %624 = vmatpush1.msra.mxu0 %v177
  %625 = vmatprep.subr.mxu0 0.0
  %626 = vmatpush2.msra.mxu0 0.0
  %627 = vmatprep.subr.mxu0 0.0
  %628 = vmatpush2.msra.mxu0 0.0
  %629 = vmatprep.subr.mxu0 0.0
  %630 = vmatpush2.msra.mxu0 0.0
  %631 = vmatprep.subr.mxu0 0.0
  %632 = vmatpush2.msra.mxu0 0.0
  %633 = vmatprep.subr.mxu0 0.0
  %634 = vmatpush2.msra.mxu0 0.0
  %635 = vmatprep.subr.mxu0 0.0
  %636 = vmatpush2.msra.mxu0 0.0
  %637 = vmatprep.subr.mxu0 0.0
  %638 = vmatpush2.msra.mxu0 0.0
  %639 = vmatprep.subr.mxu0 0.0
  %640 = vmatpush2.msra.mxu0 0.0
  %641 = vmatprep.subr.mxu0 0.0
  %642 = vmatpush2.msra.mxu0 0.0
  %643 = vmatprep.subr.mxu0 0.0
  %644 = vmatpush2.msra.mxu0 0.0
  %645 = vmatprep.subr.mxu0 0.0
  %646 = vmatpush2.msra.mxu0 0.0
  %647 = vmatprep.subr.mxu0 0.0
  %648 = vmatpush2.msra.mxu0 0.0
  %649 = vmatprep.subr.mxu0 0.0
  %650 = vmatpush2.msra.mxu0 0.0
  %651 = vmatprep.subr.mxu0 0.0
  %652 = vmatpush2.msra.mxu0 0.0
  %653 = vmatprep.subr.mxu0 0.0
  %654 = vmatpush2.msra.mxu0 0.0
  %655 = vmatprep.subr.mxu0 0.0
  %656 = vmatpush2.msra.mxu0 0.0
  %657 = vmatprep.mubr.f32.mxu0 0.0
  %658 = vmatmul.mubr.f32.gmra.mxu0 %v591
  %v659 = vpop.f32.mrf.mxu0
  %v660 = vadd.f32 0.0, %v659
  %v661 = vpop.f32.mrf.mxu0
  %662 = vdwg.mxu0
  %v664 = vrot.slane %v660, 6
  %665 = vrot.lane.b32.xlu0 %v664, 32
  %v666 = vpop.permute.xlu0 %665
  %v668 = vadd.f32 %v170, %v666
  %v669 = vmax.f32 %v668, 0.0
  %vm670 = vcmask 259076
  %671 = vst.msk [vmem:[%s9] sm:$0x30] %vm670, %v586
  %vm672 = vcmask 519426
  %673 = vst.msk [vmem:[%s9 + $0x8] sm:$0xc] %vm672, %v669
  %v675 = vrot.slane %v586, 4
  %v676 = vsel %vm183, %v675, 0
  %678 = vmatprep.subr.mxu0 0.0
  %679 = vmatpush1.msra.mxu0 0.0
  %680 = vmatprep.subr.mxu0 0.0
  %681 = vmatpush1.msra.mxu0 0.0
  %682 = vmatprep.subr.mxu0 0.0
  %683 = vmatpush1.msra.mxu0 0.0
  %684 = vmatprep.subr.mxu0 0.0
  %685 = vmatpush1.msra.mxu0 0.0
  %686 = vmatprep.subr.mxu0 0.0
  %687 = vmatpush1.msra.mxu0 0.0
  %688 = vmatprep.subr.mxu0 0.0
  %689 = vmatpush1.msra.mxu0 0.0
  %690 = vmatprep.subr.mxu0 0.0
  %691 = vmatpush1.msra.mxu0 0.0
  %692 = vmatprep.subr.mxu0 0.0
  %693 = vmatpush1.msra.mxu0 0.0
  %694 = vmatprep.subr.mxu0 0.0
  %695 = vmatpush1.msra.mxu0 0.0
  %696 = vmatprep.subr.mxu0 0.0
  %697 = vmatpush1.msra.mxu0 0.0
  %698 = vmatprep.subr.mxu0 0.0
  %699 = vmatpush1.msra.mxu0 0.0
  %700 = vmatprep.subr.mxu0 0.0
  %701 = vmatpush1.msra.mxu0 0.0
  %702 = vmatprep.subr.mxu0 0.0
  %703 = vmatpush1.msra.mxu0 %v176
  %704 = vmatprep.subr.mxu0 0.0
  %705 = vmatpush1.msra.mxu0 %v175
  %706 = vmatprep.subr.mxu0 0.0
  %707 = vmatpush1.msra.mxu0 %v174
  %708 = vmatprep.subr.mxu0 0.0
  %709 = vmatpush1.msra.mxu0 %v173
  %710 = vmatprep.subr.mxu0 0.0
  %711 = vmatpush2.msra.mxu0 0.0
  %712 = vmatprep.subr.mxu0 0.0
  %713 = vmatpush2.msra.mxu0 0.0
  %714 = vmatprep.subr.mxu0 0.0
  %715 = vmatpush2.msra.mxu0 0.0
  %716 = vmatprep.subr.mxu0 0.0
  %717 = vmatpush2.msra.mxu0 0.0
  %718 = vmatprep.subr.mxu0 0.0
  %719 = vmatpush2.msra.mxu0 0.0
  %720 = vmatprep.subr.mxu0 0.0
  %721 = vmatpush2.msra.mxu0 0.0
  %722 = vmatprep.subr.mxu0 0.0
  %723 = vmatpush2.msra.mxu0 0.0
  %724 = vmatprep.subr.mxu0 0.0
  %725 = vmatpush2.msra.mxu0 0.0
  %726 = vmatprep.subr.mxu0 0.0
  %727 = vmatpush2.msra.mxu0 0.0
  %728 = vmatprep.subr.mxu0 0.0
  %729 = vmatpush2.msra.mxu0 0.0
  %730 = vmatprep.subr.mxu0 0.0
  %731 = vmatpush2.msra.mxu0 0.0
  %732 = vmatprep.subr.mxu0 0.0
  %733 = vmatpush2.msra.mxu0 0.0
  %734 = vmatprep.subr.mxu0 0.0
  %735 = vmatpush2.msra.mxu0 0.0
  %736 = vmatprep.subr.mxu0 0.0
  %737 = vmatpush2.msra.mxu0 0.0
  %738 = vmatprep.subr.mxu0 0.0
  %739 = vmatpush2.msra.mxu0 0.0
  %740 = vmatprep.subr.mxu0 0.0
  %741 = vmatpush2.msra.mxu0 0.0
  %742 = vmatprep.mubr.f32.mxu0 0.0
  %743 = vmatmul.mubr.f32.gmra.mxu0 %v676
  %v744 = vpop.f32.mrf.mxu0
  %v745 = vadd.f32 0.0, %v744
  %v746 = vpop.f32.mrf.mxu0
  %747 = vdwg.mxu0
  %v749 = vrot.slane %v745, 2
  %v751 = vadd.f32 %v165, %v749
  %v752 = vmax.f32 %v751, 0.0
  %v754 = vrot.slane %v669, 2
  %755 = vrot.lane.b32.xlu0 %v754, 96
  %v756 = vpop.permute.xlu0 %755
  %v757 = vsel %vm183, %v756, 0
  %759 = vmatprep.subr.mxu0 0.0
  %760 = vmatpush1.msra.mxu0 0.0
  %761 = vmatprep.subr.mxu0 0.0
  %762 = vmatpush1.msra.mxu0 0.0
  %763 = vmatprep.subr.mxu0 0.0
  %764 = vmatpush1.msra.mxu0 0.0
  %765 = vmatprep.subr.mxu0 0.0
  %766 = vmatpush1.msra.mxu0 0.0
  %767 = vmatprep.subr.mxu0 0.0
  %768 = vmatpush1.msra.mxu0 0.0
  %769 = vmatprep.subr.mxu0 0.0
  %770 = vmatpush1.msra.mxu0 0.0
  %771 = vmatprep.subr.mxu0 0.0
  %772 = vmatpush1.msra.mxu0 0.0
  %773 = vmatprep.subr.mxu0 0.0
  %774 = vmatpush1.msra.mxu0 0.0
  %775 = vmatprep.subr.mxu0 0.0
  %776 = vmatpush1.msra.mxu0 0.0
  %777 = vmatprep.subr.mxu0 0.0
  %778 = vmatpush1.msra.mxu0 0.0
  %779 = vmatprep.subr.mxu0 0.0
  %780 = vmatpush1.msra.mxu0 0.0
  %781 = vmatprep.subr.mxu0 0.0
  %782 = vmatpush1.msra.mxu0 0.0
  %783 = vmatprep.subr.mxu0 0.0
  %784 = vmatpush1.msra.mxu0 %v180
  %785 = vmatprep.subr.mxu0 0.0
  %786 = vmatpush1.msra.mxu0 %v179
  %787 = vmatprep.subr.mxu0 0.0
  %788 = vmatpush1.msra.mxu0 %v178
  %789 = vmatprep.subr.mxu0 0.0
  %790 = vmatpush1.msra.mxu0 %v177
  %791 = vmatprep.subr.mxu0 0.0
  %792 = vmatpush2.msra.mxu0 0.0
  %793 = vmatprep.subr.mxu0 0.0
  %794 = vmatpush2.msra.mxu0 0.0
  %795 = vmatprep.subr.mxu0 0.0
  %796 = vmatpush2.msra.mxu0 0.0
  %797 = vmatprep.subr.mxu0 0.0
  %798 = vmatpush2.msra.mxu0 0.0
  %799 = vmatprep.subr.mxu0 0.0
  %800 = vmatpush2.msra.mxu0 0.0
  %801 = vmatprep.subr.mxu0 0.0
  %802 = vmatpush2.msra.mxu0 0.0
  %803 = vmatprep.subr.mxu0 0.0
  %804 = vmatpush2.msra.mxu0 0.0
  %805 = vmatprep.subr.mxu0 0.0
  %806 = vmatpush2.msra.mxu0 0.0
  %807 = vmatprep.subr.mxu0 0.0
  %808 = vmatpush2.msra.mxu0 0.0
  %809 = vmatprep.subr.mxu0 0.0
  %810 = vmatpush2.msra.mxu0 0.0
  %811 = vmatprep.subr.mxu0 0.0
  %812 = vmatpush2.msra.mxu0 0.0
  %813 = vmatprep.subr.mxu0 0.0
  %814 = vmatpush2.msra.mxu0 0.0
  %815 = vmatprep.subr.mxu0 0.0
  %816 = vmatpush2.msra.mxu0 0.0
  %817 = vmatprep.subr.mxu0 0.0
  %818 = vmatpush2.msra.mxu0 0.0
  %819 = vmatprep.subr.mxu0 0.0
  %820 = vmatpush2.msra.mxu0 0.0
  %821 = vmatprep.subr.mxu0 0.0
  %822 = vmatpush2.msra.mxu0 0.0
  %823 = vmatprep.mubr.f32.mxu0 0.0
  %824 = vmatmul.mubr.f32.gmra.mxu0 %v757
  %v825 = vpop.f32.mrf.mxu0
  %v826 = vadd.f32 0.0, %v825
  %v827 = vpop.f32.mrf.mxu0
  %828 = vdwg.mxu0
  %830 = vrot.lane.b32.xlu0 %v826, 32
  %v831 = vpop.permute.xlu0 %830
  %v833 = vadd.f32 %v170, %v831
  %v834 = vmax.f32 %v833, 0.0
  %vm835 = vcmask 261126
  %836 = vst.msk [vmem:[%s9] sm:$0xc0] %vm835, %v752
  %vm837 = vcmask 517376
  %838 = vst.msk [vmem:[%s9 + $0x8] sm:$0x3] %vm837, %v834
  %v840 = vrot.slane %v752, 6
  %v841 = vsel %vm183, %v840, 0
  %843 = vmatprep.subr.mxu0 0.0
  %844 = vmatpush1.msra.mxu0 0.0
  %845 = vmatprep.subr.mxu0 0.0
  %846 = vmatpush1.msra.mxu0 0.0
  %847 = vmatprep.subr.mxu0 0.0
  %848 = vmatpush1.msra.mxu0 0.0
  %849 = vmatprep.subr.mxu0 0.0
  %850 = vmatpush1.msra.mxu0 0.0
  %851 = vmatprep.subr.mxu0 0.0
  %852 = vmatpush1.msra.mxu0 0.0
  %853 = vmatprep.subr.mxu0 0.0
  %854 = vmatpush1.msra.mxu0 0.0
  %855 = vmatprep.subr.mxu0 0.0
  %856 = vmatpush1.msra.mxu0 0.0
  %857 = vmatprep.subr.mxu0 0.0
  %858 = vmatpush1.msra.mxu0 0.0
  %859 = vmatprep.subr.mxu0 0.0
  %860 = vmatpush1.msra.mxu0 0.0
  %861 = vmatprep.subr.mxu0 0.0
  %862 = vmatpush1.msra.mxu0 0.0
  %863 = vmatprep.subr.mxu0 0.0
  %864 = vmatpush1.msra.mxu0 0.0
  %865 = vmatprep.subr.mxu0 0.0
  %866 = vmatpush1.msra.mxu0 0.0
  %867 = vmatprep.subr.mxu0 0.0
  %868 = vmatpush1.msra.mxu0 %v176
  %869 = vmatprep.subr.mxu0 0.0
  %870 = vmatpush1.msra.mxu0 %v175
  %871 = vmatprep.subr.mxu0 0.0
  %872 = vmatpush1.msra.mxu0 %v174
  %873 = vmatprep.subr.mxu0 0.0
  %874 = vmatpush1.msra.mxu0 %v173
  %875 = vmatprep.subr.mxu0 0.0
  %876 = vmatpush2.msra.mxu0 0.0
  %877 = vmatprep.subr.mxu0 0.0
  %878 = vmatpush2.msra.mxu0 0.0
  %879 = vmatprep.subr.mxu0 0.0
  %880 = vmatpush2.msra.mxu0 0.0
  %881 = vmatprep.subr.mxu0 0.0
  %882 = vmatpush2.msra.mxu0 0.0
  %883 = vmatprep.subr.mxu0 0.0
  %884 = vmatpush2.msra.mxu0 0.0
  %885 = vmatprep.subr.mxu0 0.0
  %886 = vmatpush2.msra.mxu0 0.0
  %887 = vmatprep.subr.mxu0 0.0
  %888 = vmatpush2.msra.mxu0 0.0
  %889 = vmatprep.subr.mxu0 0.0
  %890 = vmatpush2.msra.mxu0 0.0
  %891 = vmatprep.subr.mxu0 0.0
  %892 = vmatpush2.msra.mxu0 0.0
  %893 = vmatprep.subr.mxu0 0.0
  %894 = vmatpush2.msra.mxu0 0.0
  %895 = vmatprep.subr.mxu0 0.0
  %896 = vmatpush2.msra.mxu0 0.0
  %897 = vmatprep.subr.mxu0 0.0
  %898 = vmatpush2.msra.mxu0 0.0
  %899 = vmatprep.subr.mxu0 0.0
  %900 = vmatpush2.msra.mxu0 0.0
  %901 = vmatprep.subr.mxu0 0.0
  %902 = vmatpush2.msra.mxu0 0.0
  %903 = vmatprep.subr.mxu0 0.0
  %904 = vmatpush2.msra.mxu0 0.0
  %905 = vmatprep.subr.mxu0 0.0
  %906 = vmatpush2.msra.mxu0 0.0
  %907 = vmatprep.mubr.f32.mxu0 0.0
  %908 = vmatmul.mubr.f32.gmra.mxu0 %v841
  %v909 = vpop.f32.mrf.mxu0
  %v910 = vadd.f32 0.0, %v909
  %v911 = vpop.f32.mrf.mxu0
  %912 = vdwg.mxu0
  %v913 = vadd.f32 %v170, %v910
  %v914 = vmax.f32 %v913, 0.0
  %916 = vrot.lane.b32.xlu0 %v834, 96
  %v917 = vpop.permute.xlu0 %916
  %v918 = vsel %vm183, %v917, 0
  %920 = vmatprep.subr.mxu0 0.0
  %921 = vmatpush1.msra.mxu0 0.0
  %922 = vmatprep.subr.mxu0 0.0
  %923 = vmatpush1.msra.mxu0 0.0
  %924 = vmatprep.subr.mxu0 0.0
  %925 = vmatpush1.msra.mxu0 0.0
  %926 = vmatprep.subr.mxu0 0.0
  %927 = vmatpush1.msra.mxu0 0.0
  %928 = vmatprep.subr.mxu0 0.0
  %929 = vmatpush1.msra.mxu0 0.0
  %930 = vmatprep.subr.mxu0 0.0
  %931 = vmatpush1.msra.mxu0 0.0
  %932 = vmatprep.subr.mxu0 0.0
  %933 = vmatpush1.msra.mxu0 0.0
  %934 = vmatprep.subr.mxu0 0.0
  %935 = vmatpush1.msra.mxu0 0.0
  %936 = vmatprep.subr.mxu0 0.0
  %937 = vmatpush1.msra.mxu0 0.0
  %938 = vmatprep.subr.mxu0 0.0
  %939 = vmatpush1.msra.mxu0 0.0
  %940 = vmatprep.subr.mxu0 0.0
  %941 = vmatpush1.msra.mxu0 0.0
  %942 = vmatprep.subr.mxu0 0.0
  %943 = vmatpush1.msra.mxu0 0.0
  %944 = vmatprep.subr.mxu0 0.0
  %945 = vmatpush1.msra.mxu0 %v180
  %946 = vmatprep.subr.mxu0 0.0
  %947 = vmatpush1.msra.mxu0 %v179
  %948 = vmatprep.subr.mxu0 0.0
  %949 = vmatpush1.msra.mxu0 %v178
  %950 = vmatprep.subr.mxu0 0.0
  %951 = vmatpush1.msra.mxu0 %v177
  %952 = vmatprep.subr.mxu0 0.0
  %953 = vmatpush2.msra.mxu0 0.0
  %954 = vmatprep.subr.mxu0 0.0
  %955 = vmatpush2.msra.mxu0 0.0
  %956 = vmatprep.subr.mxu0 0.0
  %957 = vmatpush2.msra.mxu0 0.0
  %958 = vmatprep.subr.mxu0 0.0
  %959 = vmatpush2.msra.mxu0 0.0
  %960 = vmatprep.subr.mxu0 0.0
  %961 = vmatpush2.msra.mxu0 0.0
  %962 = vmatprep.subr.mxu0 0.0
  %963 = vmatpush2.msra.mxu0 0.0
  %964 = vmatprep.subr.mxu0 0.0
  %965 = vmatpush2.msra.mxu0 0.0
  %966 = vmatprep.subr.mxu0 0.0
  %967 = vmatpush2.msra.mxu0 0.0
  %968 = vmatprep.subr.mxu0 0.0
  %969 = vmatpush2.msra.mxu0 0.0
  %970 = vmatprep.subr.mxu0 0.0
  %971 = vmatpush2.msra.mxu0 0.0
  %972 = vmatprep.subr.mxu0 0.0
  %973 = vmatpush2.msra.mxu0 0.0
  %974 = vmatprep.subr.mxu0 0.0
  %975 = vmatpush2.msra.mxu0 0.0
  %976 = vmatprep.subr.mxu0 0.0
  %977 = vmatpush2.msra.mxu0 0.0
  %978 = vmatprep.subr.mxu0 0.0
  %979 = vmatpush2.msra.mxu0 0.0
  %980 = vmatprep.subr.mxu0 0.0
  %981 = vmatpush2.msra.mxu0 0.0
  %982 = vmatprep.subr.mxu0 0.0
  %983 = vmatpush2.msra.mxu0 0.0
  %984 = vmatprep.mubr.f32.mxu0 0.0
  %985 = vmatmul.mubr.f32.gmra.mxu0 %v918
  %v986 = vpop.f32.mrf.mxu0
  %v987 = vadd.f32 0.0, %v986
  %v988 = vpop.f32.mrf.mxu0
  %989 = vdwg.mxu0
  %v991 = vrot.slane %v987, 2
  %992 = vrot.lane.b32.xlu0 %v991, 32
  %v993 = vpop.permute.xlu0 %992
  %v995 = vadd.f32 %v165, %v993
  %v996 = vmax.f32 %v995, 0.0
  %997 = vst.msk [vmem:[%s9 + $0x8] sm:$0x3] %vm339, %v914
  %998 = vst.msk [vmem:[%s9] sm:$0xc0] %vm341, %v996
  %v1000 = vsel %vm183, %v914, 0
  %1002 = vmatprep.subr.mxu0 0.0
  %1003 = vmatpush1.msra.mxu0 0.0
  %1004 = vmatprep.subr.mxu0 0.0
  %1005 = vmatpush1.msra.mxu0 0.0
  %1006 = vmatprep.subr.mxu0 0.0
  %1007 = vmatpush1.msra.mxu0 0.0
  %1008 = vmatprep.subr.mxu0 0.0
  %1009 = vmatpush1.msra.mxu0 0.0
  %1010 = vmatprep.subr.mxu0 0.0
  %1011 = vmatpush1.msra.mxu0 0.0
  %1012 = vmatprep.subr.mxu0 0.0
  %1013 = vmatpush1.msra.mxu0 0.0
  %1014 = vmatprep.subr.mxu0 0.0
  %1015 = vmatpush1.msra.mxu0 0.0
  %1016 = vmatprep.subr.mxu0 0.0
  %1017 = vmatpush1.msra.mxu0 0.0
  %1018 = vmatprep.subr.mxu0 0.0
  %1019 = vmatpush1.msra.mxu0 0.0
  %1020 = vmatprep.subr.mxu0 0.0
  %1021 = vmatpush1.msra.mxu0 0.0
  %1022 = vmatprep.subr.mxu0 0.0
  %1023 = vmatpush1.msra.mxu0 0.0
  %1024 = vmatprep.subr.mxu0 0.0
  %1025 = vmatpush1.msra.mxu0 0.0
  %1026 = vmatprep.subr.mxu0 0.0
  %1027 = vmatpush1.msra.mxu0 %v176
  %1028 = vmatprep.subr.mxu0 0.0
  %1029 = vmatpush1.msra.mxu0 %v175
  %1030 = vmatprep.subr.mxu0 0.0
  %1031 = vmatpush1.msra.mxu0 %v174
  %1032 = vmatprep.subr.mxu0 0.0
  %1033 = vmatpush1.msra.mxu0 %v173
  %1034 = vmatprep.subr.mxu0 0.0
  %1035 = vmatpush2.msra.mxu0 0.0
  %1036 = vmatprep.subr.mxu0 0.0
  %1037 = vmatpush2.msra.mxu0 0.0
  %1038 = vmatprep.subr.mxu0 0.0
  %1039 = vmatpush2.msra.mxu0 0.0
  %1040 = vmatprep.subr.mxu0 0.0
  %1041 = vmatpush2.msra.mxu0 0.0
  %1042 = vmatprep.subr.mxu0 0.0
  %1043 = vmatpush2.msra.mxu0 0.0
  %1044 = vmatprep.subr.mxu0 0.0
  %1045 = vmatpush2.msra.mxu0 0.0
  %1046 = vmatprep.subr.mxu0 0.0
  %1047 = vmatpush2.msra.mxu0 0.0
  %1048 = vmatprep.subr.mxu0 0.0
  %1049 = vmatpush2.msra.mxu0 0.0
  %1050 = vmatprep.subr.mxu0 0.0
  %1051 = vmatpush2.msra.mxu0 0.0
  %1052 = vmatprep.subr.mxu0 0.0
  %1053 = vmatpush2.msra.mxu0 0.0
  %1054 = vmatprep.subr.mxu0 0.0
  %1055 = vmatpush2.msra.mxu0 0.0
  %1056 = vmatprep.subr.mxu0 0.0
  %1057 = vmatpush2.msra.mxu0 0.0
  %1058 = vmatprep.subr.mxu0 0.0
  %1059 = vmatpush2.msra.mxu0 0.0
  %1060 = vmatprep.subr.mxu0 0.0
  %1061 = vmatpush2.msra.mxu0 0.0
  %1062 = vmatprep.subr.mxu0 0.0
  %1063 = vmatpush2.msra.mxu0 0.0
  %1064 = vmatprep.subr.mxu0 0.0
  %1065 = vmatpush2.msra.mxu0 0.0
  %1066 = vmatprep.mubr.f32.mxu0 0.0
  %1067 = vmatmul.mubr.f32.gmra.mxu0 %v1000
  %v1068 = vpop.f32.mrf.mxu0
  %v1069 = vadd.f32 0.0, %v1068
  %v1070 = vpop.f32.mrf.mxu0
  %1071 = vdwg.mxu0
  %v1073 = vrot.slane %v1069, 6
  %v1075 = vadd.f32 %v170, %v1073
  %v1076 = vmax.f32 %v1075, 0.0
  %v1078 = vrot.slane %v996, 6
  %1079 = vrot.lane.b32.xlu0 %v1078, 96
  %v1080 = vpop.permute.xlu0 %1079
  %v1081 = vsel %vm183, %v1080, 0
  %1083 = vmatprep.subr.mxu0 0.0
  %1084 = vmatpush1.msra.mxu0 0.0
  %1085 = vmatprep.subr.mxu0 0.0
  %1086 = vmatpush1.msra.mxu0 0.0
  %1087 = vmatprep.subr.mxu0 0.0
  %1088 = vmatpush1.msra.mxu0 0.0
  %1089 = vmatprep.subr.mxu0 0.0
  %1090 = vmatpush1.msra.mxu0 0.0
  %1091 = vmatprep.subr.mxu0 0.0
  %1092 = vmatpush1.msra.mxu0 0.0
  %1093 = vmatprep.subr.mxu0 0.0
  %1094 = vmatpush1.msra.mxu0 0.0
  %1095 = vmatprep.subr.mxu0 0.0
  %1096 = vmatpush1.msra.mxu0 0.0
  %1097 = vmatprep.subr.mxu0 0.0
  %1098 = vmatpush1.msra.mxu0 0.0
  %1099 = vmatprep.subr.mxu0 0.0
  %1100 = vmatpush1.msra.mxu0 0.0
  %1101 = vmatprep.subr.mxu0 0.0
  %1102 = vmatpush1.msra.mxu0 0.0
  %1103 = vmatprep.subr.mxu0 0.0
  %1104 = vmatpush1.msra.mxu0 0.0
  %1105 = vmatprep.subr.mxu0 0.0
  %1106 = vmatpush1.msra.mxu0 0.0
  %1107 = vmatprep.subr.mxu0 0.0
  %1108 = vmatpush1.msra.mxu0 %v180
  %1109 = vmatprep.subr.mxu0 0.0
  %1110 = vmatpush1.msra.mxu0 %v179
  %1111 = vmatprep.subr.mxu0 0.0
  %1112 = vmatpush1.msra.mxu0 %v178
  %1113 = vmatprep.subr.mxu0 0.0
  %1114 = vmatpush1.msra.mxu0 %v177
  %1115 = vmatprep.subr.mxu0 0.0
  %1116 = vmatpush2.msra.mxu0 0.0
  %1117 = vmatprep.subr.mxu0 0.0
  %1118 = vmatpush2.msra.mxu0 0.0
  %1119 = vmatprep.subr.mxu0 0.0
  %1120 = vmatpush2.msra.mxu0 0.0
  %1121 = vmatprep.subr.mxu0 0.0
  %1122 = vmatpush2.msra.mxu0 0.0
  %1123 = vmatprep.subr.mxu0 0.0
  %1124 = vmatpush2.msra.mxu0 0.0
  %1125 = vmatprep.subr.mxu0 0.0
  %1126 = vmatpush2.msra.mxu0 0.0
  %1127 = vmatprep.subr.mxu0 0.0
  %1128 = vmatpush2.msra.mxu0 0.0
  %1129 = vmatprep.subr.mxu0 0.0
  %1130 = vmatpush2.msra.mxu0 0.0
  %1131 = vmatprep.subr.mxu0 0.0
  %1132 = vmatpush2.msra.mxu0 0.0
  %1133 = vmatprep.subr.mxu0 0.0
  %1134 = vmatpush2.msra.mxu0 0.0
  %1135 = vmatprep.subr.mxu0 0.0
  %1136 = vmatpush2.msra.mxu0 0.0
  %1137 = vmatprep.subr.mxu0 0.0
  %1138 = vmatpush2.msra.mxu0 0.0
  %1139 = vmatprep.subr.mxu0 0.0
  %1140 = vmatpush2.msra.mxu0 0.0
  %1141 = vmatprep.subr.mxu0 0.0
  %1142 = vmatpush2.msra.mxu0 0.0
  %1143 = vmatprep.subr.mxu0 0.0
  %1144 = vmatpush2.msra.mxu0 0.0
  %1145 = vmatprep.subr.mxu0 0.0
  %1146 = vmatpush2.msra.mxu0 0.0
  %1147 = vmatprep.mubr.f32.mxu0 0.0
  %1148 = vmatmul.mubr.f32.gmra.mxu0 %v1081
  %v1149 = vpop.f32.mrf.mxu0
  %v1150 = vadd.f32 0.0, %v1149
  %v1151 = vpop.f32.mrf.mxu0
  %1152 = vdwg.mxu0
  %v1154 = vrot.slane %v1150, 4
  %1155 = vrot.lane.b32.xlu0 %v1154, 32
  %v1156 = vpop.permute.xlu0 %1155
  %v1158 = vadd.f32 %v165, %v1156
  %v1159 = vmax.f32 %v1158, 0.0
  %1160 = vst.msk [vmem:[%s9 + $0x8] sm:$0xc] %vm504, %v1076
  %1161 = vst.msk [vmem:[%s9] sm:$0x30] %vm506, %v1159
  %v1163 = vrot.slane %v1076, 2
  %v1164 = vsel %vm183, %v1163, 0
  %1166 = vmatprep.subr.mxu0 0.0
  %1167 = vmatpush1.msra.mxu0 0.0
  %1168 = vmatprep.subr.mxu0 0.0
  %1169 = vmatpush1.msra.mxu0 0.0
  %1170 = vmatprep.subr.mxu0 0.0
  %1171 = vmatpush1.msra.mxu0 0.0
  %1172 = vmatprep.subr.mxu0 0.0
  %1173 = vmatpush1.msra.mxu0 0.0
  %1174 = vmatprep.subr.mxu0 0.0
  %1175 = vmatpush1.msra.mxu0 0.0
  %1176 = vmatprep.subr.mxu0 0.0
  %1177 = vmatpush1.msra.mxu0 0.0
  %1178 = vmatprep.subr.mxu0 0.0
  %1179 = vmatpush1.msra.mxu0 0.0
  %1180 = vmatprep.subr.mxu0 0.0
  %1181 = vmatpush1.msra.mxu0 0.0
  %1182 = vmatprep.subr.mxu0 0.0
  %1183 = vmatpush1.msra.mxu0 0.0
  %1184 = vmatprep.subr.mxu0 0.0
  %1185 = vmatpush1.msra.mxu0 0.0
  %1186 = vmatprep.subr.mxu0 0.0
  %1187 = vmatpush1.msra.mxu0 0.0
  %1188 = vmatprep.subr.mxu0 0.0
  %1189 = vmatpush1.msra.mxu0 0.0
  %1190 = vmatprep.subr.mxu0 0.0
  %1191 = vmatpush1.msra.mxu0 %v176
  %1192 = vmatprep.subr.mxu0 0.0
  %1193 = vmatpush1.msra.mxu0 %v175
  %1194 = vmatprep.subr.mxu0 0.0
  %1195 = vmatpush1.msra.mxu0 %v174
  %1196 = vmatprep.subr.mxu0 0.0
  %1197 = vmatpush1.msra.mxu0 %v173
  %1198 = vmatprep.subr.mxu0 0.0
  %1199 = vmatpush2.msra.mxu0 0.0
  %1200 = vmatprep.subr.mxu0 0.0
  %1201 = vmatpush2.msra.mxu0 0.0
  %1202 = vmatprep.subr.mxu0 0.0
  %1203 = vmatpush2.msra.mxu0 0.0
  %1204 = vmatprep.subr.mxu0 0.0
  %1205 = vmatpush2.msra.mxu0 0.0
  %1206 = vmatprep.subr.mxu0 0.0
  %1207 = vmatpush2.msra.mxu0 0.0
  %1208 = vmatprep.subr.mxu0 0.0
  %1209 = vmatpush2.msra.mxu0 0.0
  %1210 = vmatprep.subr.mxu0 0.0
  %1211 = vmatpush2.msra.mxu0 0.0
  %1212 = vmatprep.subr.mxu0 0.0
  %1213 = vmatpush2.msra.mxu0 0.0
  %1214 = vmatprep.subr.mxu0 0.0
  %1215 = vmatpush2.msra.mxu0 0.0
  %1216 = vmatprep.subr.mxu0 0.0
  %1217 = vmatpush2.msra.mxu0 0.0
  %1218 = vmatprep.subr.mxu0 0.0
  %1219 = vmatpush2.msra.mxu0 0.0
  %1220 = vmatprep.subr.mxu0 0.0
  %1221 = vmatpush2.msra.mxu0 0.0
  %1222 = vmatprep.subr.mxu0 0.0
  %1223 = vmatpush2.msra.mxu0 0.0
  %1224 = vmatprep.subr.mxu0 0.0
  %1225 = vmatpush2.msra.mxu0 0.0
  %1226 = vmatprep.subr.mxu0 0.0
  %1227 = vmatpush2.msra.mxu0 0.0
  %1228 = vmatprep.subr.mxu0 0.0
  %1229 = vmatpush2.msra.mxu0 0.0
  %1230 = vmatprep.mubr.f32.mxu0 0.0
  %1231 = vmatmul.mubr.f32.gmra.mxu0 %v1164
  %v1232 = vpop.f32.mrf.mxu0
  %v1233 = vadd.f32 0.0, %v1232
  %v1234 = vpop.f32.mrf.mxu0
  %1235 = vdwg.mxu0
  %v1237 = vrot.slane %v1233, 4
  %v1239 = vadd.f32 %v170, %v1237
  %v1240 = vmax.f32 %v1239, 0.0
  %v1242 = vrot.slane %v1159, 4
  %1243 = vrot.lane.b32.xlu0 %v1242, 96
  %v1244 = vpop.permute.xlu0 %1243
  %v1245 = vsel %vm183, %v1244, 0
  %1247 = vmatprep.subr.mxu0 0.0
  %1248 = vmatpush1.msra.mxu0 0.0
  %1249 = vmatprep.subr.mxu0 0.0
  %1250 = vmatpush1.msra.mxu0 0.0
  %1251 = vmatprep.subr.mxu0 0.0
  %1252 = vmatpush1.msra.mxu0 0.0
  %1253 = vmatprep.subr.mxu0 0.0
  %1254 = vmatpush1.msra.mxu0 0.0
  %1255 = vmatprep.subr.mxu0 0.0
  %1256 = vmatpush1.msra.mxu0 0.0
  %1257 = vmatprep.subr.mxu0 0.0
  %1258 = vmatpush1.msra.mxu0 0.0
  %1259 = vmatprep.subr.mxu0 0.0
  %1260 = vmatpush1.msra.mxu0 0.0
  %1261 = vmatprep.subr.mxu0 0.0
  %1262 = vmatpush1.msra.mxu0 0.0
  %1263 = vmatprep.subr.mxu0 0.0
  %1264 = vmatpush1.msra.mxu0 0.0
  %1265 = vmatprep.subr.mxu0 0.0
  %1266 = vmatpush1.msra.mxu0 0.0
  %1267 = vmatprep.subr.mxu0 0.0
  %1268 = vmatpush1.msra.mxu0 0.0
  %1269 = vmatprep.subr.mxu0 0.0
  %1270 = vmatpush1.msra.mxu0 0.0
  %1271 = vmatprep.subr.mxu0 0.0
  %1272 = vmatpush1.msra.mxu0 %v180
  %1273 = vmatprep.subr.mxu0 0.0
  %1274 = vmatpush1.msra.mxu0 %v179
  %1275 = vmatprep.subr.mxu0 0.0
  %1276 = vmatpush1.msra.mxu0 %v178
  %1277 = vmatprep.subr.mxu0 0.0
  %1278 = vmatpush1.msra.mxu0 %v177
  %1279 = vmatprep.subr.mxu0 0.0
  %1280 = vmatpush2.msra.mxu0 0.0
  %1281 = vmatprep.subr.mxu0 0.0
  %1282 = vmatpush2.msra.mxu0 0.0
  %1283 = vmatprep.subr.mxu0 0.0
  %1284 = vmatpush2.msra.mxu0 0.0
  %1285 = vmatprep.subr.mxu0 0.0
  %1286 = vmatpush2.msra.mxu0 0.0
  %1287 = vmatprep.subr.mxu0 0.0
  %1288 = vmatpush2.msra.mxu0 0.0
  %1289 = vmatprep.subr.mxu0 0.0
  %1290 = vmatpush2.msra.mxu0 0.0
  %1291 = vmatprep.subr.mxu0 0.0
  %1292 = vmatpush2.msra.mxu0 0.0
  %1293 = vmatprep.subr.mxu0 0.0
  %1294 = vmatpush2.msra.mxu0 0.0
  %1295 = vmatprep.subr.mxu0 0.0
  %1296 = vmatpush2.msra.mxu0 0.0
  %1297 = vmatprep.subr.mxu0 0.0
  %1298 = vmatpush2.msra.mxu0 0.0
  %1299 = vmatprep.subr.mxu0 0.0
  %1300 = vmatpush2.msra.mxu0 0.0
  %1301 = vmatprep.subr.mxu0 0.0
  %1302 = vmatpush2.msra.mxu0 0.0
  %1303 = vmatprep.subr.mxu0 0.0
  %1304 = vmatpush2.msra.mxu0 0.0
  %1305 = vmatprep.subr.mxu0 0.0
  %1306 = vmatpush2.msra.mxu0 0.0
  %1307 = vmatprep.subr.mxu0 0.0
  %1308 = vmatpush2.msra.mxu0 0.0
  %1309 = vmatprep.subr.mxu0 0.0
  %1310 = vmatpush2.msra.mxu0 0.0
  %1311 = vmatprep.mubr.f32.mxu0 0.0
  %1312 = vmatmul.mubr.f32.gmra.mxu0 %v1245
  %v1313 = vpop.f32.mrf.mxu0
  %v1314 = vadd.f32 0.0, %v1313
  %v1315 = vpop.f32.mrf.mxu0
  %1316 = vdwg.mxu0
  %v1318 = vrot.slane %v1314, 6
  %1319 = vrot.lane.b32.xlu0 %v1318, 32
  %v1320 = vpop.permute.xlu0 %1319
  %v1322 = vadd.f32 %v165, %v1320
  %v1323 = vmax.f32 %v1322, 0.0
  %1324 = vst.msk [vmem:[%s9 + $0x8] sm:$0x30] %vm670, %v1240
  %1325 = vst.msk [vmem:[%s9] sm:$0xc] %vm672, %v1323
  %v1327 = vrot.slane %v1240, 4
  %v1328 = vsel %vm183, %v1327, 0
  %1330 = vmatprep.subr.mxu0 0.0
  %1331 = vmatpush1.msra.mxu0 0.0
  %1332 = vmatprep.subr.mxu0 0.0
  %1333 = vmatpush1.msra.mxu0 0.0
  %1334 = vmatprep.subr.mxu0 0.0
  %1335 = vmatpush1.msra.mxu0 0.0
  %1336 = vmatprep.subr.mxu0 0.0
  %1337 = vmatpush1.msra.mxu0 0.0
  %1338 = vmatprep.subr.mxu0 0.0
  %1339 = vmatpush1.msra.mxu0 0.0
  %1340 = vmatprep.subr.mxu0 0.0
  %1341 = vmatpush1.msra.mxu0 0.0
  %1342 = vmatprep.subr.mxu0 0.0
  %1343 = vmatpush1.msra.mxu0 0.0
  %1344 = vmatprep.subr.mxu0 0.0
  %1345 = vmatpush1.msra.mxu0 0.0
  %1346 = vmatprep.subr.mxu0 0.0
  %1347 = vmatpush1.msra.mxu0 0.0
  %1348 = vmatprep.subr.mxu0 0.0
  %1349 = vmatpush1.msra.mxu0 0.0
  %1350 = vmatprep.subr.mxu0 0.0
  %1351 = vmatpush1.msra.mxu0 0.0
  %1352 = vmatprep.subr.mxu0 0.0
  %1353 = vmatpush1.msra.mxu0 0.0
  %1354 = vmatprep.subr.mxu0 0.0
  %1355 = vmatpush1.msra.mxu0 %v176
  %1356 = vmatprep.subr.mxu0 0.0
  %1357 = vmatpush1.msra.mxu0 %v175
  %1358 = vmatprep.subr.mxu0 0.0
  %1359 = vmatpush1.msra.mxu0 %v174
  %1360 = vmatprep.subr.mxu0 0.0
  %1361 = vmatpush1.msra.mxu0 %v173
  %1362 = vmatprep.subr.mxu0 0.0
  %1363 = vmatpush2.msra.mxu0 0.0
  %1364 = vmatprep.subr.mxu0 0.0
  %1365 = vmatpush2.msra.mxu0 0.0
  %1366 = vmatprep.subr.mxu0 0.0
  %1367 = vmatpush2.msra.mxu0 0.0
  %1368 = vmatprep.subr.mxu0 0.0
  %1369 = vmatpush2.msra.mxu0 0.0
  %1370 = vmatprep.subr.mxu0 0.0
  %1371 = vmatpush2.msra.mxu0 0.0
  %1372 = vmatprep.subr.mxu0 0.0
  %1373 = vmatpush2.msra.mxu0 0.0
  %1374 = vmatprep.subr.mxu0 0.0
  %1375 = vmatpush2.msra.mxu0 0.0
  %1376 = vmatprep.subr.mxu0 0.0
  %1377 = vmatpush2.msra.mxu0 0.0
  %1378 = vmatprep.subr.mxu0 0.0
  %1379 = vmatpush2.msra.mxu0 0.0
  %1380 = vmatprep.subr.mxu0 0.0
  %1381 = vmatpush2.msra.mxu0 0.0
  %1382 = vmatprep.subr.mxu0 0.0
  %1383 = vmatpush2.msra.mxu0 0.0
  %1384 = vmatprep.subr.mxu0 0.0
  %1385 = vmatpush2.msra.mxu0 0.0
  %1386 = vmatprep.subr.mxu0 0.0
  %1387 = vmatpush2.msra.mxu0 0.0
  %1388 = vmatprep.subr.mxu0 0.0
  %1389 = vmatpush2.msra.mxu0 0.0
  %1390 = vmatprep.subr.mxu0 0.0
  %1391 = vmatpush2.msra.mxu0 0.0
  %1392 = vmatprep.subr.mxu0 0.0
  %1393 = vmatpush2.msra.mxu0 0.0
  %1394 = vmatprep.mubr.f32.mxu0 0.0
  %1395 = vmatmul.mubr.f32.gmra.mxu0 %v1328
  %v1396 = vpop.f32.mrf.mxu0
  %v1397 = vadd.f32 0.0, %v1396
  %v1398 = vpop.f32.mrf.mxu0
  %1399 = vdwg.mxu0
  %v1401 = vrot.slane %v1397, 2
  %v1403 = vadd.f32 %v170, %v1401
  %v1404 = vmax.f32 %v1403, 0.0
  %v1406 = vrot.slane %v1323, 2
  %1407 = vrot.lane.b32.xlu0 %v1406, 96
  %v1408 = vpop.permute.xlu0 %1407
  %v1409 = vsel %vm183, %v1408, 0
  %1411 = vmatprep.subr.mxu0 0.0
  %1412 = vmatpush1.msra.mxu0 0.0
  %1413 = vmatprep.subr.mxu0 0.0
  %1414 = vmatpush1.msra.mxu0 0.0
  %1415 = vmatprep.subr.mxu0 0.0
  %1416 = vmatpush1.msra.mxu0 0.0
  %1417 = vmatprep.subr.mxu0 0.0
  %1418 = vmatpush1.msra.mxu0 0.0
  %1419 = vmatprep.subr.mxu0 0.0
  %1420 = vmatpush1.msra.mxu0 0.0
  %1421 = vmatprep.subr.mxu0 0.0
  %1422 = vmatpush1.msra.mxu0 0.0
  %1423 = vmatprep.subr.mxu0 0.0
  %1424 = vmatpush1.msra.mxu0 0.0
  %1425 = vmatprep.subr.mxu0 0.0
  %1426 = vmatpush1.msra.mxu0 0.0
  %1427 = vmatprep.subr.mxu0 0.0
  %1428 = vmatpush1.msra.mxu0 0.0
  %1429 = vmatprep.subr.mxu0 0.0
  %1430 = vmatpush1.msra.mxu0 0.0
  %1431 = vmatprep.subr.mxu0 0.0
  %1432 = vmatpush1.msra.mxu0 0.0
  %1433 = vmatprep.subr.mxu0 0.0
  %1434 = vmatpush1.msra.mxu0 0.0
  %1435 = vmatprep.subr.mxu0 0.0
  %1436 = vmatpush1.msra.mxu0 %v180
  %1437 = vmatprep.subr.mxu0 0.0
  %1438 = vmatpush1.msra.mxu0 %v179
  %1439 = vmatprep.subr.mxu0 0.0
  %1440 = vmatpush1.msra.mxu0 %v178
  %1441 = vmatprep.subr.mxu0 0.0
  %1442 = vmatpush1.msra.mxu0 %v177
  %1443 = vmatprep.subr.mxu0 0.0
  %1444 = vmatpush2.msra.mxu0 0.0
  %1445 = vmatprep.subr.mxu0 0.0
  %1446 = vmatpush2.msra.mxu0 0.0
  %1447 = vmatprep.subr.mxu0 0.0
  %1448 = vmatpush2.msra.mxu0 0.0
  %1449 = vmatprep.subr.mxu0 0.0
  %1450 = vmatpush2.msra.mxu0 0.0
  %1451 = vmatprep.subr.mxu0 0.0
  %1452 = vmatpush2.msra.mxu0 0.0
  %1453 = vmatprep.subr.mxu0 0.0
  %1454 = vmatpush2.msra.mxu0 0.0
  %1455 = vmatprep.subr.mxu0 0.0
  %1456 = vmatpush2.msra.mxu0 0.0
  %1457 = vmatprep.subr.mxu0 0.0
  %1458 = vmatpush2.msra.mxu0 0.0
  %1459 = vmatprep.subr.mxu0 0.0
  %1460 = vmatpush2.msra.mxu0 0.0
  %1461 = vmatprep.subr.mxu0 0.0
  %1462 = vmatpush2.msra.mxu0 0.0
  %1463 = vmatprep.subr.mxu0 0.0
  %1464 = vmatpush2.msra.mxu0 0.0
  %1465 = vmatprep.subr.mxu0 0.0
  %1466 = vmatpush2.msra.mxu0 0.0
  %1467 = vmatprep.subr.mxu0 0.0
  %1468 = vmatpush2.msra.mxu0 0.0
  %1469 = vmatprep.subr.mxu0 0.0
  %1470 = vmatpush2.msra.mxu0 0.0
  %1471 = vmatprep.subr.mxu0 0.0
  %1472 = vmatpush2.msra.mxu0 0.0
  %1473 = vmatprep.subr.mxu0 0.0
  %1474 = vmatpush2.msra.mxu0 0.0
  %1475 = vmatprep.mubr.f32.mxu0 0.0
  %1476 = vmatmul.mubr.f32.gmra.mxu0 %v1409
  %v1477 = vpop.f32.mrf.mxu0
  %v1478 = vadd.f32 0.0, %v1477
  %v1479 = vpop.f32.mrf.mxu0
  %1480 = vdwg.mxu0
  %1482 = vrot.lane.b32.xlu0 %v1478, 32
  %v1483 = vpop.permute.xlu0 %1482
  %v1485 = vadd.f32 %v165, %v1483
  %v1486 = vmax.f32 %v1485, 0.0
  %1487 = vst.msk [vmem:[%s9 + $0x8] sm:$0xc0] %vm835, %v1404
  %1488 = vst.msk [vmem:[%s9] sm:$0x3] %vm837, %v1486
  %1489 = vst.msk [vmem:[%s10 - $0x6] sm:$0xc0] %vm835, %v1404
  %1491 = vrot.lane.b32.xlu0 %v1486, 96
  %v1492 = vpop.permute.xlu0 %1491
  %1494 = vst.msk [vmem:[%s11] sm:$0x3] %vm339, %v1492
  // Predicated region
  $region38: #{rnn_cell_forward.2} parent=0 // pred_check
    _
  $region39: #{rnn_cell_forward.2} parent=0 // pred_check_branch
    %1496 = sbr.rel (0) target = $region41
  $region40: #{rnn_cell_forward.2} parent=0 // pred_region
    _
  $region41: #{rnn_cell_forward.2} parent=0 // pred_fallthru
    _
  // Predicated region
  $region42: #{rnn_cell_forward.2} parent=0 // pred_check
    _
  $region43: #{rnn_cell_forward.2} parent=0 // pred_check_branch
    %1498 = sbr.rel (0) target = $region45
  $region44: #{rnn_cell_forward.2} parent=0 // pred_region
    _
  $region45: #{rnn_cell_forward.2} parent=0 // pred_fallthru
    _
  // Predicated region
  $region46: #{rnn_cell_forward.2} parent=0 // pred_check
    _
  $region47: #{rnn_cell_forward.2} parent=0 // pred_check_branch
    %1500 = sbr.rel (0) target = $region49
  $region48: #{rnn_cell_forward.2} parent=0 // pred_region
    _
  $region49: #{rnn_cell_forward.2} parent=0 // pred_fallthru
    _
  // Predicated region
  $region50: #{rnn_cell_forward.2} parent=0 // pred_check
    _
  $region51: #{rnn_cell_forward.2} parent=0 // pred_check_branch
    %1502 = sbr.rel (0) target = $region53
  $region52: #{rnn_cell_forward.2} parent=0 // pred_region
    _
  $region53: #{rnn_cell_forward.2} parent=0 // pred_fallthru
    _
  // Predicated region
  $region54: #{rnn_cell_forward.2} parent=0 // pred_check
    _
  $region55: #{rnn_cell_forward.2} parent=0 // pred_check_branch
    %1504 = sbr.rel (0) target = $region57
  $region56: #{rnn_cell_forward.2} parent=0 // pred_region
    _
  $region57: #{rnn_cell_forward.2} parent=0 // pred_fallthru
    _
  // Predicated region
  $region58: #{rnn_cell_forward.2} parent=0 // pred_check
    _
  $region59: #{rnn_cell_forward.2} parent=0 // pred_check_branch
    %1506 = sbr.rel (0) target = $region61
  $region60: #{rnn_cell_forward.2} parent=0 // pred_region
    _
  $region61: #{rnn_cell_forward.2} parent=0 // pred_fallthru
    _

// kernel: rnn_cell_forward.3
$region0: #{rnn_cell_forward.3}
  #allocation0 [shape = 'u32[]', space=smem, size = 0x4, offset = 0x4, fixed_abs, tag = 'smem constant byte address 0x4 - core index']
  #allocation1 [shape = 'u32[144,128]{1,0:T(1,128)}', space=vmem, size = 0x12000, scoped, tag = 'internal scratch']
  %s0 = inlined_call_operand.vmem [shape: f32[16,64], index: 0, kind: input, shape index: {}]
  %s1 = inlined_call_operand.vmem [shape: f32[1,64], index: 1, kind: input, shape index: {}]
  %s2 = inlined_call_operand.vmem [shape: f32[1,64], index: 2, kind: input, shape index: {}]
  %s3 = inlined_call_operand.vmem [shape: f32[64,64], index: 3, kind: input, shape index: {}]
  %s4 = inlined_call_operand.vmem [shape: f32[32,32], index: 4, kind: input, shape index: {}]
  %s5 = inlined_call_operand.vmem [shape: f32[32,32], index: 5, kind: input, shape index: {}]
  %s6 = inlined_call_operand.vmem [shape: f32[1,64], index: 6, kind: input, shape index: {}]
  %s7 = inlined_call_operand.vmem [shape: f32[2,32], index: 7, kind: input, shape index: {}]
  %s8 = inlined_call_operand.vmem [shape: f32[2,32], index: 8, kind: input, shape index: {}]
  %s9 = inlined_call_operand.vmem [shape: f32[16,64], index: 9, kind: output, shape index: {0}]
  %s10 = inlined_call_operand.vmem [shape: f32[2,32], index: 10, kind: output, shape index: {1}]
  %s11 = inlined_call_operand.vmem [shape: f32[2,32], index: 11, kind: output, shape index: {2}]
  %12 = xla_tuple %s9, %s10, %s11
  %s13 = sld [smem:[#allocation0]]
  $region62: #{rnn_cell_forward.3} parent=0
    _
  %s15 = ssub.s32 1, %s13
  %s16 = scalar_select 0, %s15, %s13
  // Predicated region
  $region2: #{rnn_cell_forward.3} parent=0 // pred_check
    _
  $region3: #{rnn_cell_forward.3} parent=0 // pred_check_branch
    %18 = sbr.rel (0) target = $region5
  $region4: #{rnn_cell_forward.3} parent=0 // pred_region
    _
  $region5: #{rnn_cell_forward.3} parent=0 // pred_fallthru
    _
  // Predicated region
  $region6: #{rnn_cell_forward.3} parent=0 // pred_check
    _
  $region7: #{rnn_cell_forward.3} parent=0 // pred_check_branch
    %20 = sbr.rel (0) target = $region9
  $region8: #{rnn_cell_forward.3} parent=0 // pred_region
    _
  $region9: #{rnn_cell_forward.3} parent=0 // pred_fallthru
    _
  // Predicated region
  $region10: #{rnn_cell_forward.3} parent=0 // pred_check
    _
  $region11: #{rnn_cell_forward.3} parent=0 // pred_check_branch
    %22 = sbr.rel (0) target = $region13
  $region12: #{rnn_cell_forward.3} parent=0 // pred_region
    _
  $region13: #{rnn_cell_forward.3} parent=0 // pred_fallthru
    _
  // Predicated region
  $region14: #{rnn_cell_forward.3} parent=0 // pred_check
    _
  $region15: #{rnn_cell_forward.3} parent=0 // pred_check_branch
    %24 = sbr.rel (0) target = $region17
  $region16: #{rnn_cell_forward.3} parent=0 // pred_region
    _
  $region17: #{rnn_cell_forward.3} parent=0 // pred_fallthru
    _
  // Predicated region
  $region18: #{rnn_cell_forward.3} parent=0 // pred_check
    _
  $region19: #{rnn_cell_forward.3} parent=0 // pred_check_branch
    %26 = sbr.rel (0) target = $region21
  $region20: #{rnn_cell_forward.3} parent=0 // pred_region
    _
  $region21: #{rnn_cell_forward.3} parent=0 // pred_fallthru
    _
  // Predicated region
  $region22: #{rnn_cell_forward.3} parent=0 // pred_check
    _
  $region23: #{rnn_cell_forward.3} parent=0 // pred_check_branch
    %28 = sbr.rel (0) target = $region25
  $region24: #{rnn_cell_forward.3} parent=0 // pred_region
    _
  $region25: #{rnn_cell_forward.3} parent=0 // pred_fallthru
    _
  // Predicated region
  $region26: #{rnn_cell_forward.3} parent=0 // pred_check
    _
  $region27: #{rnn_cell_forward.3} parent=0 // pred_check_branch
    %30 = sbr.rel (0) target = $region29
  $region28: #{rnn_cell_forward.3} parent=0 // pred_region
    _
  $region29: #{rnn_cell_forward.3} parent=0 // pred_fallthru
    _
  // Predicated region
  $region30: #{rnn_cell_forward.3} parent=0 // pred_check
    _
  $region31: #{rnn_cell_forward.3} parent=0 // pred_check_branch
    %32 = sbr.rel (0) target = $region33
  $region32: #{rnn_cell_forward.3} parent=0 // pred_region
    _
  $region33: #{rnn_cell_forward.3} parent=0 // pred_fallthru
    _
  // Predicated region
  $region34: #{rnn_cell_forward.3} parent=0 // pred_check
    _
  $region35: #{rnn_cell_forward.3} parent=0 // pred_check_branch
    %34 = sbr.rel (0) target = $region37
  $region36: #{rnn_cell_forward.3} parent=0 // pred_region
    _
  $region37: #{rnn_cell_forward.3} parent=0 // pred_fallthru
    _
  %v35 = vld [vmem:[%s0] sm:$0xff]
  %v36 = vld [vmem:[%s0 + $0x8] sm:$0xff]
  %v37 = vld [vmem:[%s3] sm:$0xff]
  %v38 = vld [vmem:[%s3 + $0x8] sm:$0xff]
  %v39 = vld [vmem:[%s3 + $0x10] sm:$0xff]
  %v40 = vld [vmem:[%s3 + $0x18] sm:$0xff]
  %v41 = vld [vmem:[%s3 + $0x20] sm:$0xff]
  %v42 = vld [vmem:[%s3 + $0x28] sm:$0xff]
  %v43 = vld [vmem:[%s3 + $0x30] sm:$0xff]
  %v44 = vld [vmem:[%s3 + $0x38] sm:$0xff]
  %v45 = vld [vmem:[%s6] sm:$0x1]
  %v47 = vlaneseq
  %v48 = vshrl.u32 %v47, 7
  %v49 = vsub.s32 0, %v48
  %v50 = vrot.slane %v45, %v49
  %vm52 = vcmask 523264
  %v54 = vsel %vm52, %v35, 0
  %v57 = vsel %vm52, %v36, 0
  %59 = vmatprep.subr.mxu0 0.0
  %60 = vmatpush1.msra.mxu0 0.0
  %61 = vmatprep.subr.mxu0 0.0
  %62 = vmatpush1.msra.mxu0 0.0
  %63 = vmatprep.subr.mxu0 0.0
  %64 = vmatpush1.msra.mxu0 0.0
  %65 = vmatprep.subr.mxu0 0.0
  %66 = vmatpush1.msra.mxu0 0.0
  %67 = vmatprep.subr.mxu0 0.0
  %68 = vmatpush1.msra.mxu0 0.0
  %69 = vmatprep.subr.mxu0 0.0
  %70 = vmatpush1.msra.mxu0 0.0
  %71 = vmatprep.subr.mxu0 0.0
  %72 = vmatpush1.msra.mxu0 0.0
  %73 = vmatprep.subr.mxu0 0.0
  %74 = vmatpush1.msra.mxu0 0.0
  %75 = vmatprep.subr.mxu0 0.0
  %76 = vmatpush1.msra.mxu0 %v44
  %77 = vmatprep.subr.mxu0 0.0
  %78 = vmatpush1.msra.mxu0 %v43
  %79 = vmatprep.subr.mxu0 0.0
  %80 = vmatpush1.msra.mxu0 %v42
  %81 = vmatprep.subr.mxu0 0.0
  %82 = vmatpush1.msra.mxu0 %v41
  %83 = vmatprep.subr.mxu0 0.0
  %84 = vmatpush1.msra.mxu0 %v40
  %85 = vmatprep.subr.mxu0 0.0
  %86 = vmatpush1.msra.mxu0 %v39
  %87 = vmatprep.subr.mxu0 0.0
  %88 = vmatpush1.msra.mxu0 %v38
  %89 = vmatprep.subr.mxu0 0.0
  %90 = vmatpush1.msra.mxu0 %v37
  %91 = vmatprep.subr.mxu0 0.0
  %92 = vmatpush2.msra.mxu0 0.0
  %93 = vmatprep.subr.mxu0 0.0
  %94 = vmatpush2.msra.mxu0 0.0
  %95 = vmatprep.subr.mxu0 0.0
  %96 = vmatpush2.msra.mxu0 0.0
  %97 = vmatprep.subr.mxu0 0.0
  %98 = vmatpush2.msra.mxu0 0.0
  %99 = vmatprep.subr.mxu0 0.0
  %100 = vmatpush2.msra.mxu0 0.0
  %101 = vmatprep.subr.mxu0 0.0
  %102 = vmatpush2.msra.mxu0 0.0
  %103 = vmatprep.subr.mxu0 0.0
  %104 = vmatpush2.msra.mxu0 0.0
  %105 = vmatprep.subr.mxu0 0.0
  %106 = vmatpush2.msra.mxu0 0.0
  %107 = vmatprep.subr.mxu0 0.0
  %108 = vmatpush2.msra.mxu0 0.0
  %109 = vmatprep.subr.mxu0 0.0
  %110 = vmatpush2.msra.mxu0 0.0
  %111 = vmatprep.subr.mxu0 0.0
  %112 = vmatpush2.msra.mxu0 0.0
  %113 = vmatprep.subr.mxu0 0.0
  %114 = vmatpush2.msra.mxu0 0.0
  %115 = vmatprep.subr.mxu0 0.0
  %116 = vmatpush2.msra.mxu0 0.0
  %117 = vmatprep.subr.mxu0 0.0
  %118 = vmatpush2.msra.mxu0 0.0
  %119 = vmatprep.subr.mxu0 0.0
  %120 = vmatpush2.msra.mxu0 0.0
  %121 = vmatprep.subr.mxu0 0.0
  %122 = vmatpush2.msra.mxu0 0.0
  %123 = vmatprep.mubr.f32.mxu0 0.0
  %124 = vmatmul.mubr.f32.gmra.mxu0 %v54
  %v125 = vpop.f32.mrf.mxu0
  %v126 = vadd.f32 %v50, %v125
  %v127 = vpop.f32.mrf.mxu0
  %128 = vmatprep.mubr.f32.mxu0 0.0
  %129 = vmatmul.mubr.f32.gmra.mxu0 %v57
  %v130 = vpop.f32.mrf.mxu0
  %v131 = vadd.f32 %v50, %v130
  %v132 = vpop.f32.mrf.mxu0
  %133 = vdwg.mxu0
  %v134 = vld [vmem:[%s4] sm:$0xff]
  %v135 = vld [vmem:[%s4 + $0x8] sm:$0xff]
  %v136 = vld [vmem:[%s4 + $0x10] sm:$0xff]
  %v137 = vld [vmem:[%s4 + $0x18] sm:$0xff]
  %v138 = vld [vmem:[%s5] sm:$0xff]
  %v139 = vld [vmem:[%s5 + $0x8] sm:$0xff]
  %v140 = vld [vmem:[%s5 + $0x10] sm:$0xff]
  %v141 = vld [vmem:[%s5 + $0x18] sm:$0xff]
  %v142 = vld [vmem:[%s7] sm:$0x3]
  %v143 = vld [vmem:[%s8] sm:$0x3]
  %vm144 = vcmask 261120
  %v146 = vsel %vm144, %v142, 0
  %148 = vmatprep.subr.mxu0 0.0
  %149 = vmatpush1.msra.mxu0 0.0
  %150 = vmatprep.subr.mxu0 0.0
  %151 = vmatpush1.msra.mxu0 0.0
  %152 = vmatprep.subr.mxu0 0.0
  %153 = vmatpush1.msra.mxu0 0.0
  %154 = vmatprep.subr.mxu0 0.0
  %155 = vmatpush1.msra.mxu0 0.0
  %156 = vmatprep.subr.mxu0 0.0
  %157 = vmatpush1.msra.mxu0 0.0
  %158 = vmatprep.subr.mxu0 0.0
  %159 = vmatpush1.msra.mxu0 0.0
  %160 = vmatprep.subr.mxu0 0.0
  %161 = vmatpush1.msra.mxu0 0.0
  %162 = vmatprep.subr.mxu0 0.0
  %163 = vmatpush1.msra.mxu0 0.0
  %164 = vmatprep.subr.mxu0 0.0
  %165 = vmatpush1.msra.mxu0 0.0
  %166 = vmatprep.subr.mxu0 0.0
  %167 = vmatpush1.msra.mxu0 0.0
  %168 = vmatprep.subr.mxu0 0.0
  %169 = vmatpush1.msra.mxu0 0.0
  %170 = vmatprep.subr.mxu0 0.0
  %171 = vmatpush1.msra.mxu0 0.0
  %172 = vmatprep.subr.mxu0 0.0
  %173 = vmatpush1.msra.mxu0 %v137
  %174 = vmatprep.subr.mxu0 0.0
  %175 = vmatpush1.msra.mxu0 %v136
  %176 = vmatprep.subr.mxu0 0.0
  %177 = vmatpush1.msra.mxu0 %v135
  %178 = vmatprep.subr.mxu0 0.0
  %179 = vmatpush1.msra.mxu0 %v134
  %180 = vmatprep.subr.mxu0 0.0
  %181 = vmatpush2.msra.mxu0 0.0
  %182 = vmatprep.subr.mxu0 0.0
  %183 = vmatpush2.msra.mxu0 0.0
  %184 = vmatprep.subr.mxu0 0.0
  %185 = vmatpush2.msra.mxu0 0.0
  %186 = vmatprep.subr.mxu0 0.0
  %187 = vmatpush2.msra.mxu0 0.0
  %188 = vmatprep.subr.mxu0 0.0
  %189 = vmatpush2.msra.mxu0 0.0
  %190 = vmatprep.subr.mxu0 0.0
  %191 = vmatpush2.msra.mxu0 0.0
  %192 = vmatprep.subr.mxu0 0.0
  %193 = vmatpush2.msra.mxu0 0.0
  %194 = vmatprep.subr.mxu0 0.0
  %195 = vmatpush2.msra.mxu0 0.0
  %196 = vmatprep.subr.mxu0 0.0
  %197 = vmatpush2.msra.mxu0 0.0
  %198 = vmatprep.subr.mxu0 0.0
  %199 = vmatpush2.msra.mxu0 0.0
  %200 = vmatprep.subr.mxu0 0.0
  %201 = vmatpush2.msra.mxu0 0.0
  %202 = vmatprep.subr.mxu0 0.0
  %203 = vmatpush2.msra.mxu0 0.0
  %204 = vmatprep.subr.mxu0 0.0
  %205 = vmatpush2.msra.mxu0 0.0
  %206 = vmatprep.subr.mxu0 0.0
  %207 = vmatpush2.msra.mxu0 0.0
  %208 = vmatprep.subr.mxu0 0.0
  %209 = vmatpush2.msra.mxu0 0.0
  %210 = vmatprep.subr.mxu0 0.0
  %211 = vmatpush2.msra.mxu0 0.0
  %212 = vmatprep.mubr.f32.mxu0 0.0
  %213 = vmatmul.mubr.f32.gmra.mxu0 %v146
  %v214 = vpop.f32.mrf.mxu0
  %v215 = vadd.f32 0.0, %v214
  %v216 = vpop.f32.mrf.mxu0
  %217 = vdwg.mxu0
  %v218 = vadd.f32 %v126, %v215
  %v219 = vmax.f32 %v218, 0.0
  %v221 = vsel %vm144, %v143, 0
  %223 = vmatprep.subr.mxu0 0.0
  %224 = vmatpush1.msra.mxu0 0.0
  %225 = vmatprep.subr.mxu0 0.0
  %226 = vmatpush1.msra.mxu0 0.0
  %227 = vmatprep.subr.mxu0 0.0
  %228 = vmatpush1.msra.mxu0 0.0
  %229 = vmatprep.subr.mxu0 0.0
  %230 = vmatpush1.msra.mxu0 0.0
  %231 = vmatprep.subr.mxu0 0.0
  %232 = vmatpush1.msra.mxu0 0.0
  %233 = vmatprep.subr.mxu0 0.0
  %234 = vmatpush1.msra.mxu0 0.0
  %235 = vmatprep.subr.mxu0 0.0
  %236 = vmatpush1.msra.mxu0 0.0
  %237 = vmatprep.subr.mxu0 0.0
  %238 = vmatpush1.msra.mxu0 0.0
  %239 = vmatprep.subr.mxu0 0.0
  %240 = vmatpush1.msra.mxu0 0.0
  %241 = vmatprep.subr.mxu0 0.0
  %242 = vmatpush1.msra.mxu0 0.0
  %243 = vmatprep.subr.mxu0 0.0
  %244 = vmatpush1.msra.mxu0 0.0
  %245 = vmatprep.subr.mxu0 0.0
  %246 = vmatpush1.msra.mxu0 0.0
  %247 = vmatprep.subr.mxu0 0.0
  %248 = vmatpush1.msra.mxu0 %v141
  %249 = vmatprep.subr.mxu0 0.0
  %250 = vmatpush1.msra.mxu0 %v140
  %251 = vmatprep.subr.mxu0 0.0
  %252 = vmatpush1.msra.mxu0 %v139
  %253 = vmatprep.subr.mxu0 0.0
  %254 = vmatpush1.msra.mxu0 %v138
  %255 = vmatprep.subr.mxu0 0.0
  %256 = vmatpush2.msra.mxu0 0.0
  %257 = vmatprep.subr.mxu0 0.0
  %258 = vmatpush2.msra.mxu0 0.0
  %259 = vmatprep.subr.mxu0 0.0
  %260 = vmatpush2.msra.mxu0 0.0
  %261 = vmatprep.subr.mxu0 0.0
  %262 = vmatpush2.msra.mxu0 0.0
  %263 = vmatprep.subr.mxu0 0.0
  %264 = vmatpush2.msra.mxu0 0.0
  %265 = vmatprep.subr.mxu0 0.0
  %266 = vmatpush2.msra.mxu0 0.0
  %267 = vmatprep.subr.mxu0 0.0
  %268 = vmatpush2.msra.mxu0 0.0
  %269 = vmatprep.subr.mxu0 0.0
  %270 = vmatpush2.msra.mxu0 0.0
  %271 = vmatprep.subr.mxu0 0.0
  %272 = vmatpush2.msra.mxu0 0.0
  %273 = vmatprep.subr.mxu0 0.0
  %274 = vmatpush2.msra.mxu0 0.0
  %275 = vmatprep.subr.mxu0 0.0
  %276 = vmatpush2.msra.mxu0 0.0
  %277 = vmatprep.subr.mxu0 0.0
  %278 = vmatpush2.msra.mxu0 0.0
  %279 = vmatprep.subr.mxu0 0.0
  %280 = vmatpush2.msra.mxu0 0.0
  %281 = vmatprep.subr.mxu0 0.0
  %282 = vmatpush2.msra.mxu0 0.0
  %283 = vmatprep.subr.mxu0 0.0
  %284 = vmatpush2.msra.mxu0 0.0
  %285 = vmatprep.subr.mxu0 0.0
  %286 = vmatpush2.msra.mxu0 0.0
  %287 = vmatprep.mubr.f32.mxu0 0.0
  %288 = vmatmul.mubr.f32.gmra.mxu0 %v221
  %v289 = vpop.f32.mrf.mxu0
  %v290 = vadd.f32 0.0, %v289
  %v291 = vpop.f32.mrf.mxu0
  %292 = vdwg.mxu0
  %v294 = vrot.slane %v290, 2
  %295 = vrot.lane.b32.xlu0 %v294, 32
  %v296 = vpop.permute.xlu0 %295
  %v298 = vadd.f32 %v131, %v296
  %v299 = vmax.f32 %v298, 0.0
  %vm300 = vcmask 254976
  %301 = vst.msk [vmem:[%s9] sm:$0x3] %vm300, %v219
  %vm302 = vcmask 523526
  %303 = vst.msk [vmem:[%s9 + $0x8] sm:$0xc0] %vm302, %v299
  %v305 = vsel %vm144, %v219, 0
  %307 = vmatprep.subr.mxu0 0.0
  %308 = vmatpush1.msra.mxu0 0.0
  %309 = vmatprep.subr.mxu0 0.0
  %310 = vmatpush1.msra.mxu0 0.0
  %311 = vmatprep.subr.mxu0 0.0
  %312 = vmatpush1.msra.mxu0 0.0
  %313 = vmatprep.subr.mxu0 0.0
  %314 = vmatpush1.msra.mxu0 0.0
  %315 = vmatprep.subr.mxu0 0.0
  %316 = vmatpush1.msra.mxu0 0.0
  %317 = vmatprep.subr.mxu0 0.0
  %318 = vmatpush1.msra.mxu0 0.0
  %319 = vmatprep.subr.mxu0 0.0
  %320 = vmatpush1.msra.mxu0 0.0
  %321 = vmatprep.subr.mxu0 0.0
  %322 = vmatpush1.msra.mxu0 0.0
  %323 = vmatprep.subr.mxu0 0.0
  %324 = vmatpush1.msra.mxu0 0.0
  %325 = vmatprep.subr.mxu0 0.0
  %326 = vmatpush1.msra.mxu0 0.0
  %327 = vmatprep.subr.mxu0 0.0
  %328 = vmatpush1.msra.mxu0 0.0
  %329 = vmatprep.subr.mxu0 0.0
  %330 = vmatpush1.msra.mxu0 0.0
  %331 = vmatprep.subr.mxu0 0.0
  %332 = vmatpush1.msra.mxu0 %v137
  %333 = vmatprep.subr.mxu0 0.0
  %334 = vmatpush1.msra.mxu0 %v136
  %335 = vmatprep.subr.mxu0 0.0
  %336 = vmatpush1.msra.mxu0 %v135
  %337 = vmatprep.subr.mxu0 0.0
  %338 = vmatpush1.msra.mxu0 %v134
  %339 = vmatprep.subr.mxu0 0.0
  %340 = vmatpush2.msra.mxu0 0.0
  %341 = vmatprep.subr.mxu0 0.0
  %342 = vmatpush2.msra.mxu0 0.0
  %343 = vmatprep.subr.mxu0 0.0
  %344 = vmatpush2.msra.mxu0 0.0
  %345 = vmatprep.subr.mxu0 0.0
  %346 = vmatpush2.msra.mxu0 0.0
  %347 = vmatprep.subr.mxu0 0.0
  %348 = vmatpush2.msra.mxu0 0.0
  %349 = vmatprep.subr.mxu0 0.0
  %350 = vmatpush2.msra.mxu0 0.0
  %351 = vmatprep.subr.mxu0 0.0
  %352 = vmatpush2.msra.mxu0 0.0
  %353 = vmatprep.subr.mxu0 0.0
  %354 = vmatpush2.msra.mxu0 0.0
  %355 = vmatprep.subr.mxu0 0.0
  %356 = vmatpush2.msra.mxu0 0.0
  %357 = vmatprep.subr.mxu0 0.0
  %358 = vmatpush2.msra.mxu0 0.0
  %359 = vmatprep.subr.mxu0 0.0
  %360 = vmatpush2.msra.mxu0 0.0
  %361 = vmatprep.subr.mxu0 0.0
  %362 = vmatpush2.msra.mxu0 0.0
  %363 = vmatprep.subr.mxu0 0.0
  %364 = vmatpush2.msra.mxu0 0.0
  %365 = vmatprep.subr.mxu0 0.0
  %366 = vmatpush2.msra.mxu0 0.0
  %367 = vmatprep.subr.mxu0 0.0
  %368 = vmatpush2.msra.mxu0 0.0
  %369 = vmatprep.subr.mxu0 0.0
  %370 = vmatpush2.msra.mxu0 0.0
  %371 = vmatprep.mubr.f32.mxu0 0.0
  %372 = vmatmul.mubr.f32.gmra.mxu0 %v305
  %v373 = vpop.f32.mrf.mxu0
  %v374 = vadd.f32 0.0, %v373
  %v375 = vpop.f32.mrf.mxu0
  %376 = vdwg.mxu0
  %v378 = vrot.slane %v374, 6
  %v380 = vadd.f32 %v126, %v378
  %v381 = vmax.f32 %v380, 0.0
  %v383 = vrot.slane %v299, 6
  %384 = vrot.lane.b32.xlu0 %v383, 96
  %v385 = vpop.permute.xlu0 %384
  %v386 = vsel %vm144, %v385, 0
  %388 = vmatprep.subr.mxu0 0.0
  %389 = vmatpush1.msra.mxu0 0.0
  %390 = vmatprep.subr.mxu0 0.0
  %391 = vmatpush1.msra.mxu0 0.0
  %392 = vmatprep.subr.mxu0 0.0
  %393 = vmatpush1.msra.mxu0 0.0
  %394 = vmatprep.subr.mxu0 0.0
  %395 = vmatpush1.msra.mxu0 0.0
  %396 = vmatprep.subr.mxu0 0.0
  %397 = vmatpush1.msra.mxu0 0.0
  %398 = vmatprep.subr.mxu0 0.0
  %399 = vmatpush1.msra.mxu0 0.0
  %400 = vmatprep.subr.mxu0 0.0
  %401 = vmatpush1.msra.mxu0 0.0
  %402 = vmatprep.subr.mxu0 0.0
  %403 = vmatpush1.msra.mxu0 0.0
  %404 = vmatprep.subr.mxu0 0.0
  %405 = vmatpush1.msra.mxu0 0.0
  %406 = vmatprep.subr.mxu0 0.0
  %407 = vmatpush1.msra.mxu0 0.0
  %408 = vmatprep.subr.mxu0 0.0
  %409 = vmatpush1.msra.mxu0 0.0
  %410 = vmatprep.subr.mxu0 0.0
  %411 = vmatpush1.msra.mxu0 0.0
  %412 = vmatprep.subr.mxu0 0.0
  %413 = vmatpush1.msra.mxu0 %v141
  %414 = vmatprep.subr.mxu0 0.0
  %415 = vmatpush1.msra.mxu0 %v140
  %416 = vmatprep.subr.mxu0 0.0
  %417 = vmatpush1.msra.mxu0 %v139
  %418 = vmatprep.subr.mxu0 0.0
  %419 = vmatpush1.msra.mxu0 %v138
  %420 = vmatprep.subr.mxu0 0.0
  %421 = vmatpush2.msra.mxu0 0.0
  %422 = vmatprep.subr.mxu0 0.0
  %423 = vmatpush2.msra.mxu0 0.0
  %424 = vmatprep.subr.mxu0 0.0
  %425 = vmatpush2.msra.mxu0 0.0
  %426 = vmatprep.subr.mxu0 0.0
  %427 = vmatpush2.msra.mxu0 0.0
  %428 = vmatprep.subr.mxu0 0.0
  %429 = vmatpush2.msra.mxu0 0.0
  %430 = vmatprep.subr.mxu0 0.0
  %431 = vmatpush2.msra.mxu0 0.0
  %432 = vmatprep.subr.mxu0 0.0
  %433 = vmatpush2.msra.mxu0 0.0
  %434 = vmatprep.subr.mxu0 0.0
  %435 = vmatpush2.msra.mxu0 0.0
  %436 = vmatprep.subr.mxu0 0.0
  %437 = vmatpush2.msra.mxu0 0.0
  %438 = vmatprep.subr.mxu0 0.0
  %439 = vmatpush2.msra.mxu0 0.0
  %440 = vmatprep.subr.mxu0 0.0
  %441 = vmatpush2.msra.mxu0 0.0
  %442 = vmatprep.subr.mxu0 0.0
  %443 = vmatpush2.msra.mxu0 0.0
  %444 = vmatprep.subr.mxu0 0.0
  %445 = vmatpush2.msra.mxu0 0.0
  %446 = vmatprep.subr.mxu0 0.0
  %447 = vmatpush2.msra.mxu0 0.0
  %448 = vmatprep.subr.mxu0 0.0
  %449 = vmatpush2.msra.mxu0 0.0
  %450 = vmatprep.subr.mxu0 0.0
  %451 = vmatpush2.msra.mxu0 0.0
  %452 = vmatprep.mubr.f32.mxu0 0.0
  %453 = vmatmul.mubr.f32.gmra.mxu0 %v386
  %v454 = vpop.f32.mrf.mxu0
  %v455 = vadd.f32 0.0, %v454
  %v456 = vpop.f32.mrf.mxu0
  %457 = vdwg.mxu0
  %v459 = vrot.slane %v455, 4
  %460 = vrot.lane.b32.xlu0 %v459, 32
  %v461 = vpop.permute.xlu0 %460
  %v463 = vadd.f32 %v131, %v461
  %v464 = vmax.f32 %v463, 0.0
  %vm465 = vcmask 257026
  %466 = vst.msk [vmem:[%s9] sm:$0xc] %vm465, %v381
  %vm467 = vcmask 521476
  %468 = vst.msk [vmem:[%s9 + $0x8] sm:$0x30] %vm467, %v464
  %v470 = vrot.slane %v381, 2
  %v471 = vsel %vm144, %v470, 0
  %473 = vmatprep.subr.mxu0 0.0
  %474 = vmatpush1.msra.mxu0 0.0
  %475 = vmatprep.subr.mxu0 0.0
  %476 = vmatpush1.msra.mxu0 0.0
  %477 = vmatprep.subr.mxu0 0.0
  %478 = vmatpush1.msra.mxu0 0.0
  %479 = vmatprep.subr.mxu0 0.0
  %480 = vmatpush1.msra.mxu0 0.0
  %481 = vmatprep.subr.mxu0 0.0
  %482 = vmatpush1.msra.mxu0 0.0
  %483 = vmatprep.subr.mxu0 0.0
  %484 = vmatpush1.msra.mxu0 0.0
  %485 = vmatprep.subr.mxu0 0.0
  %486 = vmatpush1.msra.mxu0 0.0
  %487 = vmatprep.subr.mxu0 0.0
  %488 = vmatpush1.msra.mxu0 0.0
  %489 = vmatprep.subr.mxu0 0.0
  %490 = vmatpush1.msra.mxu0 0.0
  %491 = vmatprep.subr.mxu0 0.0
  %492 = vmatpush1.msra.mxu0 0.0
  %493 = vmatprep.subr.mxu0 0.0
  %494 = vmatpush1.msra.mxu0 0.0
  %495 = vmatprep.subr.mxu0 0.0
  %496 = vmatpush1.msra.mxu0 0.0
  %497 = vmatprep.subr.mxu0 0.0
  %498 = vmatpush1.msra.mxu0 %v137
  %499 = vmatprep.subr.mxu0 0.0
  %500 = vmatpush1.msra.mxu0 %v136
  %501 = vmatprep.subr.mxu0 0.0
  %502 = vmatpush1.msra.mxu0 %v135
  %503 = vmatprep.subr.mxu0 0.0
  %504 = vmatpush1.msra.mxu0 %v134
  %505 = vmatprep.subr.mxu0 0.0
  %506 = vmatpush2.msra.mxu0 0.0
  %507 = vmatprep.subr.mxu0 0.0
  %508 = vmatpush2.msra.mxu0 0.0
  %509 = vmatprep.subr.mxu0 0.0
  %510 = vmatpush2.msra.mxu0 0.0
  %511 = vmatprep.subr.mxu0 0.0
  %512 = vmatpush2.msra.mxu0 0.0
  %513 = vmatprep.subr.mxu0 0.0
  %514 = vmatpush2.msra.mxu0 0.0
  %515 = vmatprep.subr.mxu0 0.0
  %516 = vmatpush2.msra.mxu0 0.0
  %517 = vmatprep.subr.mxu0 0.0
  %518 = vmatpush2.msra.mxu0 0.0
  %519 = vmatprep.subr.mxu0 0.0
  %520 = vmatpush2.msra.mxu0 0.0
  %521 = vmatprep.subr.mxu0 0.0
  %522 = vmatpush2.msra.mxu0 0.0
  %523 = vmatprep.subr.mxu0 0.0
  %524 = vmatpush2.msra.mxu0 0.0
  %525 = vmatprep.subr.mxu0 0.0
  %526 = vmatpush2.msra.mxu0 0.0
  %527 = vmatprep.subr.mxu0 0.0
  %528 = vmatpush2.msra.mxu0 0.0
  %529 = vmatprep.subr.mxu0 0.0
  %530 = vmatpush2.msra.mxu0 0.0
  %531 = vmatprep.subr.mxu0 0.0
  %532 = vmatpush2.msra.mxu0 0.0
  %533 = vmatprep.subr.mxu0 0.0
  %534 = vmatpush2.msra.mxu0 0.0
  %535 = vmatprep.subr.mxu0 0.0
  %536 = vmatpush2.msra.mxu0 0.0
  %537 = vmatprep.mubr.f32.mxu0 0.0
  %538 = vmatmul.mubr.f32.gmra.mxu0 %v471
  %v539 = vpop.f32.mrf.mxu0
  %v540 = vadd.f32 0.0, %v539
  %v541 = vpop.f32.mrf.mxu0
  %542 = vdwg.mxu0
  %v544 = vrot.slane %v540, 4
  %v546 = vadd.f32 %v126, %v544
  %v547 = vmax.f32 %v546, 0.0
  %v549 = vrot.slane %v464, 4
  %550 = vrot.lane.b32.xlu0 %v549, 96
  %v551 = vpop.permute.xlu0 %550
  %v552 = vsel %vm144, %v551, 0
  %554 = vmatprep.subr.mxu0 0.0
  %555 = vmatpush1.msra.mxu0 0.0
  %556 = vmatprep.subr.mxu0 0.0
  %557 = vmatpush1.msra.mxu0 0.0
  %558 = vmatprep.subr.mxu0 0.0
  %559 = vmatpush1.msra.mxu0 0.0
  %560 = vmatprep.subr.mxu0 0.0
  %561 = vmatpush1.msra.mxu0 0.0
  %562 = vmatprep.subr.mxu0 0.0
  %563 = vmatpush1.msra.mxu0 0.0
  %564 = vmatprep.subr.mxu0 0.0
  %565 = vmatpush1.msra.mxu0 0.0
  %566 = vmatprep.subr.mxu0 0.0
  %567 = vmatpush1.msra.mxu0 0.0
  %568 = vmatprep.subr.mxu0 0.0
  %569 = vmatpush1.msra.mxu0 0.0
  %570 = vmatprep.subr.mxu0 0.0
  %571 = vmatpush1.msra.mxu0 0.0
  %572 = vmatprep.subr.mxu0 0.0
  %573 = vmatpush1.msra.mxu0 0.0
  %574 = vmatprep.subr.mxu0 0.0
  %575 = vmatpush1.msra.mxu0 0.0
  %576 = vmatprep.subr.mxu0 0.0
  %577 = vmatpush1.msra.mxu0 0.0
  %578 = vmatprep.subr.mxu0 0.0
  %579 = vmatpush1.msra.mxu0 %v141
  %580 = vmatprep.subr.mxu0 0.0
  %581 = vmatpush1.msra.mxu0 %v140
  %582 = vmatprep.subr.mxu0 0.0
  %583 = vmatpush1.msra.mxu0 %v139
  %584 = vmatprep.subr.mxu0 0.0
  %585 = vmatpush1.msra.mxu0 %v138
  %586 = vmatprep.subr.mxu0 0.0
  %587 = vmatpush2.msra.mxu0 0.0
  %588 = vmatprep.subr.mxu0 0.0
  %589 = vmatpush2.msra.mxu0 0.0
  %590 = vmatprep.subr.mxu0 0.0
  %591 = vmatpush2.msra.mxu0 0.0
  %592 = vmatprep.subr.mxu0 0.0
  %593 = vmatpush2.msra.mxu0 0.0
  %594 = vmatprep.subr.mxu0 0.0
  %595 = vmatpush2.msra.mxu0 0.0
  %596 = vmatprep.subr.mxu0 0.0
  %597 = vmatpush2.msra.mxu0 0.0
  %598 = vmatprep.subr.mxu0 0.0
  %599 = vmatpush2.msra.mxu0 0.0
  %600 = vmatprep.subr.mxu0 0.0
  %601 = vmatpush2.msra.mxu0 0.0
  %602 = vmatprep.subr.mxu0 0.0
  %603 = vmatpush2.msra.mxu0 0.0
  %604 = vmatprep.subr.mxu0 0.0
  %605 = vmatpush2.msra.mxu0 0.0
  %606 = vmatprep.subr.mxu0 0.0
  %607 = vmatpush2.msra.mxu0 0.0
  %608 = vmatprep.subr.mxu0 0.0
  %609 = vmatpush2.msra.mxu0 0.0
  %610 = vmatprep.subr.mxu0 0.0
  %611 = vmatpush2.msra.mxu0 0.0
  %612 = vmatprep.subr.mxu0 0.0
  %613 = vmatpush2.msra.mxu0 0.0
  %614 = vmatprep.subr.mxu0 0.0
  %615 = vmatpush2.msra.mxu0 0.0
  %616 = vmatprep.subr.mxu0 0.0
  %617 = vmatpush2.msra.mxu0 0.0
  %618 = vmatprep.mubr.f32.mxu0 0.0
  %619 = vmatmul.mubr.f32.gmra.mxu0 %v552
  %v620 = vpop.f32.mrf.mxu0
  %v621 = vadd.f32 0.0, %v620
  %v622 = vpop.f32.mrf.mxu0
  %623 = vdwg.mxu0
  %v625 = vrot.slane %v621, 6
  %626 = vrot.lane.b32.xlu0 %v625, 32
  %v627 = vpop.permute.xlu0 %626
  %v629 = vadd.f32 %v131, %v627
  %v630 = vmax.f32 %v629, 0.0
  %vm631 = vcmask 259076
  %632 = vst.msk [vmem:[%s9] sm:$0x30] %vm631, %v547
  %vm633 = vcmask 519426
  %634 = vst.msk [vmem:[%s9 + $0x8] sm:$0xc] %vm633, %v630
  %v636 = vrot.slane %v547, 4
  %v637 = vsel %vm144, %v636, 0
  %639 = vmatprep.subr.mxu0 0.0
  %640 = vmatpush1.msra.mxu0 0.0
  %641 = vmatprep.subr.mxu0 0.0
  %642 = vmatpush1.msra.mxu0 0.0
  %643 = vmatprep.subr.mxu0 0.0
  %644 = vmatpush1.msra.mxu0 0.0
  %645 = vmatprep.subr.mxu0 0.0
  %646 = vmatpush1.msra.mxu0 0.0
  %647 = vmatprep.subr.mxu0 0.0
  %648 = vmatpush1.msra.mxu0 0.0
  %649 = vmatprep.subr.mxu0 0.0
  %650 = vmatpush1.msra.mxu0 0.0
  %651 = vmatprep.subr.mxu0 0.0
  %652 = vmatpush1.msra.mxu0 0.0
  %653 = vmatprep.subr.mxu0 0.0
  %654 = vmatpush1.msra.mxu0 0.0
  %655 = vmatprep.subr.mxu0 0.0
  %656 = vmatpush1.msra.mxu0 0.0
  %657 = vmatprep.subr.mxu0 0.0
  %658 = vmatpush1.msra.mxu0 0.0
  %659 = vmatprep.subr.mxu0 0.0
  %660 = vmatpush1.msra.mxu0 0.0
  %661 = vmatprep.subr.mxu0 0.0
  %662 = vmatpush1.msra.mxu0 0.0
  %663 = vmatprep.subr.mxu0 0.0
  %664 = vmatpush1.msra.mxu0 %v137
  %665 = vmatprep.subr.mxu0 0.0
  %666 = vmatpush1.msra.mxu0 %v136
  %667 = vmatprep.subr.mxu0 0.0
  %668 = vmatpush1.msra.mxu0 %v135
  %669 = vmatprep.subr.mxu0 0.0
  %670 = vmatpush1.msra.mxu0 %v134
  %671 = vmatprep.subr.mxu0 0.0
  %672 = vmatpush2.msra.mxu0 0.0
  %673 = vmatprep.subr.mxu0 0.0
  %674 = vmatpush2.msra.mxu0 0.0
  %675 = vmatprep.subr.mxu0 0.0
  %676 = vmatpush2.msra.mxu0 0.0
  %677 = vmatprep.subr.mxu0 0.0
  %678 = vmatpush2.msra.mxu0 0.0
  %679 = vmatprep.subr.mxu0 0.0
  %680 = vmatpush2.msra.mxu0 0.0
  %681 = vmatprep.subr.mxu0 0.0
  %682 = vmatpush2.msra.mxu0 0.0
  %683 = vmatprep.subr.mxu0 0.0
  %684 = vmatpush2.msra.mxu0 0.0
  %685 = vmatprep.subr.mxu0 0.0
  %686 = vmatpush2.msra.mxu0 0.0
  %687 = vmatprep.subr.mxu0 0.0
  %688 = vmatpush2.msra.mxu0 0.0
  %689 = vmatprep.subr.mxu0 0.0
  %690 = vmatpush2.msra.mxu0 0.0
  %691 = vmatprep.subr.mxu0 0.0
  %692 = vmatpush2.msra.mxu0 0.0
  %693 = vmatprep.subr.mxu0 0.0
  %694 = vmatpush2.msra.mxu0 0.0
  %695 = vmatprep.subr.mxu0 0.0
  %696 = vmatpush2.msra.mxu0 0.0
  %697 = vmatprep.subr.mxu0 0.0
  %698 = vmatpush2.msra.mxu0 0.0
  %699 = vmatprep.subr.mxu0 0.0
  %700 = vmatpush2.msra.mxu0 0.0
  %701 = vmatprep.subr.mxu0 0.0
  %702 = vmatpush2.msra.mxu0 0.0
  %703 = vmatprep.mubr.f32.mxu0 0.0
  %704 = vmatmul.mubr.f32.gmra.mxu0 %v637
  %v705 = vpop.f32.mrf.mxu0
  %v706 = vadd.f32 0.0, %v705
  %v707 = vpop.f32.mrf.mxu0
  %708 = vdwg.mxu0
  %v710 = vrot.slane %v706, 2
  %v712 = vadd.f32 %v126, %v710
  %v713 = vmax.f32 %v712, 0.0
  %v715 = vrot.slane %v630, 2
  %716 = vrot.lane.b32.xlu0 %v715, 96
  %v717 = vpop.permute.xlu0 %716
  %v718 = vsel %vm144, %v717, 0
  %720 = vmatprep.subr.mxu0 0.0
  %721 = vmatpush1.msra.mxu0 0.0
  %722 = vmatprep.subr.mxu0 0.0
  %723 = vmatpush1.msra.mxu0 0.0
  %724 = vmatprep.subr.mxu0 0.0
  %725 = vmatpush1.msra.mxu0 0.0
  %726 = vmatprep.subr.mxu0 0.0
  %727 = vmatpush1.msra.mxu0 0.0
  %728 = vmatprep.subr.mxu0 0.0
  %729 = vmatpush1.msra.mxu0 0.0
  %730 = vmatprep.subr.mxu0 0.0
  %731 = vmatpush1.msra.mxu0 0.0
  %732 = vmatprep.subr.mxu0 0.0
  %733 = vmatpush1.msra.mxu0 0.0
  %734 = vmatprep.subr.mxu0 0.0
  %735 = vmatpush1.msra.mxu0 0.0
  %736 = vmatprep.subr.mxu0 0.0
  %737 = vmatpush1.msra.mxu0 0.0
  %738 = vmatprep.subr.mxu0 0.0
  %739 = vmatpush1.msra.mxu0 0.0
  %740 = vmatprep.subr.mxu0 0.0
  %741 = vmatpush1.msra.mxu0 0.0
  %742 = vmatprep.subr.mxu0 0.0
  %743 = vmatpush1.msra.mxu0 0.0
  %744 = vmatprep.subr.mxu0 0.0
  %745 = vmatpush1.msra.mxu0 %v141
  %746 = vmatprep.subr.mxu0 0.0
  %747 = vmatpush1.msra.mxu0 %v140
  %748 = vmatprep.subr.mxu0 0.0
  %749 = vmatpush1.msra.mxu0 %v139
  %750 = vmatprep.subr.mxu0 0.0
  %751 = vmatpush1.msra.mxu0 %v138
  %752 = vmatprep.subr.mxu0 0.0
  %753 = vmatpush2.msra.mxu0 0.0
  %754 = vmatprep.subr.mxu0 0.0
  %755 = vmatpush2.msra.mxu0 0.0
  %756 = vmatprep.subr.mxu0 0.0
  %757 = vmatpush2.msra.mxu0 0.0
  %758 = vmatprep.subr.mxu0 0.0
  %759 = vmatpush2.msra.mxu0 0.0
  %760 = vmatprep.subr.mxu0 0.0
  %761 = vmatpush2.msra.mxu0 0.0
  %762 = vmatprep.subr.mxu0 0.0
  %763 = vmatpush2.msra.mxu0 0.0
  %764 = vmatprep.subr.mxu0 0.0
  %765 = vmatpush2.msra.mxu0 0.0
  %766 = vmatprep.subr.mxu0 0.0
  %767 = vmatpush2.msra.mxu0 0.0
  %768 = vmatprep.subr.mxu0 0.0
  %769 = vmatpush2.msra.mxu0 0.0
  %770 = vmatprep.subr.mxu0 0.0
  %771 = vmatpush2.msra.mxu0 0.0
  %772 = vmatprep.subr.mxu0 0.0
  %773 = vmatpush2.msra.mxu0 0.0
  %774 = vmatprep.subr.mxu0 0.0
  %775 = vmatpush2.msra.mxu0 0.0
  %776 = vmatprep.subr.mxu0 0.0
  %777 = vmatpush2.msra.mxu0 0.0
  %778 = vmatprep.subr.mxu0 0.0
  %779 = vmatpush2.msra.mxu0 0.0
  %780 = vmatprep.subr.mxu0 0.0
  %781 = vmatpush2.msra.mxu0 0.0
  %782 = vmatprep.subr.mxu0 0.0
  %783 = vmatpush2.msra.mxu0 0.0
  %784 = vmatprep.mubr.f32.mxu0 0.0
  %785 = vmatmul.mubr.f32.gmra.mxu0 %v718
  %v786 = vpop.f32.mrf.mxu0
  %v787 = vadd.f32 0.0, %v786
  %v788 = vpop.f32.mrf.mxu0
  %789 = vdwg.mxu0
  %791 = vrot.lane.b32.xlu0 %v787, 32
  %v792 = vpop.permute.xlu0 %791
  %v794 = vadd.f32 %v131, %v792
  %v795 = vmax.f32 %v794, 0.0
  %vm796 = vcmask 261126
  %797 = vst.msk [vmem:[%s9] sm:$0xc0] %vm796, %v713
  %vm798 = vcmask 517376
  %799 = vst.msk [vmem:[%s9 + $0x8] sm:$0x3] %vm798, %v795
  %v801 = vrot.slane %v713, 6
  %v802 = vsel %vm144, %v801, 0
  %804 = vmatprep.subr.mxu0 0.0
  %805 = vmatpush1.msra.mxu0 0.0
  %806 = vmatprep.subr.mxu0 0.0
  %807 = vmatpush1.msra.mxu0 0.0
  %808 = vmatprep.subr.mxu0 0.0
  %809 = vmatpush1.msra.mxu0 0.0
  %810 = vmatprep.subr.mxu0 0.0
  %811 = vmatpush1.msra.mxu0 0.0
  %812 = vmatprep.subr.mxu0 0.0
  %813 = vmatpush1.msra.mxu0 0.0
  %814 = vmatprep.subr.mxu0 0.0
  %815 = vmatpush1.msra.mxu0 0.0
  %816 = vmatprep.subr.mxu0 0.0
  %817 = vmatpush1.msra.mxu0 0.0
  %818 = vmatprep.subr.mxu0 0.0
  %819 = vmatpush1.msra.mxu0 0.0
  %820 = vmatprep.subr.mxu0 0.0
  %821 = vmatpush1.msra.mxu0 0.0
  %822 = vmatprep.subr.mxu0 0.0
  %823 = vmatpush1.msra.mxu0 0.0
  %824 = vmatprep.subr.mxu0 0.0
  %825 = vmatpush1.msra.mxu0 0.0
  %826 = vmatprep.subr.mxu0 0.0
  %827 = vmatpush1.msra.mxu0 0.0
  %828 = vmatprep.subr.mxu0 0.0
  %829 = vmatpush1.msra.mxu0 %v137
  %830 = vmatprep.subr.mxu0 0.0
  %831 = vmatpush1.msra.mxu0 %v136
  %832 = vmatprep.subr.mxu0 0.0
  %833 = vmatpush1.msra.mxu0 %v135
  %834 = vmatprep.subr.mxu0 0.0
  %835 = vmatpush1.msra.mxu0 %v134
  %836 = vmatprep.subr.mxu0 0.0
  %837 = vmatpush2.msra.mxu0 0.0
  %838 = vmatprep.subr.mxu0 0.0
  %839 = vmatpush2.msra.mxu0 0.0
  %840 = vmatprep.subr.mxu0 0.0
  %841 = vmatpush2.msra.mxu0 0.0
  %842 = vmatprep.subr.mxu0 0.0
  %843 = vmatpush2.msra.mxu0 0.0
  %844 = vmatprep.subr.mxu0 0.0
  %845 = vmatpush2.msra.mxu0 0.0
  %846 = vmatprep.subr.mxu0 0.0
  %847 = vmatpush2.msra.mxu0 0.0
  %848 = vmatprep.subr.mxu0 0.0
  %849 = vmatpush2.msra.mxu0 0.0
  %850 = vmatprep.subr.mxu0 0.0
  %851 = vmatpush2.msra.mxu0 0.0
  %852 = vmatprep.subr.mxu0 0.0
  %853 = vmatpush2.msra.mxu0 0.0
  %854 = vmatprep.subr.mxu0 0.0
  %855 = vmatpush2.msra.mxu0 0.0
  %856 = vmatprep.subr.mxu0 0.0
  %857 = vmatpush2.msra.mxu0 0.0
  %858 = vmatprep.subr.mxu0 0.0
  %859 = vmatpush2.msra.mxu0 0.0
  %860 = vmatprep.subr.mxu0 0.0
  %861 = vmatpush2.msra.mxu0 0.0
  %862 = vmatprep.subr.mxu0 0.0
  %863 = vmatpush2.msra.mxu0 0.0
  %864 = vmatprep.subr.mxu0 0.0
  %865 = vmatpush2.msra.mxu0 0.0
  %866 = vmatprep.subr.mxu0 0.0
  %867 = vmatpush2.msra.mxu0 0.0
  %868 = vmatprep.mubr.f32.mxu0 0.0
  %869 = vmatmul.mubr.f32.gmra.mxu0 %v802
  %v870 = vpop.f32.mrf.mxu0
  %v871 = vadd.f32 0.0, %v870
  %v872 = vpop.f32.mrf.mxu0
  %873 = vdwg.mxu0
  %v874 = vadd.f32 %v131, %v871
  %v875 = vmax.f32 %v874, 0.0
  %877 = vrot.lane.b32.xlu0 %v795, 96
  %v878 = vpop.permute.xlu0 %877
  %v879 = vsel %vm144, %v878, 0
  %881 = vmatprep.subr.mxu0 0.0
  %882 = vmatpush1.msra.mxu0 0.0
  %883 = vmatprep.subr.mxu0 0.0
  %884 = vmatpush1.msra.mxu0 0.0
  %885 = vmatprep.subr.mxu0 0.0
  %886 = vmatpush1.msra.mxu0 0.0
  %887 = vmatprep.subr.mxu0 0.0
  %888 = vmatpush1.msra.mxu0 0.0
  %889 = vmatprep.subr.mxu0 0.0
  %890 = vmatpush1.msra.mxu0 0.0
  %891 = vmatprep.subr.mxu0 0.0
  %892 = vmatpush1.msra.mxu0 0.0
  %893 = vmatprep.subr.mxu0 0.0
  %894 = vmatpush1.msra.mxu0 0.0
  %895 = vmatprep.subr.mxu0 0.0
  %896 = vmatpush1.msra.mxu0 0.0
  %897 = vmatprep.subr.mxu0 0.0
  %898 = vmatpush1.msra.mxu0 0.0
  %899 = vmatprep.subr.mxu0 0.0
  %900 = vmatpush1.msra.mxu0 0.0
  %901 = vmatprep.subr.mxu0 0.0
  %902 = vmatpush1.msra.mxu0 0.0
  %903 = vmatprep.subr.mxu0 0.0
  %904 = vmatpush1.msra.mxu0 0.0
  %905 = vmatprep.subr.mxu0 0.0
  %906 = vmatpush1.msra.mxu0 %v141
  %907 = vmatprep.subr.mxu0 0.0
  %908 = vmatpush1.msra.mxu0 %v140
  %909 = vmatprep.subr.mxu0 0.0
  %910 = vmatpush1.msra.mxu0 %v139
  %911 = vmatprep.subr.mxu0 0.0
  %912 = vmatpush1.msra.mxu0 %v138
  %913 = vmatprep.subr.mxu0 0.0
  %914 = vmatpush2.msra.mxu0 0.0
  %915 = vmatprep.subr.mxu0 0.0
  %916 = vmatpush2.msra.mxu0 0.0
  %917 = vmatprep.subr.mxu0 0.0
  %918 = vmatpush2.msra.mxu0 0.0
  %919 = vmatprep.subr.mxu0 0.0
  %920 = vmatpush2.msra.mxu0 0.0
  %921 = vmatprep.subr.mxu0 0.0
  %922 = vmatpush2.msra.mxu0 0.0
  %923 = vmatprep.subr.mxu0 0.0
  %924 = vmatpush2.msra.mxu0 0.0
  %925 = vmatprep.subr.mxu0 0.0
  %926 = vmatpush2.msra.mxu0 0.0
  %927 = vmatprep.subr.mxu0 0.0
  %928 = vmatpush2.msra.mxu0 0.0
  %929 = vmatprep.subr.mxu0 0.0
  %930 = vmatpush2.msra.mxu0 0.0
  %931 = vmatprep.subr.mxu0 0.0
  %932 = vmatpush2.msra.mxu0 0.0
  %933 = vmatprep.subr.mxu0 0.0
  %934 = vmatpush2.msra.mxu0 0.0
  %935 = vmatprep.subr.mxu0 0.0
  %936 = vmatpush2.msra.mxu0 0.0
  %937 = vmatprep.subr.mxu0 0.0
  %938 = vmatpush2.msra.mxu0 0.0
  %939 = vmatprep.subr.mxu0 0.0
  %940 = vmatpush2.msra.mxu0 0.0
  %941 = vmatprep.subr.mxu0 0.0
  %942 = vmatpush2.msra.mxu0 0.0
  %943 = vmatprep.subr.mxu0 0.0
  %944 = vmatpush2.msra.mxu0 0.0
  %945 = vmatprep.mubr.f32.mxu0 0.0
  %946 = vmatmul.mubr.f32.gmra.mxu0 %v879
  %v947 = vpop.f32.mrf.mxu0
  %v948 = vadd.f32 0.0, %v947
  %v949 = vpop.f32.mrf.mxu0
  %950 = vdwg.mxu0
  %v952 = vrot.slane %v948, 2
  %953 = vrot.lane.b32.xlu0 %v952, 32
  %v954 = vpop.permute.xlu0 %953
  %v956 = vadd.f32 %v126, %v954
  %v957 = vmax.f32 %v956, 0.0
  %958 = vst.msk [vmem:[%s9 + $0x8] sm:$0x3] %vm300, %v875
  %959 = vst.msk [vmem:[%s9] sm:$0xc0] %vm302, %v957
  %v961 = vsel %vm144, %v875, 0
  %963 = vmatprep.subr.mxu0 0.0
  %964 = vmatpush1.msra.mxu0 0.0
  %965 = vmatprep.subr.mxu0 0.0
  %966 = vmatpush1.msra.mxu0 0.0
  %967 = vmatprep.subr.mxu0 0.0
  %968 = vmatpush1.msra.mxu0 0.0
  %969 = vmatprep.subr.mxu0 0.0
  %970 = vmatpush1.msra.mxu0 0.0
  %971 = vmatprep.subr.mxu0 0.0
  %972 = vmatpush1.msra.mxu0 0.0
  %973 = vmatprep.subr.mxu0 0.0
  %974 = vmatpush1.msra.mxu0 0.0
  %975 = vmatprep.subr.mxu0 0.0
  %976 = vmatpush1.msra.mxu0 0.0
  %977 = vmatprep.subr.mxu0 0.0
  %978 = vmatpush1.msra.mxu0 0.0
  %979 = vmatprep.subr.mxu0 0.0
  %980 = vmatpush1.msra.mxu0 0.0
  %981 = vmatprep.subr.mxu0 0.0
  %982 = vmatpush1.msra.mxu0 0.0
  %983 = vmatprep.subr.mxu0 0.0
  %984 = vmatpush1.msra.mxu0 0.0
  %985 = vmatprep.subr.mxu0 0.0
  %986 = vmatpush1.msra.mxu0 0.0
  %987 = vmatprep.subr.mxu0 0.0
  %988 = vmatpush1.msra.mxu0 %v137
  %989 = vmatprep.subr.mxu0 0.0
  %990 = vmatpush1.msra.mxu0 %v136
  %991 = vmatprep.subr.mxu0 0.0
  %992 = vmatpush1.msra.mxu0 %v135
  %993 = vmatprep.subr.mxu0 0.0
  %994 = vmatpush1.msra.mxu0 %v134
  %995 = vmatprep.subr.mxu0 0.0
  %996 = vmatpush2.msra.mxu0 0.0
  %997 = vmatprep.subr.mxu0 0.0
  %998 = vmatpush2.msra.mxu0 0.0
  %999 = vmatprep.subr.mxu0 0.0
  %1000 = vmatpush2.msra.mxu0 0.0
  %1001 = vmatprep.subr.mxu0 0.0
  %1002 = vmatpush2.msra.mxu0 0.0
  %1003 = vmatprep.subr.mxu0 0.0
  %1004 = vmatpush2.msra.mxu0 0.0
  %1005 = vmatprep.subr.mxu0 0.0
  %1006 = vmatpush2.msra.mxu0 0.0
  %1007 = vmatprep.subr.mxu0 0.0
  %1008 = vmatpush2.msra.mxu0 0.0
  %1009 = vmatprep.subr.mxu0 0.0
  %1010 = vmatpush2.msra.mxu0 0.0
  %1011 = vmatprep.subr.mxu0 0.0
  %1012 = vmatpush2.msra.mxu0 0.0
  %1013 = vmatprep.subr.mxu0 0.0
  %1014 = vmatpush2.msra.mxu0 0.0
  %1015 = vmatprep.subr.mxu0 0.0
  %1016 = vmatpush2.msra.mxu0 0.0
  %1017 = vmatprep.subr.mxu0 0.0
  %1018 = vmatpush2.msra.mxu0 0.0
  %1019 = vmatprep.subr.mxu0 0.0
  %1020 = vmatpush2.msra.mxu0 0.0
  %1021 = vmatprep.subr.mxu0 0.0
  %1022 = vmatpush2.msra.mxu0 0.0
  %1023 = vmatprep.subr.mxu0 0.0
  %1024 = vmatpush2.msra.mxu0 0.0
  %1025 = vmatprep.subr.mxu0 0.0
  %1026 = vmatpush2.msra.mxu0 0.0
  %1027 = vmatprep.mubr.f32.mxu0 0.0
  %1028 = vmatmul.mubr.f32.gmra.mxu0 %v961
  %v1029 = vpop.f32.mrf.mxu0
  %v1030 = vadd.f32 0.0, %v1029
  %v1031 = vpop.f32.mrf.mxu0
  %1032 = vdwg.mxu0
  %v1034 = vrot.slane %v1030, 6
  %v1036 = vadd.f32 %v131, %v1034
  %v1037 = vmax.f32 %v1036, 0.0
  %v1039 = vrot.slane %v957, 6
  %1040 = vrot.lane.b32.xlu0 %v1039, 96
  %v1041 = vpop.permute.xlu0 %1040
  %v1042 = vsel %vm144, %v1041, 0
  %1044 = vmatprep.subr.mxu0 0.0
  %1045 = vmatpush1.msra.mxu0 0.0
  %1046 = vmatprep.subr.mxu0 0.0
  %1047 = vmatpush1.msra.mxu0 0.0
  %1048 = vmatprep.subr.mxu0 0.0
  %1049 = vmatpush1.msra.mxu0 0.0
  %1050 = vmatprep.subr.mxu0 0.0
  %1051 = vmatpush1.msra.mxu0 0.0
  %1052 = vmatprep.subr.mxu0 0.0
  %1053 = vmatpush1.msra.mxu0 0.0
  %1054 = vmatprep.subr.mxu0 0.0
  %1055 = vmatpush1.msra.mxu0 0.0
  %1056 = vmatprep.subr.mxu0 0.0
  %1057 = vmatpush1.msra.mxu0 0.0
  %1058 = vmatprep.subr.mxu0 0.0
  %1059 = vmatpush1.msra.mxu0 0.0
  %1060 = vmatprep.subr.mxu0 0.0
  %1061 = vmatpush1.msra.mxu0 0.0
  %1062 = vmatprep.subr.mxu0 0.0
  %1063 = vmatpush1.msra.mxu0 0.0
  %1064 = vmatprep.subr.mxu0 0.0
  %1065 = vmatpush1.msra.mxu0 0.0
  %1066 = vmatprep.subr.mxu0 0.0
  %1067 = vmatpush1.msra.mxu0 0.0
  %1068 = vmatprep.subr.mxu0 0.0
  %1069 = vmatpush1.msra.mxu0 %v141
  %1070 = vmatprep.subr.mxu0 0.0
  %1071 = vmatpush1.msra.mxu0 %v140
  %1072 = vmatprep.subr.mxu0 0.0
  %1073 = vmatpush1.msra.mxu0 %v139
  %1074 = vmatprep.subr.mxu0 0.0
  %1075 = vmatpush1.msra.mxu0 %v138
  %1076 = vmatprep.subr.mxu0 0.0
  %1077 = vmatpush2.msra.mxu0 0.0
  %1078 = vmatprep.subr.mxu0 0.0
  %1079 = vmatpush2.msra.mxu0 0.0
  %1080 = vmatprep.subr.mxu0 0.0
  %1081 = vmatpush2.msra.mxu0 0.0
  %1082 = vmatprep.subr.mxu0 0.0
  %1083 = vmatpush2.msra.mxu0 0.0
  %1084 = vmatprep.subr.mxu0 0.0
  %1085 = vmatpush2.msra.mxu0 0.0
  %1086 = vmatprep.subr.mxu0 0.0
  %1087 = vmatpush2.msra.mxu0 0.0
  %1088 = vmatprep.subr.mxu0 0.0
  %1089 = vmatpush2.msra.mxu0 0.0
  %1090 = vmatprep.subr.mxu0 0.0
  %1091 = vmatpush2.msra.mxu0 0.0
  %1092 = vmatprep.subr.mxu0 0.0
  %1093 = vmatpush2.msra.mxu0 0.0
  %1094 = vmatprep.subr.mxu0 0.0
  %1095 = vmatpush2.msra.mxu0 0.0
  %1096 = vmatprep.subr.mxu0 0.0
  %1097 = vmatpush2.msra.mxu0 0.0
  %1098 = vmatprep.subr.mxu0 0.0
  %1099 = vmatpush2.msra.mxu0 0.0
  %1100 = vmatprep.subr.mxu0 0.0
  %1101 = vmatpush2.msra.mxu0 0.0
  %1102 = vmatprep.subr.mxu0 0.0
  %1103 = vmatpush2.msra.mxu0 0.0
  %1104 = vmatprep.subr.mxu0 0.0
  %1105 = vmatpush2.msra.mxu0 0.0
  %1106 = vmatprep.subr.mxu0 0.0
  %1107 = vmatpush2.msra.mxu0 0.0
  %1108 = vmatprep.mubr.f32.mxu0 0.0
  %1109 = vmatmul.mubr.f32.gmra.mxu0 %v1042
  %v1110 = vpop.f32.mrf.mxu0
  %v1111 = vadd.f32 0.0, %v1110
  %v1112 = vpop.f32.mrf.mxu0
  %1113 = vdwg.mxu0
  %v1115 = vrot.slane %v1111, 4
  %1116 = vrot.lane.b32.xlu0 %v1115, 32
  %v1117 = vpop.permute.xlu0 %1116
  %v1119 = vadd.f32 %v126, %v1117
  %v1120 = vmax.f32 %v1119, 0.0
  %1121 = vst.msk [vmem:[%s9 + $0x8] sm:$0xc] %vm465, %v1037
  %1122 = vst.msk [vmem:[%s9] sm:$0x30] %vm467, %v1120
  %v1124 = vrot.slane %v1037, 2
  %v1125 = vsel %vm144, %v1124, 0
  %1127 = vmatprep.subr.mxu0 0.0
  %1128 = vmatpush1.msra.mxu0 0.0
  %1129 = vmatprep.subr.mxu0 0.0
  %1130 = vmatpush1.msra.mxu0 0.0
  %1131 = vmatprep.subr.mxu0 0.0
  %1132 = vmatpush1.msra.mxu0 0.0
  %1133 = vmatprep.subr.mxu0 0.0
  %1134 = vmatpush1.msra.mxu0 0.0
  %1135 = vmatprep.subr.mxu0 0.0
  %1136 = vmatpush1.msra.mxu0 0.0
  %1137 = vmatprep.subr.mxu0 0.0
  %1138 = vmatpush1.msra.mxu0 0.0
  %1139 = vmatprep.subr.mxu0 0.0
  %1140 = vmatpush1.msra.mxu0 0.0
  %1141 = vmatprep.subr.mxu0 0.0
  %1142 = vmatpush1.msra.mxu0 0.0
  %1143 = vmatprep.subr.mxu0 0.0
  %1144 = vmatpush1.msra.mxu0 0.0
  %1145 = vmatprep.subr.mxu0 0.0
  %1146 = vmatpush1.msra.mxu0 0.0
  %1147 = vmatprep.subr.mxu0 0.0
  %1148 = vmatpush1.msra.mxu0 0.0
  %1149 = vmatprep.subr.mxu0 0.0
  %1150 = vmatpush1.msra.mxu0 0.0
  %1151 = vmatprep.subr.mxu0 0.0
  %1152 = vmatpush1.msra.mxu0 %v137
  %1153 = vmatprep.subr.mxu0 0.0
  %1154 = vmatpush1.msra.mxu0 %v136
  %1155 = vmatprep.subr.mxu0 0.0
  %1156 = vmatpush1.msra.mxu0 %v135
  %1157 = vmatprep.subr.mxu0 0.0
  %1158 = vmatpush1.msra.mxu0 %v134
  %1159 = vmatprep.subr.mxu0 0.0
  %1160 = vmatpush2.msra.mxu0 0.0
  %1161 = vmatprep.subr.mxu0 0.0
  %1162 = vmatpush2.msra.mxu0 0.0
  %1163 = vmatprep.subr.mxu0 0.0
  %1164 = vmatpush2.msra.mxu0 0.0
  %1165 = vmatprep.subr.mxu0 0.0
  %1166 = vmatpush2.msra.mxu0 0.0
  %1167 = vmatprep.subr.mxu0 0.0
  %1168 = vmatpush2.msra.mxu0 0.0
  %1169 = vmatprep.subr.mxu0 0.0
  %1170 = vmatpush2.msra.mxu0 0.0
  %1171 = vmatprep.subr.mxu0 0.0
  %1172 = vmatpush2.msra.mxu0 0.0
  %1173 = vmatprep.subr.mxu0 0.0
  %1174 = vmatpush2.msra.mxu0 0.0
  %1175 = vmatprep.subr.mxu0 0.0
  %1176 = vmatpush2.msra.mxu0 0.0
  %1177 = vmatprep.subr.mxu0 0.0
  %1178 = vmatpush2.msra.mxu0 0.0
  %1179 = vmatprep.subr.mxu0 0.0
  %1180 = vmatpush2.msra.mxu0 0.0
  %1181 = vmatprep.subr.mxu0 0.0
  %1182 = vmatpush2.msra.mxu0 0.0
  %1183 = vmatprep.subr.mxu0 0.0
  %1184 = vmatpush2.msra.mxu0 0.0
  %1185 = vmatprep.subr.mxu0 0.0
  %1186 = vmatpush2.msra.mxu0 0.0
  %1187 = vmatprep.subr.mxu0 0.0
  %1188 = vmatpush2.msra.mxu0 0.0
  %1189 = vmatprep.subr.mxu0 0.0
  %1190 = vmatpush2.msra.mxu0 0.0
  %1191 = vmatprep.mubr.f32.mxu0 0.0
  %1192 = vmatmul.mubr.f32.gmra.mxu0 %v1125
  %v1193 = vpop.f32.mrf.mxu0
  %v1194 = vadd.f32 0.0, %v1193
  %v1195 = vpop.f32.mrf.mxu0
  %1196 = vdwg.mxu0
  %v1198 = vrot.slane %v1194, 4
  %v1200 = vadd.f32 %v131, %v1198
  %v1201 = vmax.f32 %v1200, 0.0
  %v1203 = vrot.slane %v1120, 4
  %1204 = vrot.lane.b32.xlu0 %v1203, 96
  %v1205 = vpop.permute.xlu0 %1204
  %v1206 = vsel %vm144, %v1205, 0
  %1208 = vmatprep.subr.mxu0 0.0
  %1209 = vmatpush1.msra.mxu0 0.0
  %1210 = vmatprep.subr.mxu0 0.0
  %1211 = vmatpush1.msra.mxu0 0.0
  %1212 = vmatprep.subr.mxu0 0.0
  %1213 = vmatpush1.msra.mxu0 0.0
  %1214 = vmatprep.subr.mxu0 0.0
  %1215 = vmatpush1.msra.mxu0 0.0
  %1216 = vmatprep.subr.mxu0 0.0
  %1217 = vmatpush1.msra.mxu0 0.0
  %1218 = vmatprep.subr.mxu0 0.0
  %1219 = vmatpush1.msra.mxu0 0.0
  %1220 = vmatprep.subr.mxu0 0.0
  %1221 = vmatpush1.msra.mxu0 0.0
  %1222 = vmatprep.subr.mxu0 0.0
  %1223 = vmatpush1.msra.mxu0 0.0
  %1224 = vmatprep.subr.mxu0 0.0
  %1225 = vmatpush1.msra.mxu0 0.0
  %1226 = vmatprep.subr.mxu0 0.0
  %1227 = vmatpush1.msra.mxu0 0.0
  %1228 = vmatprep.subr.mxu0 0.0
  %1229 = vmatpush1.msra.mxu0 0.0
  %1230 = vmatprep.subr.mxu0 0.0
  %1231 = vmatpush1.msra.mxu0 0.0
  %1232 = vmatprep.subr.mxu0 0.0
  %1233 = vmatpush1.msra.mxu0 %v141
  %1234 = vmatprep.subr.mxu0 0.0
  %1235 = vmatpush1.msra.mxu0 %v140
  %1236 = vmatprep.subr.mxu0 0.0
  %1237 = vmatpush1.msra.mxu0 %v139
  %1238 = vmatprep.subr.mxu0 0.0
  %1239 = vmatpush1.msra.mxu0 %v138
  %1240 = vmatprep.subr.mxu0 0.0
  %1241 = vmatpush2.msra.mxu0 0.0
  %1242 = vmatprep.subr.mxu0 0.0
  %1243 = vmatpush2.msra.mxu0 0.0
  %1244 = vmatprep.subr.mxu0 0.0
  %1245 = vmatpush2.msra.mxu0 0.0
  %1246 = vmatprep.subr.mxu0 0.0
  %1247 = vmatpush2.msra.mxu0 0.0
  %1248 = vmatprep.subr.mxu0 0.0
  %1249 = vmatpush2.msra.mxu0 0.0
  %1250 = vmatprep.subr.mxu0 0.0
  %1251 = vmatpush2.msra.mxu0 0.0
  %1252 = vmatprep.subr.mxu0 0.0
  %1253 = vmatpush2.msra.mxu0 0.0
  %1254 = vmatprep.subr.mxu0 0.0
  %1255 = vmatpush2.msra.mxu0 0.0
  %1256 = vmatprep.subr.mxu0 0.0
  %1257 = vmatpush2.msra.mxu0 0.0
  %1258 = vmatprep.subr.mxu0 0.0
  %1259 = vmatpush2.msra.mxu0 0.0
  %1260 = vmatprep.subr.mxu0 0.0
  %1261 = vmatpush2.msra.mxu0 0.0
  %1262 = vmatprep.subr.mxu0 0.0
  %1263 = vmatpush2.msra.mxu0 0.0
  %1264 = vmatprep.subr.mxu0 0.0
  %1265 = vmatpush2.msra.mxu0 0.0
  %1266 = vmatprep.subr.mxu0 0.0
  %1267 = vmatpush2.msra.mxu0 0.0
  %1268 = vmatprep.subr.mxu0 0.0
  %1269 = vmatpush2.msra.mxu0 0.0
  %1270 = vmatprep.subr.mxu0 0.0
  %1271 = vmatpush2.msra.mxu0 0.0
  %1272 = vmatprep.mubr.f32.mxu0 0.0
  %1273 = vmatmul.mubr.f32.gmra.mxu0 %v1206
  %v1274 = vpop.f32.mrf.mxu0
  %v1275 = vadd.f32 0.0, %v1274
  %v1276 = vpop.f32.mrf.mxu0
  %1277 = vdwg.mxu0
  %v1279 = vrot.slane %v1275, 6
  %1280 = vrot.lane.b32.xlu0 %v1279, 32
  %v1281 = vpop.permute.xlu0 %1280
  %v1283 = vadd.f32 %v126, %v1281
  %v1284 = vmax.f32 %v1283, 0.0
  %1285 = vst.msk [vmem:[%s9 + $0x8] sm:$0x30] %vm631, %v1201
  %1286 = vst.msk [vmem:[%s9] sm:$0xc] %vm633, %v1284
  %v1288 = vrot.slane %v1201, 4
  %v1289 = vsel %vm144, %v1288, 0
  %1291 = vmatprep.subr.mxu0 0.0
  %1292 = vmatpush1.msra.mxu0 0.0
  %1293 = vmatprep.subr.mxu0 0.0
  %1294 = vmatpush1.msra.mxu0 0.0
  %1295 = vmatprep.subr.mxu0 0.0
  %1296 = vmatpush1.msra.mxu0 0.0
  %1297 = vmatprep.subr.mxu0 0.0
  %1298 = vmatpush1.msra.mxu0 0.0
  %1299 = vmatprep.subr.mxu0 0.0
  %1300 = vmatpush1.msra.mxu0 0.0
  %1301 = vmatprep.subr.mxu0 0.0
  %1302 = vmatpush1.msra.mxu0 0.0
  %1303 = vmatprep.subr.mxu0 0.0
  %1304 = vmatpush1.msra.mxu0 0.0
  %1305 = vmatprep.subr.mxu0 0.0
  %1306 = vmatpush1.msra.mxu0 0.0
  %1307 = vmatprep.subr.mxu0 0.0
  %1308 = vmatpush1.msra.mxu0 0.0
  %1309 = vmatprep.subr.mxu0 0.0
  %1310 = vmatpush1.msra.mxu0 0.0
  %1311 = vmatprep.subr.mxu0 0.0
  %1312 = vmatpush1.msra.mxu0 0.0
  %1313 = vmatprep.subr.mxu0 0.0
  %1314 = vmatpush1.msra.mxu0 0.0
  %1315 = vmatprep.subr.mxu0 0.0
  %1316 = vmatpush1.msra.mxu0 %v137
  %1317 = vmatprep.subr.mxu0 0.0
  %1318 = vmatpush1.msra.mxu0 %v136
  %1319 = vmatprep.subr.mxu0 0.0
  %1320 = vmatpush1.msra.mxu0 %v135
  %1321 = vmatprep.subr.mxu0 0.0
  %1322 = vmatpush1.msra.mxu0 %v134
  %1323 = vmatprep.subr.mxu0 0.0
  %1324 = vmatpush2.msra.mxu0 0.0
  %1325 = vmatprep.subr.mxu0 0.0
  %1326 = vmatpush2.msra.mxu0 0.0
  %1327 = vmatprep.subr.mxu0 0.0
  %1328 = vmatpush2.msra.mxu0 0.0
  %1329 = vmatprep.subr.mxu0 0.0
  %1330 = vmatpush2.msra.mxu0 0.0
  %1331 = vmatprep.subr.mxu0 0.0
  %1332 = vmatpush2.msra.mxu0 0.0
  %1333 = vmatprep.subr.mxu0 0.0
  %1334 = vmatpush2.msra.mxu0 0.0
  %1335 = vmatprep.subr.mxu0 0.0
  %1336 = vmatpush2.msra.mxu0 0.0
  %1337 = vmatprep.subr.mxu0 0.0
  %1338 = vmatpush2.msra.mxu0 0.0
  %1339 = vmatprep.subr.mxu0 0.0
  %1340 = vmatpush2.msra.mxu0 0.0
  %1341 = vmatprep.subr.mxu0 0.0
  %1342 = vmatpush2.msra.mxu0 0.0
  %1343 = vmatprep.subr.mxu0 0.0
  %1344 = vmatpush2.msra.mxu0 0.0
  %1345 = vmatprep.subr.mxu0 0.0
  %1346 = vmatpush2.msra.mxu0 0.0
  %1347 = vmatprep.subr.mxu0 0.0
  %1348 = vmatpush2.msra.mxu0 0.0
  %1349 = vmatprep.subr.mxu0 0.0
  %1350 = vmatpush2.msra.mxu0 0.0
  %1351 = vmatprep.subr.mxu0 0.0
  %1352 = vmatpush2.msra.mxu0 0.0
  %1353 = vmatprep.subr.mxu0 0.0
  %1354 = vmatpush2.msra.mxu0 0.0
  %1355 = vmatprep.mubr.f32.mxu0 0.0
  %1356 = vmatmul.mubr.f32.gmra.mxu0 %v1289
  %v1357 = vpop.f32.mrf.mxu0
  %v1358 = vadd.f32 0.0, %v1357
  %v1359 = vpop.f32.mrf.mxu0
  %1360 = vdwg.mxu0
  %v1362 = vrot.slane %v1358, 2
  %v1364 = vadd.f32 %v131, %v1362
  %v1365 = vmax.f32 %v1364, 0.0
  %v1367 = vrot.slane %v1284, 2
  %1368 = vrot.lane.b32.xlu0 %v1367, 96
  %v1369 = vpop.permute.xlu0 %1368
  %v1370 = vsel %vm144, %v1369, 0
  %1372 = vmatprep.subr.mxu0 0.0
  %1373 = vmatpush1.msra.mxu0 0.0
  %1374 = vmatprep.subr.mxu0 0.0
  %1375 = vmatpush1.msra.mxu0 0.0
  %1376 = vmatprep.subr.mxu0 0.0
  %1377 = vmatpush1.msra.mxu0 0.0
  %1378 = vmatprep.subr.mxu0 0.0
  %1379 = vmatpush1.msra.mxu0 0.0
  %1380 = vmatprep.subr.mxu0 0.0
  %1381 = vmatpush1.msra.mxu0 0.0
  %1382 = vmatprep.subr.mxu0 0.0
  %1383 = vmatpush1.msra.mxu0 0.0
  %1384 = vmatprep.subr.mxu0 0.0
  %1385 = vmatpush1.msra.mxu0 0.0
  %1386 = vmatprep.subr.mxu0 0.0
  %1387 = vmatpush1.msra.mxu0 0.0
  %1388 = vmatprep.subr.mxu0 0.0
  %1389 = vmatpush1.msra.mxu0 0.0
  %1390 = vmatprep.subr.mxu0 0.0
  %1391 = vmatpush1.msra.mxu0 0.0
  %1392 = vmatprep.subr.mxu0 0.0
  %1393 = vmatpush1.msra.mxu0 0.0
  %1394 = vmatprep.subr.mxu0 0.0
  %1395 = vmatpush1.msra.mxu0 0.0
  %1396 = vmatprep.subr.mxu0 0.0
  %1397 = vmatpush1.msra.mxu0 %v141
  %1398 = vmatprep.subr.mxu0 0.0
  %1399 = vmatpush1.msra.mxu0 %v140
  %1400 = vmatprep.subr.mxu0 0.0
  %1401 = vmatpush1.msra.mxu0 %v139
  %1402 = vmatprep.subr.mxu0 0.0
  %1403 = vmatpush1.msra.mxu0 %v138
  %1404 = vmatprep.subr.mxu0 0.0
  %1405 = vmatpush2.msra.mxu0 0.0
  %1406 = vmatprep.subr.mxu0 0.0
  %1407 = vmatpush2.msra.mxu0 0.0
  %1408 = vmatprep.subr.mxu0 0.0
  %1409 = vmatpush2.msra.mxu0 0.0
  %1410 = vmatprep.subr.mxu0 0.0
  %1411 = vmatpush2.msra.mxu0 0.0
  %1412 = vmatprep.subr.mxu0 0.0
  %1413 = vmatpush2.msra.mxu0 0.0
  %1414 = vmatprep.subr.mxu0 0.0
  %1415 = vmatpush2.msra.mxu0 0.0
  %1416 = vmatprep.subr.mxu0 0.0
  %1417 = vmatpush2.msra.mxu0 0.0
  %1418 = vmatprep.subr.mxu0 0.0
  %1419 = vmatpush2.msra.mxu0 0.0
  %1420 = vmatprep.subr.mxu0 0.0
  %1421 = vmatpush2.msra.mxu0 0.0
  %1422 = vmatprep.subr.mxu0 0.0
  %1423 = vmatpush2.msra.mxu0 0.0
  %1424 = vmatprep.subr.mxu0 0.0
  %1425 = vmatpush2.msra.mxu0 0.0
  %1426 = vmatprep.subr.mxu0 0.0
  %1427 = vmatpush2.msra.mxu0 0.0
  %1428 = vmatprep.subr.mxu0 0.0
  %1429 = vmatpush2.msra.mxu0 0.0
  %1430 = vmatprep.subr.mxu0 0.0
  %1431 = vmatpush2.msra.mxu0 0.0
  %1432 = vmatprep.subr.mxu0 0.0
  %1433 = vmatpush2.msra.mxu0 0.0
  %1434 = vmatprep.subr.mxu0 0.0
  %1435 = vmatpush2.msra.mxu0 0.0
  %1436 = vmatprep.mubr.f32.mxu0 0.0
  %1437 = vmatmul.mubr.f32.gmra.mxu0 %v1370
  %v1438 = vpop.f32.mrf.mxu0
  %v1439 = vadd.f32 0.0, %v1438
  %v1440 = vpop.f32.mrf.mxu0
  %1441 = vdwg.mxu0
  %1443 = vrot.lane.b32.xlu0 %v1439, 32
  %v1444 = vpop.permute.xlu0 %1443
  %v1446 = vadd.f32 %v126, %v1444
  %v1447 = vmax.f32 %v1446, 0.0
  %1448 = vst.msk [vmem:[%s9 + $0x8] sm:$0xc0] %vm796, %v1365
  %1449 = vst.msk [vmem:[%s9] sm:$0x3] %vm798, %v1447
  %1450 = vst.msk [vmem:[%s10 - $0x6] sm:$0xc0] %vm796, %v1365
  %1452 = vrot.lane.b32.xlu0 %v1447, 96
  %v1453 = vpop.permute.xlu0 %1452
  %1455 = vst.msk [vmem:[%s11] sm:$0x3] %vm300, %v1453
  // Predicated region
  $region38: #{rnn_cell_forward.3} parent=0 // pred_check
    _
  $region39: #{rnn_cell_forward.3} parent=0 // pred_check_branch
    %1457 = sbr.rel (0) target = $region41
  $region40: #{rnn_cell_forward.3} parent=0 // pred_region
    _
  $region41: #{rnn_cell_forward.3} parent=0 // pred_fallthru
    _
  // Predicated region
  $region42: #{rnn_cell_forward.3} parent=0 // pred_check
    _
  $region43: #{rnn_cell_forward.3} parent=0 // pred_check_branch
    %1459 = sbr.rel (0) target = $region45
  $region44: #{rnn_cell_forward.3} parent=0 // pred_region
    _
  $region45: #{rnn_cell_forward.3} parent=0 // pred_fallthru
    _
  // Predicated region
  $region46: #{rnn_cell_forward.3} parent=0 // pred_check
    _
  $region47: #{rnn_cell_forward.3} parent=0 // pred_check_branch
    %1461 = sbr.rel (0) target = $region49
  $region48: #{rnn_cell_forward.3} parent=0 // pred_region
    _
  $region49: #{rnn_cell_forward.3} parent=0 // pred_fallthru
    _
  // Predicated region
  $region50: #{rnn_cell_forward.3} parent=0 // pred_check
    _
  $region51: #{rnn_cell_forward.3} parent=0 // pred_check_branch
    %1463 = sbr.rel (0) target = $region53
  $region52: #{rnn_cell_forward.3} parent=0 // pred_region
    _
  $region53: #{rnn_cell_forward.3} parent=0 // pred_fallthru
    _
  // Predicated region
  $region54: #{rnn_cell_forward.3} parent=0 // pred_check
    _
  $region55: #{rnn_cell_forward.3} parent=0 // pred_check_branch
    %1465 = sbr.rel (0) target = $region57
  $region56: #{rnn_cell_forward.3} parent=0 // pred_region
    _
  $region57: #{rnn_cell_forward.3} parent=0 // pred_fallthru
    _
  // Predicated region
  $region58: #{rnn_cell_forward.3} parent=0 // pred_check
    _
  $region59: #{rnn_cell_forward.3} parent=0 // pred_check_branch
    %1467 = sbr.rel (0) target = $region61
  $region60: #{rnn_cell_forward.3} parent=0 // pred_region
    _
  $region61: #{rnn_cell_forward.3} parent=0 // pred_fallthru
    _

</llo_original>
